<compile_context>
chip_gen: v5e
topology: v5e:2x2
jax: 0.10.0
libtpu: 0.0.40
codegen_flags: <defaults>
</compile_context>

<pallas_src>
import functools

import jax
import jax.numpy as jnp
from jax.experimental import pallas as pl
from jax.experimental.pallas import tpu as pltpu


def _pick_tile(full, cap, quantum):
    """Largest tile t <= cap with full % t == 0 and t % quantum == 0.

    Falls back to the full dimension (always a legal Pallas block) when no
    such tile exists -- this is what lets us avoid jnp.pad on the big arrays.
    """
    cap = min(cap, full)
    if cap >= full:
        return full
    t = cap - cap % quantum
    while t >= quantum:
        if full % t == 0:
            return t
        t -= quantum
    return full


def _vmem_limit_bytes(sblk, B, tdin, td):
    """Rough VMEM budget for the chosen tiles (double-buffered pipeline)."""
    f32 = 4
    dbl = 2  # pipeline double-buffering
    stream = (sblk * B * tdin          # x tile
              + 2 * tdin * td          # w_low, w_scale tiles
              + sblk * tdin * td       # u tile (dominant stream)
              + 2 * td + sblk * td     # b_mu, b_sigma, eps tiles
              + sblk * B * td)         # out tile
    resident = sblk * B * td           # f32 accumulator scratch
    live = sblk * tdin * td            # materialized sampled-weight slab
    est = f32 * (dbl * stream + resident + live)
    # Floor 32 MiB (lifts v5e's 16 MiB default); cap 64 MiB (v7x physical).
    return int(min(max(2 * est, 32 * 2**20), 64 * 2**20))


def _mf_kernel(x_ref, wlo_ref, wsc_ref, u_ref, bmu_ref, bsg_ref, eps_ref,
               o_ref, acc_ref, *, mm_dtype):
    """One (dout-tile, sample-tile, din-tile) grid step.

    Grid order is (dout, sample, din): din (reduction) innermost so the f32
    VMEM accumulator is valid; the sample axis just outside the reduction so,
    when the reduction fits a single din tile (the common case), the
    grid-invariant weight-affine tiles keep the same block index across
    consecutive steps and are not re-fetched from HBM per sample block.
    """
    k = pl.program_id(2)

    @pl.when(k == 0)
    def _init():
        acc_ref[...] = jnp.zeros_like(acc_ref)

    # Uniform rsample with the affine hoisted to the wrapper:
    #   w = (mu - sigma) + (2*sigma) * U,   U ~ Uniform[0, 1)
    w = wlo_ref[...] + wsc_ref[...] * u_ref[...]          # (sblk, tdin, td)
    xv = x_ref[...]                                       # (sblk, B,    tdin)
    if mm_dtype != jnp.float32:
        # Optional bf16 MXU-operand path (v5e/v6e/v7x bf16-native MXUs);
        # accumulation stays f32.  Opt-in: breaks exact f32 reference match.
        w = w.astype(mm_dtype)
        xv = xv.astype(mm_dtype)
    acc_ref[...] += jnp.einsum("sbi,sio->sbo", xv, w,
                               preferred_element_type=jnp.float32)

    @pl.when(k == pl.num_programs(2) - 1)
    def _finalize():
        # Normal rsample for the bias: b = mu + sigma * eps.
        b = bmu_ref[...] + bsg_ref[...] * eps_ref[...]    # (sblk, 1, td)
        o_ref[...] = (acc_ref[...] + b).astype(o_ref.dtype)


def unf_meanfield_forward(x, w_mu_q, w_log_var_q, b_mu_q, b_log_var_q,
                          eps_draws, u_draws,
                          sample_block=8, dout_block=512, din_block=512,
                          matmul_dtype=jnp.float32):
    """Forward pass of Unf_MeanFieldLayer.

    x:                    (S, B, Din) float32
    w_mu_q, w_log_var_q:  (Din, Dout)
    b_mu_q, b_log_var_q:  (Dout,)
    eps_draws:            (S, Dout)      standard-normal base draws (bias rsample)
    u_draws:              (S, Din, Dout) uniform[0,1) base draws (weight rsample)
    Returns:              (S, B, Dout) float32
    """
    S, B, Din = x.shape
    Dout = w_mu_q.shape[1]
    assert w_mu_q.shape == (Din, Dout)
    assert u_draws.shape == (S, Din, Dout)
    assert eps_draws.shape == (S, Dout)

    f32 = jnp.float32
    mm_dtype = jnp.dtype(matmul_dtype)

    # ---- Grid-invariant sampling affines, hoisted out of the kernel ----
    s_w = jnp.exp(0.5 * w_log_var_q.astype(f32))           # sigma_w (Din, Dout)
    w_low = w_mu_q.astype(f32) - s_w                       # low  = mu - sigma
    w_scale = 2.0 * s_w                                    # high - low
    b_mu = b_mu_q.astype(f32).reshape(1, Dout)
    b_sig = jnp.exp(0.5 * b_log_var_q.astype(f32)).reshape(1, Dout)
    eps3 = eps_draws.astype(f32).reshape(S, 1, Dout)
    x = x.astype(f32)
    u = u_draws.astype(f32)

    # ---- Tile selection: exact divisors only (no padding of big arrays) ----
    sblk = _pick_tile(S, sample_block, 1)
    td = _pick_tile(Dout, dout_block, 128)      # lane-dense when Dout allows
    tdin = _pick_tile(Din, din_block, 128)      # reduction chunk
    grid = (Dout // td, S // sblk, Din // tdin)  # (dout, sample, din-reduction)

    kernel = functools.partial(_mf_kernel, mm_dtype=mm_dtype)

    out = pl.pallas_call(
        kernel,
        out_shape=jax.ShapeDtypeStruct((S, B, Dout), f32),
        grid_spec=pltpu.PrefetchScalarGridSpec(
            num_scalar_prefetch=0,
            grid=grid,
            in_specs=[
                pl.BlockSpec((sblk, B, tdin),  lambda j, i, k: (i, 0, k)),  # x
                pl.BlockSpec((tdin, td),       lambda j, i, k: (k, j)),     # w_low
                pl.BlockSpec((tdin, td),       lambda j, i, k: (k, j)),     # w_scale
                pl.BlockSpec((sblk, tdin, td), lambda j, i, k: (i, k, j)),  # u
                pl.BlockSpec((1, td),          lambda j, i, k: (0, j)),     # b_mu
                pl.BlockSpec((1, td),          lambda j, i, k: (0, j)),     # b_sigma
                pl.BlockSpec((sblk, 1, td),    lambda j, i, k: (i, 0, j)),  # eps
            ],
            out_specs=pl.BlockSpec((sblk, B, td), lambda j, i, k: (i, 0, j)),
            scratch_shapes=[pltpu.VMEM((sblk, B, td), jnp.float32)],
        ),
        compiler_params=pltpu.CompilerParams(
            dimension_semantics=("parallel", "parallel", "arbitrary"),
            vmem_limit_bytes=_vmem_limit_bytes(sblk, B, tdin, td),
        ),
    )(x, w_low, w_scale, u, b_mu, b_sig, eps3)
    return out


if __name__ == "__main__":
    prior_var = 1.0

    def reference(x, w_mu, w_log_var, b_mu, b_log_var, eps, u):
        s_w = jnp.exp(0.5 * w_log_var)
        weights = (w_mu - s_w) + 2.0 * s_w * u                   # (S, Din, Dout)
        biases = (b_mu + jnp.exp(0.5 * b_log_var) * eps)[:, None, :]
        return jnp.einsum("sbi,sio->sbo", x, weights) + biases

    def make_inputs(key, S, B, Din, Dout):
        kx, kwm, ku, ke = jax.random.split(key, 4)
        w_mu = 0.1 * jax.random.normal(kwm, (Din, Dout), jnp.float32)
        w_log_var = jnp.full((Din, Dout), jnp.log(prior_var), jnp.float32)
        b_mu = jnp.zeros((Dout,), jnp.float32)
        b_log_var = jnp.full((Dout,), jnp.log(prior_var), jnp.float32)
        x = jax.random.normal(kx, (S, B, Din), jnp.float32)
        u = jax.random.uniform(ku, (S, Din, Dout), jnp.float32)
        eps = jax.random.normal(ke, (S, Dout), jnp.float32)
        return x, w_mu, w_log_var, b_mu, b_log_var, eps, u

    key = jax.random.PRNGKey(0)
    k1, k2 = jax.random.split(key)

    # --- Case 1: 128-aligned dims, single-block grid (default tiles) --------
    S, B, Din, Dout = 6, 8, 256, 384
    x, w_mu, w_lv, b_mu, b_lv, eps, u = make_inputs(k1, S, B, Din, Dout)
    ref = reference(x, w_mu, w_lv, b_mu, b_lv, eps, u)

    out = jax.block_until_ready(
        unf_meanfield_forward(x, w_mu, w_lv, b_mu, b_lv, eps, u))
    assert out.shape == (S, B, Dout)
    assert jnp.allclose(out, ref, atol=1e-3, rtol=1e-3), \
        float(jnp.max(jnp.abs(out - ref)))

    # --- Case 1b: tiled grid (dout x sample x din = 3 x 2 x 2), exercises the
    #              reduction accumulator and weight-tile-resident ordering ----
    out_t = jax.block_until_ready(
        unf_meanfield_forward(x, w_mu, w_lv, b_mu, b_lv, eps, u,
                              sample_block=3, dout_block=128, din_block=128))
    assert jnp.allclose(out_t, ref, atol=1e-3, rtol=1e-3), \
        float(jnp.max(jnp.abs(out_t - ref)))

    # --- Case 1c: optional bf16 MXU-operand path (looser tolerance) ---------
    out_bf = jax.block_until_ready(
        unf_meanfield_forward(x, w_mu, w_lv, b_mu, b_lv, eps, u,
                              matmul_dtype=jnp.bfloat16))
    assert bool(jnp.all(jnp.isfinite(out_bf)))
    assert jnp.allclose(out_bf, ref, atol=0.5, rtol=0.05), \
        float(jnp.max(jnp.abs(out_bf - ref)))

    # --- Case 2: non-128-multiple Dout, odd sample count (full-dim fallback
    #             blocks, masked output stores, no padding anywhere) ----------
    S2, B2, Din2, Dout2 = 5, 4, 32, 160
    x2, w_mu2, w_lv2, b_mu2, b_lv2, eps2, u2 = make_inputs(k2, S2, B2, Din2, Dout2)
    ref2 = reference(x2, w_mu2, w_lv2, b_mu2, b_lv2, eps2, u2)
    out2 = jax.block_until_ready(
        unf_meanfield_forward(x2, w_mu2, w_lv2, b_mu2, b_lv2, eps2, u2))
    assert out2.shape == (S2, B2, Dout2)
    assert jnp.allclose(out2, ref2, atol=1e-3, rtol=1e-3), \
        float(jnp.max(jnp.abs(out2 - ref2)))

    print("KERNEL_OK")
</pallas_src>

<mosaic_0001>
module attributes {stable_mosaic.version = 11 : i64} {
  func.func @_mf_kernel(%arg0: i32, %arg1: i32, %arg2: i32, %arg3: memref<6x8x256xf32, #tpu.memory_space<vmem>>, %arg4: memref<256x384xf32, #tpu.memory_space<vmem>>, %arg5: memref<256x384xf32, #tpu.memory_space<vmem>>, %arg6: memref<6x256x384xf32, #tpu.memory_space<vmem>>, %arg7: memref<1x384xf32, #tpu.memory_space<vmem>>, %arg8: memref<1x384xf32, #tpu.memory_space<vmem>>, %arg9: memref<6x1x384xf32, #tpu.memory_space<vmem>>, %arg10: memref<6x8x384xf32, #tpu.memory_space<vmem>>, %arg11: memref<6x8x384xf32, #tpu.memory_space<vmem>>) attributes {dimension_semantics = [#tpu.dimension_semantics<parallel>, #tpu.dimension_semantics<parallel>, #tpu.dimension_semantics<arbitrary>], iteration_bounds = array<i64: 1, 1, 1>, scalar_prefetch = 0 : i64, scratch_operands = 1 : i64, tpu.core_type = #tpu.core_type<tc>, window_params = [{transform_indices = @transform_0, window_bounds = array<i64: 6, 8, 256>}, {transform_indices = @transform_1, window_bounds = array<i64: 256, 384>}, {transform_indices = @transform_2, window_bounds = array<i64: 256, 384>}, {transform_indices = @transform_3, window_bounds = array<i64: 6, 256, 384>}, {transform_indices = @transform_4, window_bounds = array<i64: 1, 384>}, {transform_indices = @transform_5, window_bounds = array<i64: 1, 384>}, {transform_indices = @transform_6, window_bounds = array<i64: 6, 1, 384>}, {transform_indices = @transform_7, window_bounds = array<i64: 6, 8, 384>}]} {
    %c0_i32 = arith.constant 0 : i32
    %0 = arith.cmpi eq, %arg2, %c0_i32 : i32
    %1 = arith.extui %0 : i1 to i32
    %c0_i32_0 = arith.constant 0 : i32
    %2 = arith.cmpi ne, %1, %c0_i32_0 : i32
    scf.if %2 {
      %cst_18 = arith.constant 0.000000e+00 : f32
      %20 = vector.broadcast %cst_18 : f32 to vector<6x8x384xf32>
      %c0_19 = arith.constant 0 : index
      %c0_20 = arith.constant 0 : index
      %c0_21 = arith.constant 0 : index
      %21 = vector.load %arg11[%c0_19, %c0_20, %c0_21] : memref<6x8x384xf32, #tpu.memory_space<vmem>>, vector<6x8x384xf32>
      tpu.vector_store %arg11[%c0_19, %c0_20, %c0_21], %20 {strides = array<i32>} : memref<6x8x384xf32, #tpu.memory_space<vmem>>, vector<6x8x384xf32>,
    } else {
    }
    %c0 = arith.constant 0 : index
    %c0_1 = arith.constant 0 : index
    %3 = vector.load %arg4[%c0, %c0_1] : memref<256x384xf32, #tpu.memory_space<vmem>>, vector<256x384xf32>
    %c0_2 = arith.constant 0 : index
    %c0_3 = arith.constant 0 : index
    %4 = vector.load %arg5[%c0_2, %c0_3] : memref<256x384xf32, #tpu.memory_space<vmem>>, vector<256x384xf32>
    %c0_4 = arith.constant 0 : index
    %c0_5 = arith.constant 0 : index
    %c0_6 = arith.constant 0 : index
    %5 = vector.load %arg6[%c0_4, %c0_5, %c0_6] : memref<6x256x384xf32, #tpu.memory_space<vmem>>, vector<6x256x384xf32>
    %6 = vector.shape_cast %4 : vector<256x384xf32> to vector<1x256x384xf32>
    %7 = vector.broadcast %6 : vector<1x256x384xf32> to vector<6x256x384xf32>
    %8 = arith.mulf %7, %5 : vector<6x256x384xf32>
    %9 = vector.shape_cast %3 : vector<256x384xf32> to vector<1x256x384xf32>
    %10 = vector.broadcast %9 : vector<1x256x384xf32> to vector<6x256x384xf32>
    %11 = arith.addf %10, %8 : vector<6x256x384xf32>
    %c0_7 = arith.constant 0 : index
    %c0_8 = arith.constant 0 : index
    %c0_9 = arith.constant 0 : index
    %12 = vector.load %arg3[%c0_7, %c0_8, %c0_9] : memref<6x8x256xf32, #tpu.memory_space<vmem>>, vector<6x8x256xf32>
    %c0_10 = arith.constant 0 : index
    %c0_11 = arith.constant 0 : index
    %c0_12 = arith.constant 0 : index
    %13 = vector.load %arg11[%c0_10, %c0_11, %c0_12] : memref<6x8x384xf32, #tpu.memory_space<vmem>>, vector<6x8x384xf32>
    "tpu.trace_start"() <{level = 10 : i32, message = "sbi,sio->sbo"}> : () -> ()
    %cst = arith.constant dense<0.000000e+00> : vector<6x8x384xf32>
    %14 = tpu.matmul %12, %11, %cst {dimension_numbers = #tpu.dot_dimension_numbers<[2], [1], [1], [2], [0, 0, 0, 1, 1, 2], [0], [0]>} : vector<6x8x256xf32>, vector<6x256x384xf32>, vector<6x8x384xf32> -> vector<6x8x384xf32>
    "tpu.trace_stop"() : () -> ()
    %15 = arith.addf %13, %14 : vector<6x8x384xf32>
    %c0_13 = arith.constant 0 : index
    %c0_14 = arith.constant 0 : index
    %c0_15 = arith.constant 0 : index
    %16 = vector.load %arg11[%c0_13, %c0_14, %c0_15] : memref<6x8x384xf32, #tpu.memory_space<vmem>>, vector<6x8x384xf32>
    tpu.vector_store %arg11[%c0_13, %c0_14, %c0_15], %15 {strides = array<i32>} : memref<6x8x384xf32, #tpu.memory_space<vmem>>, vector<6x8x384xf32>,
    %c0_i32_16 = arith.constant 0 : i32
    %17 = arith.cmpi eq, %arg2, %c0_i32_16 : i32
    %18 = arith.extui %17 : i1 to i32
    %c0_i32_17 = arith.constant 0 : i32
    %19 = arith.cmpi ne, %18, %c0_i32_17 : i32
    scf.if %19 {
      %c0_18 = arith.constant 0 : index
      %c0_19 = arith.constant 0 : index
      %20 = vector.load %arg7[%c0_18, %c0_19] : memref<1x384xf32, #tpu.memory_space<vmem>>, vector<1x384xf32>
      %c0_20 = arith.constant 0 : index
      %c0_21 = arith.constant 0 : index
      %21 = vector.load %arg8[%c0_20, %c0_21] : memref<1x384xf32, #tpu.memory_space<vmem>>, vector<1x384xf32>
      %c0_22 = arith.constant 0 : index
      %c0_23 = arith.constant 0 : index
      %c0_24 = arith.constant 0 : index
      %22 = vector.load %arg9[%c0_22, %c0_23, %c0_24] : memref<6x1x384xf32, #tpu.memory_space<vmem>>, vector<6x1x384xf32>
      %23 = vector.shape_cast %21 : vector<1x384xf32> to vector<1x1x384xf32>
      %24 = vector.broadcast %23 : vector<1x1x384xf32> to vector<6x1x384xf32>
      %25 = arith.mulf %24, %22 : vector<6x1x384xf32>
      %26 = vector.shape_cast %20 : vector<1x384xf32> to vector<1x1x384xf32>
      %27 = vector.broadcast %26 : vector<1x1x384xf32> to vector<6x1x384xf32>
      %28 = arith.addf %27, %25 : vector<6x1x384xf32>
      %c0_25 = arith.constant 0 : index
      %c0_26 = arith.constant 0 : index
      %c0_27 = arith.constant 0 : index
      %29 = vector.load %arg11[%c0_25, %c0_26, %c0_27] : memref<6x8x384xf32, #tpu.memory_space<vmem>>, vector<6x8x384xf32>
      %30 = vector.broadcast %28 : vector<6x1x384xf32> to vector<6x8x384xf32>
      %31 = arith.addf %29, %30 : vector<6x8x384xf32>
      %c0_28 = arith.constant 0 : index
      %c0_29 = arith.constant 0 : index
      %c0_30 = arith.constant 0 : index
      %32 = vector.load %arg10[%c0_28, %c0_29, %c0_30] : memref<6x8x384xf32, #tpu.memory_space<vmem>>, vector<6x8x384xf32>
      tpu.vector_store %arg10[%c0_28, %c0_29, %c0_30], %31 {strides = array<i32>} : memref<6x8x384xf32, #tpu.memory_space<vmem>>, vector<6x8x384xf32>,
    } else {
    }
    return
  }
  func.func @transform_0(%arg0: i32, %arg1: i32, %arg2: i32) -> (i32, i32, i32) {
    %c0_i32 = arith.constant 0 : i32
    %c0_i32_0 = arith.constant 0 : i32
    return %arg1, %c0_i32, %arg2 : i32, i32, i32
  }
  func.func @transform_1(%arg0: i32, %arg1: i32, %arg2: i32) -> (i32, i32) {
    %c0_i32 = arith.constant 0 : i32
    return %arg2, %arg0 : i32, i32
  }
  func.func @transform_2(%arg0: i32, %arg1: i32, %arg2: i32) -> (i32, i32) {
    %c0_i32 = arith.constant 0 : i32
    return %arg2, %arg0 : i32, i32
  }
  func.func @transform_3(%arg0: i32, %arg1: i32, %arg2: i32) -> (i32, i32, i32) {
    %c0_i32 = arith.constant 0 : i32
    return %arg1, %arg2, %arg0 : i32, i32, i32
  }
  func.func @transform_4(%arg0: i32, %arg1: i32, %arg2: i32) -> (i32, i32) {
    %c0_i32 = arith.constant 0 : i32
    %c0_i32_0 = arith.constant 0 : i32
    return %c0_i32, %arg0 : i32, i32
  }
  func.func @transform_5(%arg0: i32, %arg1: i32, %arg2: i32) -> (i32, i32) {
    %c0_i32 = arith.constant 0 : i32
    %c0_i32_0 = arith.constant 0 : i32
    return %c0_i32, %arg0 : i32, i32
  }
  func.func @transform_6(%arg0: i32, %arg1: i32, %arg2: i32) -> (i32, i32, i32) {
    %c0_i32 = arith.constant 0 : i32
    %c0_i32_0 = arith.constant 0 : i32
    return %arg1, %c0_i32, %arg0 : i32, i32, i32
  }
  func.func @transform_7(%arg0: i32, %arg1: i32, %arg2: i32) -> (i32, i32, i32) {
    %c0_i32 = arith.constant 0 : i32
    %c0_i32_0 = arith.constant 0 : i32
    return %arg1, %c0_i32, %arg0 : i32, i32, i32
  }
}

</mosaic_0001>

<llo_original>
// kernel: tpu_custom_call.1
$region0: #{tpu_custom_call.1}
  #allocation0 [shape = 'u32[]', space=smem, size = 0x4, offset = 0x4, fixed_abs, tag = 'smem constant byte address 0x4 - core index']
  #allocation1 [shape = 'u32[72,128]{1,0:T(1,128)}', space=vmem, size = 0x9000, scoped, tag = 'internal scratch']
  #allocation2 [shape = 'f32[6,8,384]{2,1,0:T(8,128)}', space=vmem, size = 0x12000, scoped, tag = 'scratch operand']
  %s0 = inlined_call_operand.hbm [shape: f32[6,8,256], index: 0, kind: input, shape index: {}]
  %s1 = inlined_call_operand.hbm [shape: f32[256,384], index: 1, kind: input, shape index: {}]
  %s2 = inlined_call_operand.hbm [shape: f32[256,384], index: 2, kind: input, shape index: {}]
  %s3 = inlined_call_operand.hbm [shape: f32[6,256,384], index: 3, kind: input, shape index: {}]
  %s4 = inlined_call_operand.hbm [shape: f32[1,384], index: 4, kind: input, shape index: {}]
  %s5 = inlined_call_operand.hbm [shape: f32[1,384], index: 5, kind: input, shape index: {}]
  %s6 = inlined_call_operand.hbm [shape: f32[6,1,384], index: 6, kind: input, shape index: {}]
  %s7 = inlined_call_operand.hbm [shape: f32[6,8,384], index: 7, kind: output, shape index: {}]
  %s8 = sld [smem:[#allocation0]]
  $region74: #{tpu_custom_call.1} parent=0
    _
  %s10 = ssub.s32 1, %s8
  %s11 = scalar_select 0, %s10, %s8
  $region1: #{tpu_custom_call.1} parent=0
    #allocation3 [shape = 'u8[49152]{0}', space=vmem, size = 0xc000, scoped, tag = 'input window, operand 0, single buffered']
    #allocation4 [shape = 's32[1]{0}', space=sflag, size = 0x4, scoped, tag = 'scoped memory for tpu_custom_call.1']
    #allocation5 [shape = 's32[1]{0}', space=sflag, size = 0x4, scoped, tag = 'scoped memory for tpu_custom_call.1']
    #allocation6 [shape = 'u8[393216]{0}', space=vmem, size = 0x60000, scoped, tag = 'input window, operand 1, single buffered']
    #allocation7 [shape = 's32[1]{0}', space=sflag, size = 0x4, scoped, tag = 'scoped memory for tpu_custom_call.1']
    #allocation8 [shape = 'u8[393216]{0}', space=vmem, size = 0x60000, scoped, tag = 'input window, operand 2, single buffered']
    #allocation9 [shape = 'u8[2359296]{0}', space=vmem, size = 0x240000, scoped, tag = 'input window, operand 3, single buffered']
    #allocation10 [shape = 's32[1]{0}', space=sflag, size = 0x4, scoped, tag = 'scoped memory for tpu_custom_call.1']
    #allocation11 [shape = 'u8[1536]{0}', space=vmem, size = 0x800, scoped, tag = 'input window, operand 4, single buffered']
    #allocation12 [shape = 'u8[1536]{0}', space=vmem, size = 0x800, scoped, tag = 'input window, operand 5, single buffered']
    #allocation13 [shape = 's32[1]{0}', space=sflag, size = 0x4, scoped, tag = 'scoped memory for tpu_custom_call.1']
    #allocation14 [shape = 'u8[9216]{0}', space=vmem, size = 0x2400, scoped, tag = 'input window, operand 6, single buffered']
    #allocation15 [shape = 'u8[73728]{0}', space=vmem, size = 0x12000, scoped, tag = 'output window, operand 0, single buffered']
    %12 = vsyncpa [#allocation4], 0
    %13 = vsyncpa [#allocation7], 0
    %14 = vsyncpa [#allocation10], 0
    %15 = vsyncpa [#allocation13], 0
    %16 = vsyncpa [#allocation5], 0
    // Predicated region
    $region2: #{tpu_custom_call.1} parent=1 // pred_check
      _
    $region3: #{tpu_custom_call.1} parent=1 // pred_check_branch
      %18 = sbr.rel (0) target = $region5
    $region4: #{tpu_custom_call.1} parent=1 // pred_region
      %20 = vsyncadd [#allocation4], 0
      %s21 = sshll.u32 %s0, 4
      %s22 = int_to_ptr.hbm [resolvable:$true] %s21
      %s23 = sshll.u32 [#allocation3], 4
      %s24 = int_to_ptr.vmem [resolvable:$true] %s23
      %29 = dma.hbm_to_vmem [thread:$0]  %s22, 1536, %s24, [#allocation4], 256, 256, 16
    $region5: #{tpu_custom_call.1} parent=1 // pred_fallthru
      _
    // Predicated region
    $region6: #{tpu_custom_call.1} parent=1 // pred_check
      _
    $region7: #{tpu_custom_call.1} parent=1 // pred_check_branch
      %31 = sbr.rel (0) target = $region9
    $region8: #{tpu_custom_call.1} parent=1 // pred_region
      %33 = vsyncadd [#allocation7], 0
      %s34 = sshll.u32 %s1, 4
      %s35 = int_to_ptr.hbm [resolvable:$true] %s34
      %s36 = sshll.u32 [#allocation6], 4
      %s37 = int_to_ptr.vmem [resolvable:$true] %s36
      %42 = dma.hbm_to_vmem [thread:$0]  %s35, 12288, %s37, [#allocation7], 384, 384, 24
    $region9: #{tpu_custom_call.1} parent=1 // pred_fallthru
      _
    // Predicated region
    $region10: #{tpu_custom_call.1} parent=1 // pred_check
      _
    $region11: #{tpu_custom_call.1} parent=1 // pred_check_branch
      %44 = sbr.rel (0) target = $region13
    $region12: #{tpu_custom_call.1} parent=1 // pred_region
      %46 = vsyncadd [#allocation7], 0
      %s47 = sshll.u32 %s2, 4
      %s48 = int_to_ptr.hbm [resolvable:$true] %s47
      %s49 = sshll.u32 [#allocation8], 4
      %s50 = int_to_ptr.vmem [resolvable:$true] %s49
      %55 = dma.hbm_to_vmem [thread:$0]  %s48, 12288, %s50, [#allocation7], 384, 384, 24
    $region13: #{tpu_custom_call.1} parent=1 // pred_fallthru
      _
    // Predicated region
    $region14: #{tpu_custom_call.1} parent=1 // pred_check
      _
    $region15: #{tpu_custom_call.1} parent=1 // pred_check_branch
      %57 = sbr.rel (0) target = $region17
    $region16: #{tpu_custom_call.1} parent=1 // pred_region
      %59 = vsyncadd [#allocation10], 0
      %s60 = sshll.u32 %s3, 4
      %s61 = int_to_ptr.hbm [resolvable:$true] %s60
      %s62 = sshll.u32 [#allocation9], 4
      %s63 = int_to_ptr.vmem [resolvable:$true] %s62
      %68 = dma.hbm_to_vmem [thread:$0]  %s61, 73728, %s63, [#allocation10], 384, 384, 24
    $region17: #{tpu_custom_call.1} parent=1 // pred_fallthru
      _
    // Predicated region
    $region18: #{tpu_custom_call.1} parent=1 // pred_check
      _
    $region19: #{tpu_custom_call.1} parent=1 // pred_check_branch
      %70 = sbr.rel (0) target = $region21
    $region20: #{tpu_custom_call.1} parent=1 // pred_region
      %72 = vsyncadd [#allocation10], 0
      %s74 = sshll.u32 %s4, 4
      %s75 = int_to_ptr.hbm [resolvable:$true] %s74
      %s76 = sshll.u32 [#allocation11], 4
      %s77 = int_to_ptr.vmem [resolvable:$true] %s76
      %79 = dma.hbm_to_vmem [thread:$0]  %s75, 48, %s77, [#allocation10]
    $region21: #{tpu_custom_call.1} parent=1 // pred_fallthru
      _
    // Predicated region
    $region22: #{tpu_custom_call.1} parent=1 // pred_check
      _
    $region23: #{tpu_custom_call.1} parent=1 // pred_check_branch
      %81 = sbr.rel (0) target = $region25
    $region24: #{tpu_custom_call.1} parent=1 // pred_region
      %83 = vsyncadd [#allocation13], 0
      %s85 = sshll.u32 %s5, 4
      %s86 = int_to_ptr.hbm [resolvable:$true] %s85
      %s87 = sshll.u32 [#allocation12], 4
      %s88 = int_to_ptr.vmem [resolvable:$true] %s87
      %90 = dma.hbm_to_vmem [thread:$0]  %s86, 48, %s88, [#allocation13]
    $region25: #{tpu_custom_call.1} parent=1 // pred_fallthru
      _
    // Predicated region
    $region26: #{tpu_custom_call.1} parent=1 // pred_check
      _
    $region27: #{tpu_custom_call.1} parent=1 // pred_check_branch
      %92 = sbr.rel (0) target = $region29
    $region28: #{tpu_custom_call.1} parent=1 // pred_region
      %94 = vsyncadd [#allocation13], 0
      %s95 = sshll.u32 %s6, 4
      %s96 = int_to_ptr.hbm [resolvable:$true] %s95
      %s97 = sshll.u32 [#allocation14], 4
      %s98 = int_to_ptr.vmem [resolvable:$true] %s97
      %103 = dma.hbm_to_vmem [thread:$0]  %s96, 288, %s98, [#allocation13], 48, 48, 3
    $region29: #{tpu_custom_call.1} parent=1 // pred_fallthru
      _
    // Predicated region
    $region30: #{tpu_custom_call.1} parent=1 // pred_check
      _
    $region31: #{tpu_custom_call.1} parent=1 // pred_check_branch
      %105 = sbr.rel (0) target = $region33
    $region32: #{tpu_custom_call.1} parent=1 // pred_region
      %107 = dma.done [#allocation4], 1536
    $region33: #{tpu_custom_call.1} parent=1 // pred_fallthru
      _
    // Predicated region
    $region34: #{tpu_custom_call.1} parent=1 // pred_check
      _
    $region35: #{tpu_custom_call.1} parent=1 // pred_check_branch
      %109 = sbr.rel (0) target = $region37
    $region36: #{tpu_custom_call.1} parent=1 // pred_region
      %111 = dma.done [#allocation7], 12288
    $region37: #{tpu_custom_call.1} parent=1 // pred_fallthru
      _
    // Predicated region
    $region38: #{tpu_custom_call.1} parent=1 // pred_check
      _
    $region39: #{tpu_custom_call.1} parent=1 // pred_check_branch
      %113 = sbr.rel (0) target = $region41
    $region40: #{tpu_custom_call.1} parent=1 // pred_region
      %115 = dma.done [#allocation7], 12288
    $region41: #{tpu_custom_call.1} parent=1 // pred_fallthru
      _
    // Predicated region
    $region42: #{tpu_custom_call.1} parent=1 // pred_check
      _
    $region43: #{tpu_custom_call.1} parent=1 // pred_check_branch
      %117 = sbr.rel (0) target = $region45
    $region44: #{tpu_custom_call.1} parent=1 // pred_region
      %119 = dma.done [#allocation10], 73728
    $region45: #{tpu_custom_call.1} parent=1 // pred_fallthru
      _
    // Predicated region
    $region46: #{tpu_custom_call.1} parent=1 // pred_check
      _
    $region47: #{tpu_custom_call.1} parent=1 // pred_check_branch
      %121 = sbr.rel (0) target = $region49
    $region48: #{tpu_custom_call.1} parent=1 // pred_region
      %123 = dma.done [#allocation10], 48
    $region49: #{tpu_custom_call.1} parent=1 // pred_fallthru
      _
    // Predicated region
    $region50: #{tpu_custom_call.1} parent=1 // pred_check
      _
    $region51: #{tpu_custom_call.1} parent=1 // pred_check_branch
      %125 = sbr.rel (0) target = $region53
    $region52: #{tpu_custom_call.1} parent=1 // pred_region
      %127 = dma.done [#allocation13], 48
    $region53: #{tpu_custom_call.1} parent=1 // pred_fallthru
      _
    // Predicated region
    $region54: #{tpu_custom_call.1} parent=1 // pred_check
      _
    $region55: #{tpu_custom_call.1} parent=1 // pred_check_branch
      %129 = sbr.rel (0) target = $region57
    $region56: #{tpu_custom_call.1} parent=1 // pred_region
      %131 = dma.done [#allocation13], 288
    $region57: #{tpu_custom_call.1} parent=1 // pred_fallthru
      _
    %p132 = scmp.eq.s32.totalorder 0, 0
    // Predicated region
    $region58: #{tpu_custom_call.1} parent=1 // pred_check
      %p133 = pneg %p132
    $region59: #{tpu_custom_call.1} parent=1 // pred_check_branch
      %135 = sbr.rel (%p133) target = $region61
    $region60: #{tpu_custom_call.1} parent=1 // pred_region
      %136 = vst [vmem:[#allocation2] sm:$0xff] 0.0
      %137 = vst [vmem:[#allocation2 + $0x8] sm:$0xff] 0.0
      %138 = vst [vmem:[#allocation2 + $0x10] sm:$0xff] 0.0
      %139 = vst [vmem:[#allocation2 + $0x18] sm:$0xff] 0.0
      %140 = vst [vmem:[#allocation2 + $0x20] sm:$0xff] 0.0
      %141 = vst [vmem:[#allocation2 + $0x28] sm:$0xff] 0.0
      %142 = vst [vmem:[#allocation2 + $0x30] sm:$0xff] 0.0
      %143 = vst [vmem:[#allocation2 + $0x38] sm:$0xff] 0.0
      %144 = vst [vmem:[#allocation2 + $0x40] sm:$0xff] 0.0
      %145 = vst [vmem:[#allocation2 + $0x48] sm:$0xff] 0.0
      %146 = vst [vmem:[#allocation2 + $0x50] sm:$0xff] 0.0
      %147 = vst [vmem:[#allocation2 + $0x58] sm:$0xff] 0.0
      %148 = vst [vmem:[#allocation2 + $0x60] sm:$0xff] 0.0
      %149 = vst [vmem:[#allocation2 + $0x68] sm:$0xff] 0.0
      %150 = vst [vmem:[#allocation2 + $0x70] sm:$0xff] 0.0
      %151 = vst [vmem:[#allocation2 + $0x78] sm:$0xff] 0.0
      %152 = vst [vmem:[#allocation2 + $0x80] sm:$0xff] 0.0
      %153 = vst [vmem:[#allocation2 + $0x88] sm:$0xff] 0.0
    $region61: #{tpu_custom_call.1} parent=1 // pred_fallthru
      _
    %v154 = vld [vmem:[#allocation6] sm:$0xff]
    %v155 = vld [vmem:[#allocation6 + $0x8] sm:$0xff]
    %v156 = vld [vmem:[#allocation6 + $0x10] sm:$0xff]
    %v157 = vld [vmem:[#allocation6 + $0x18] sm:$0xff]
    %v158 = vld [vmem:[#allocation6 + $0x20] sm:$0xff]
    %v159 = vld [vmem:[#allocation6 + $0x28] sm:$0xff]
    %v160 = vld [vmem:[#allocation6 + $0x30] sm:$0xff]
    %v161 = vld [vmem:[#allocation6 + $0x38] sm:$0xff]
    %v162 = vld [vmem:[#allocation6 + $0x40] sm:$0xff]
    %v163 = vld [vmem:[#allocation6 + $0x48] sm:$0xff]
    %v164 = vld [vmem:[#allocation6 + $0x50] sm:$0xff]
    %v165 = vld [vmem:[#allocation6 + $0x58] sm:$0xff]
    %v166 = vld [vmem:[#allocation6 + $0x60] sm:$0xff]
    %v167 = vld [vmem:[#allocation6 + $0x68] sm:$0xff]
    %v168 = vld [vmem:[#allocation6 + $0x70] sm:$0xff]
    %v169 = vld [vmem:[#allocation6 + $0x78] sm:$0xff]
    %v170 = vld [vmem:[#allocation6 + $0x80] sm:$0xff]
    %v171 = vld [vmem:[#allocation6 + $0x88] sm:$0xff]
    %v172 = vld [vmem:[#allocation6 + $0x90] sm:$0xff]
    %v173 = vld [vmem:[#allocation6 + $0x98] sm:$0xff]
    %v174 = vld [vmem:[#allocation6 + $0xa0] sm:$0xff]
    %v175 = vld [vmem:[#allocation6 + $0xa8] sm:$0xff]
    %v176 = vld [vmem:[#allocation6 + $0xb0] sm:$0xff]
    %v177 = vld [vmem:[#allocation6 + $0xb8] sm:$0xff]
    %v178 = vld [vmem:[#allocation6 + $0xc0] sm:$0xff]
    %v179 = vld [vmem:[#allocation6 + $0xc8] sm:$0xff]
    %v180 = vld [vmem:[#allocation6 + $0xd0] sm:$0xff]
    %v181 = vld [vmem:[#allocation6 + $0xd8] sm:$0xff]
    %v182 = vld [vmem:[#allocation6 + $0xe0] sm:$0xff]
    %v183 = vld [vmem:[#allocation6 + $0xe8] sm:$0xff]
    %v184 = vld [vmem:[#allocation6 + $0xf0] sm:$0xff]
    %v185 = vld [vmem:[#allocation6 + $0xf8] sm:$0xff]
    %v186 = vld [vmem:[#allocation6 + $0x100] sm:$0xff]
    %v187 = vld [vmem:[#allocation6 + $0x108] sm:$0xff]
    %v188 = vld [vmem:[#allocation6 + $0x110] sm:$0xff]
    %v189 = vld [vmem:[#allocation6 + $0x118] sm:$0xff]
    %v190 = vld [vmem:[#allocation6 + $0x120] sm:$0xff]
    %v191 = vld [vmem:[#allocation6 + $0x128] sm:$0xff]
    %v192 = vld [vmem:[#allocation6 + $0x130] sm:$0xff]
    %v193 = vld [vmem:[#allocation6 + $0x138] sm:$0xff]
    %v194 = vld [vmem:[#allocation6 + $0x140] sm:$0xff]
    %v195 = vld [vmem:[#allocation6 + $0x148] sm:$0xff]
    %v196 = vld [vmem:[#allocation6 + $0x150] sm:$0xff]
    %v197 = vld [vmem:[#allocation6 + $0x158] sm:$0xff]
    %v198 = vld [vmem:[#allocation6 + $0x160] sm:$0xff]
    %v199 = vld [vmem:[#allocation6 + $0x168] sm:$0xff]
    %v200 = vld [vmem:[#allocation6 + $0x170] sm:$0xff]
    %v201 = vld [vmem:[#allocation6 + $0x178] sm:$0xff]
    %v202 = vld [vmem:[#allocation6 + $0x180] sm:$0xff]
    %v203 = vld [vmem:[#allocation6 + $0x188] sm:$0xff]
    %v204 = vld [vmem:[#allocation6 + $0x190] sm:$0xff]
    %v205 = vld [vmem:[#allocation6 + $0x198] sm:$0xff]
    %v206 = vld [vmem:[#allocation6 + $0x1a0] sm:$0xff]
    %v207 = vld [vmem:[#allocation6 + $0x1a8] sm:$0xff]
    %v208 = vld [vmem:[#allocation6 + $0x1b0] sm:$0xff]
    %v209 = vld [vmem:[#allocation6 + $0x1b8] sm:$0xff]
    %v210 = vld [vmem:[#allocation6 + $0x1c0] sm:$0xff]
    %v211 = vld [vmem:[#allocation6 + $0x1c8] sm:$0xff]
    %v212 = vld [vmem:[#allocation6 + $0x1d0] sm:$0xff]
    %v213 = vld [vmem:[#allocation6 + $0x1d8] sm:$0xff]
    %v214 = vld [vmem:[#allocation6 + $0x1e0] sm:$0xff]
    %v215 = vld [vmem:[#allocation6 + $0x1e8] sm:$0xff]
    %v216 = vld [vmem:[#allocation6 + $0x1f0] sm:$0xff]
    %v217 = vld [vmem:[#allocation6 + $0x1f8] sm:$0xff]
    %v218 = vld [vmem:[#allocation6 + $0x200] sm:$0xff]
    %v219 = vld [vmem:[#allocation6 + $0x208] sm:$0xff]
    %v220 = vld [vmem:[#allocation6 + $0x210] sm:$0xff]
    %v221 = vld [vmem:[#allocation6 + $0x218] sm:$0xff]
    %v222 = vld [vmem:[#allocation6 + $0x220] sm:$0xff]
    %v223 = vld [vmem:[#allocation6 + $0x228] sm:$0xff]
    %v224 = vld [vmem:[#allocation6 + $0x230] sm:$0xff]
    %v225 = vld [vmem:[#allocation6 + $0x238] sm:$0xff]
    %v226 = vld [vmem:[#allocation6 + $0x240] sm:$0xff]
    %v227 = vld [vmem:[#allocation6 + $0x248] sm:$0xff]
    %v228 = vld [vmem:[#allocation6 + $0x250] sm:$0xff]
    %v229 = vld [vmem:[#allocation6 + $0x258] sm:$0xff]
    %v230 = vld [vmem:[#allocation6 + $0x260] sm:$0xff]
    %v231 = vld [vmem:[#allocation6 + $0x268] sm:$0xff]
    %v232 = vld [vmem:[#allocation6 + $0x270] sm:$0xff]
    %v233 = vld [vmem:[#allocation6 + $0x278] sm:$0xff]
    %v234 = vld [vmem:[#allocation6 + $0x280] sm:$0xff]
    %v235 = vld [vmem:[#allocation6 + $0x288] sm:$0xff]
    %v236 = vld [vmem:[#allocation6 + $0x290] sm:$0xff]
    %v237 = vld [vmem:[#allocation6 + $0x298] sm:$0xff]
    %v238 = vld [vmem:[#allocation6 + $0x2a0] sm:$0xff]
    %v239 = vld [vmem:[#allocation6 + $0x2a8] sm:$0xff]
    %v240 = vld [vmem:[#allocation6 + $0x2b0] sm:$0xff]
    %v241 = vld [vmem:[#allocation6 + $0x2b8] sm:$0xff]
    %v242 = vld [vmem:[#allocation6 + $0x2c0] sm:$0xff]
    %v243 = vld [vmem:[#allocation6 + $0x2c8] sm:$0xff]
    %v244 = vld [vmem:[#allocation6 + $0x2d0] sm:$0xff]
    %v245 = vld [vmem:[#allocation6 + $0x2d8] sm:$0xff]
    %v246 = vld [vmem:[#allocation6 + $0x2e0] sm:$0xff]
    %v247 = vld [vmem:[#allocation6 + $0x2e8] sm:$0xff]
    %v248 = vld [vmem:[#allocation6 + $0x2f0] sm:$0xff]
    %v249 = vld [vmem:[#allocation6 + $0x2f8] sm:$0xff]
    %v250 = vld [vmem:[#allocation8] sm:$0xff]
    %v251 = vld [vmem:[#allocation8 + $0x8] sm:$0xff]
    %v252 = vld [vmem:[#allocation8 + $0x10] sm:$0xff]
    %v253 = vld [vmem:[#allocation8 + $0x18] sm:$0xff]
    %v254 = vld [vmem:[#allocation8 + $0x20] sm:$0xff]
    %v255 = vld [vmem:[#allocation8 + $0x28] sm:$0xff]
    %v256 = vld [vmem:[#allocation8 + $0x30] sm:$0xff]
    %v257 = vld [vmem:[#allocation8 + $0x38] sm:$0xff]
    %v258 = vld [vmem:[#allocation8 + $0x40] sm:$0xff]
    %v259 = vld [vmem:[#allocation8 + $0x48] sm:$0xff]
    %v260 = vld [vmem:[#allocation8 + $0x50] sm:$0xff]
    %v261 = vld [vmem:[#allocation8 + $0x58] sm:$0xff]
    %v262 = vld [vmem:[#allocation8 + $0x60] sm:$0xff]
    %v263 = vld [vmem:[#allocation8 + $0x68] sm:$0xff]
    %v264 = vld [vmem:[#allocation8 + $0x70] sm:$0xff]
    %v265 = vld [vmem:[#allocation8 + $0x78] sm:$0xff]
    %v266 = vld [vmem:[#allocation8 + $0x80] sm:$0xff]
    %v267 = vld [vmem:[#allocation8 + $0x88] sm:$0xff]
    %v268 = vld [vmem:[#allocation8 + $0x90] sm:$0xff]
    %v269 = vld [vmem:[#allocation8 + $0x98] sm:$0xff]
    %v270 = vld [vmem:[#allocation8 + $0xa0] sm:$0xff]
    %v271 = vld [vmem:[#allocation8 + $0xa8] sm:$0xff]
    %v272 = vld [vmem:[#allocation8 + $0xb0] sm:$0xff]
    %v273 = vld [vmem:[#allocation8 + $0xb8] sm:$0xff]
    %v274 = vld [vmem:[#allocation8 + $0xc0] sm:$0xff]
    %v275 = vld [vmem:[#allocation8 + $0xc8] sm:$0xff]
    %v276 = vld [vmem:[#allocation8 + $0xd0] sm:$0xff]
    %v277 = vld [vmem:[#allocation8 + $0xd8] sm:$0xff]
    %v278 = vld [vmem:[#allocation8 + $0xe0] sm:$0xff]
    %v279 = vld [vmem:[#allocation8 + $0xe8] sm:$0xff]
    %v280 = vld [vmem:[#allocation8 + $0xf0] sm:$0xff]
    %v281 = vld [vmem:[#allocation8 + $0xf8] sm:$0xff]
    %v282 = vld [vmem:[#allocation8 + $0x100] sm:$0xff]
    %v283 = vld [vmem:[#allocation8 + $0x108] sm:$0xff]
    %v284 = vld [vmem:[#allocation8 + $0x110] sm:$0xff]
    %v285 = vld [vmem:[#allocation8 + $0x118] sm:$0xff]
    %v286 = vld [vmem:[#allocation8 + $0x120] sm:$0xff]
    %v287 = vld [vmem:[#allocation8 + $0x128] sm:$0xff]
    %v288 = vld [vmem:[#allocation8 + $0x130] sm:$0xff]
    %v289 = vld [vmem:[#allocation8 + $0x138] sm:$0xff]
    %v290 = vld [vmem:[#allocation8 + $0x140] sm:$0xff]
    %v291 = vld [vmem:[#allocation8 + $0x148] sm:$0xff]
    %v292 = vld [vmem:[#allocation8 + $0x150] sm:$0xff]
    %v293 = vld [vmem:[#allocation8 + $0x158] sm:$0xff]
    %v294 = vld [vmem:[#allocation8 + $0x160] sm:$0xff]
    %v295 = vld [vmem:[#allocation8 + $0x168] sm:$0xff]
    %v296 = vld [vmem:[#allocation8 + $0x170] sm:$0xff]
    %v297 = vld [vmem:[#allocation8 + $0x178] sm:$0xff]
    %v298 = vld [vmem:[#allocation8 + $0x180] sm:$0xff]
    %v299 = vld [vmem:[#allocation8 + $0x188] sm:$0xff]
    %v300 = vld [vmem:[#allocation8 + $0x190] sm:$0xff]
    %v301 = vld [vmem:[#allocation8 + $0x198] sm:$0xff]
    %v302 = vld [vmem:[#allocation8 + $0x1a0] sm:$0xff]
    %v303 = vld [vmem:[#allocation8 + $0x1a8] sm:$0xff]
    %v304 = vld [vmem:[#allocation8 + $0x1b0] sm:$0xff]
    %v305 = vld [vmem:[#allocation8 + $0x1b8] sm:$0xff]
    %v306 = vld [vmem:[#allocation8 + $0x1c0] sm:$0xff]
    %v307 = vld [vmem:[#allocation8 + $0x1c8] sm:$0xff]
    %v308 = vld [vmem:[#allocation8 + $0x1d0] sm:$0xff]
    %v309 = vld [vmem:[#allocation8 + $0x1d8] sm:$0xff]
    %v310 = vld [vmem:[#allocation8 + $0x1e0] sm:$0xff]
    %v311 = vld [vmem:[#allocation8 + $0x1e8] sm:$0xff]
    %v312 = vld [vmem:[#allocation8 + $0x1f0] sm:$0xff]
    %v313 = vld [vmem:[#allocation8 + $0x1f8] sm:$0xff]
    %v314 = vld [vmem:[#allocation8 + $0x200] sm:$0xff]
    %v315 = vld [vmem:[#allocation8 + $0x208] sm:$0xff]
    %v316 = vld [vmem:[#allocation8 + $0x210] sm:$0xff]
    %v317 = vld [vmem:[#allocation8 + $0x218] sm:$0xff]
    %v318 = vld [vmem:[#allocation8 + $0x220] sm:$0xff]
    %v319 = vld [vmem:[#allocation8 + $0x228] sm:$0xff]
    %v320 = vld [vmem:[#allocation8 + $0x230] sm:$0xff]
    %v321 = vld [vmem:[#allocation8 + $0x238] sm:$0xff]
    %v322 = vld [vmem:[#allocation8 + $0x240] sm:$0xff]
    %v323 = vld [vmem:[#allocation8 + $0x248] sm:$0xff]
    %v324 = vld [vmem:[#allocation8 + $0x250] sm:$0xff]
    %v325 = vld [vmem:[#allocation8 + $0x258] sm:$0xff]
    %v326 = vld [vmem:[#allocation8 + $0x260] sm:$0xff]
    %v327 = vld [vmem:[#allocation8 + $0x268] sm:$0xff]
    %v328 = vld [vmem:[#allocation8 + $0x270] sm:$0xff]
    %v329 = vld [vmem:[#allocation8 + $0x278] sm:$0xff]
    %v330 = vld [vmem:[#allocation8 + $0x280] sm:$0xff]
    %v331 = vld [vmem:[#allocation8 + $0x288] sm:$0xff]
    %v332 = vld [vmem:[#allocation8 + $0x290] sm:$0xff]
    %v333 = vld [vmem:[#allocation8 + $0x298] sm:$0xff]
    %v334 = vld [vmem:[#allocation8 + $0x2a0] sm:$0xff]
    %v335 = vld [vmem:[#allocation8 + $0x2a8] sm:$0xff]
    %v336 = vld [vmem:[#allocation8 + $0x2b0] sm:$0xff]
    %v337 = vld [vmem:[#allocation8 + $0x2b8] sm:$0xff]
    %v338 = vld [vmem:[#allocation8 + $0x2c0] sm:$0xff]
    %v339 = vld [vmem:[#allocation8 + $0x2c8] sm:$0xff]
    %v340 = vld [vmem:[#allocation8 + $0x2d0] sm:$0xff]
    %v341 = vld [vmem:[#allocation8 + $0x2d8] sm:$0xff]
    %v342 = vld [vmem:[#allocation8 + $0x2e0] sm:$0xff]
    %v343 = vld [vmem:[#allocation8 + $0x2e8] sm:$0xff]
    %v344 = vld [vmem:[#allocation8 + $0x2f0] sm:$0xff]
    %v345 = vld [vmem:[#allocation8 + $0x2f8] sm:$0xff]
    %v346 = vld [vmem:[#allocation9] sm:$0xff]
    %v347 = vld [vmem:[#allocation9 + $0x8] sm:$0xff]
    %v348 = vld [vmem:[#allocation9 + $0x10] sm:$0xff]
    %v349 = vld [vmem:[#allocation9 + $0x18] sm:$0xff]
    %v350 = vld [vmem:[#allocation9 + $0x20] sm:$0xff]
    %v351 = vld [vmem:[#allocation9 + $0x28] sm:$0xff]
    %v352 = vld [vmem:[#allocation9 + $0x30] sm:$0xff]
    %v353 = vld [vmem:[#allocation9 + $0x38] sm:$0xff]
    %v354 = vld [vmem:[#allocation9 + $0x40] sm:$0xff]
    %v355 = vld [vmem:[#allocation9 + $0x48] sm:$0xff]
    %v356 = vld [vmem:[#allocation9 + $0x50] sm:$0xff]
    %v357 = vld [vmem:[#allocation9 + $0x58] sm:$0xff]
    %v358 = vld [vmem:[#allocation9 + $0x60] sm:$0xff]
    %v359 = vld [vmem:[#allocation9 + $0x68] sm:$0xff]
    %v360 = vld [vmem:[#allocation9 + $0x70] sm:$0xff]
    %v361 = vld [vmem:[#allocation9 + $0x78] sm:$0xff]
    %v362 = vld [vmem:[#allocation9 + $0x80] sm:$0xff]
    %v363 = vld [vmem:[#allocation9 + $0x88] sm:$0xff]
    %v364 = vld [vmem:[#allocation9 + $0x90] sm:$0xff]
    %v365 = vld [vmem:[#allocation9 + $0x98] sm:$0xff]
    %v366 = vld [vmem:[#allocation9 + $0xa0] sm:$0xff]
    %v367 = vld [vmem:[#allocation9 + $0xa8] sm:$0xff]
    %v368 = vld [vmem:[#allocation9 + $0xb0] sm:$0xff]
    %v369 = vld [vmem:[#allocation9 + $0xb8] sm:$0xff]
    %v370 = vld [vmem:[#allocation9 + $0xc0] sm:$0xff]
    %v371 = vld [vmem:[#allocation9 + $0xc8] sm:$0xff]
    %v372 = vld [vmem:[#allocation9 + $0xd0] sm:$0xff]
    %v373 = vld [vmem:[#allocation9 + $0xd8] sm:$0xff]
    %v374 = vld [vmem:[#allocation9 + $0xe0] sm:$0xff]
    %v375 = vld [vmem:[#allocation9 + $0xe8] sm:$0xff]
    %v376 = vld [vmem:[#allocation9 + $0xf0] sm:$0xff]
    %v377 = vld [vmem:[#allocation9 + $0xf8] sm:$0xff]
    %v378 = vld [vmem:[#allocation9 + $0x100] sm:$0xff]
    %v379 = vld [vmem:[#allocation9 + $0x108] sm:$0xff]
    %v380 = vld [vmem:[#allocation9 + $0x110] sm:$0xff]
    %v381 = vld [vmem:[#allocation9 + $0x118] sm:$0xff]
    %v382 = vld [vmem:[#allocation9 + $0x120] sm:$0xff]
    %v383 = vld [vmem:[#allocation9 + $0x128] sm:$0xff]
    %v384 = vld [vmem:[#allocation9 + $0x130] sm:$0xff]
    %v385 = vld [vmem:[#allocation9 + $0x138] sm:$0xff]
    %v386 = vld [vmem:[#allocation9 + $0x140] sm:$0xff]
    %v387 = vld [vmem:[#allocation9 + $0x148] sm:$0xff]
    %v388 = vld [vmem:[#allocation9 + $0x150] sm:$0xff]
    %v389 = vld [vmem:[#allocation9 + $0x158] sm:$0xff]
    %v390 = vld [vmem:[#allocation9 + $0x160] sm:$0xff]
    %v391 = vld [vmem:[#allocation9 + $0x168] sm:$0xff]
    %v392 = vld [vmem:[#allocation9 + $0x170] sm:$0xff]
    %v393 = vld [vmem:[#allocation9 + $0x178] sm:$0xff]
    %v394 = vld [vmem:[#allocation9 + $0x180] sm:$0xff]
    %v395 = vld [vmem:[#allocation9 + $0x188] sm:$0xff]
    %v396 = vld [vmem:[#allocation9 + $0x190] sm:$0xff]
    %v397 = vld [vmem:[#allocation9 + $0x198] sm:$0xff]
    %v398 = vld [vmem:[#allocation9 + $0x1a0] sm:$0xff]
    %v399 = vld [vmem:[#allocation9 + $0x1a8] sm:$0xff]
    %v400 = vld [vmem:[#allocation9 + $0x1b0] sm:$0xff]
    %v401 = vld [vmem:[#allocation9 + $0x1b8] sm:$0xff]
    %v402 = vld [vmem:[#allocation9 + $0x1c0] sm:$0xff]
    %v403 = vld [vmem:[#allocation9 + $0x1c8] sm:$0xff]
    %v404 = vld [vmem:[#allocation9 + $0x1d0] sm:$0xff]
    %v405 = vld [vmem:[#allocation9 + $0x1d8] sm:$0xff]
    %v406 = vld [vmem:[#allocation9 + $0x1e0] sm:$0xff]
    %v407 = vld [vmem:[#allocation9 + $0x1e8] sm:$0xff]
    %v408 = vld [vmem:[#allocation9 + $0x1f0] sm:$0xff]
    %v409 = vld [vmem:[#allocation9 + $0x1f8] sm:$0xff]
    %v410 = vld [vmem:[#allocation9 + $0x200] sm:$0xff]
    %v411 = vld [vmem:[#allocation9 + $0x208] sm:$0xff]
    %v412 = vld [vmem:[#allocation9 + $0x210] sm:$0xff]
    %v413 = vld [vmem:[#allocation9 + $0x218] sm:$0xff]
    %v414 = vld [vmem:[#allocation9 + $0x220] sm:$0xff]
    %v415 = vld [vmem:[#allocation9 + $0x228] sm:$0xff]
    %v416 = vld [vmem:[#allocation9 + $0x230] sm:$0xff]
    %v417 = vld [vmem:[#allocation9 + $0x238] sm:$0xff]
    %v418 = vld [vmem:[#allocation9 + $0x240] sm:$0xff]
    %v419 = vld [vmem:[#allocation9 + $0x248] sm:$0xff]
    %v420 = vld [vmem:[#allocation9 + $0x250] sm:$0xff]
    %v421 = vld [vmem:[#allocation9 + $0x258] sm:$0xff]
    %v422 = vld [vmem:[#allocation9 + $0x260] sm:$0xff]
    %v423 = vld [vmem:[#allocation9 + $0x268] sm:$0xff]
    %v424 = vld [vmem:[#allocation9 + $0x270] sm:$0xff]
    %v425 = vld [vmem:[#allocation9 + $0x278] sm:$0xff]
    %v426 = vld [vmem:[#allocation9 + $0x280] sm:$0xff]
    %v427 = vld [vmem:[#allocation9 + $0x288] sm:$0xff]
    %v428 = vld [vmem:[#allocation9 + $0x290] sm:$0xff]
    %v429 = vld [vmem:[#allocation9 + $0x298] sm:$0xff]
    %v430 = vld [vmem:[#allocation9 + $0x2a0] sm:$0xff]
    %v431 = vld [vmem:[#allocation9 + $0x2a8] sm:$0xff]
    %v432 = vld [vmem:[#allocation9 + $0x2b0] sm:$0xff]
    %v433 = vld [vmem:[#allocation9 + $0x2b8] sm:$0xff]
    %v434 = vld [vmem:[#allocation9 + $0x2c0] sm:$0xff]
    %v435 = vld [vmem:[#allocation9 + $0x2c8] sm:$0xff]
    %v436 = vld [vmem:[#allocation9 + $0x2d0] sm:$0xff]
    %v437 = vld [vmem:[#allocation9 + $0x2d8] sm:$0xff]
    %v438 = vld [vmem:[#allocation9 + $0x2e0] sm:$0xff]
    %v439 = vld [vmem:[#allocation9 + $0x2e8] sm:$0xff]
    %v440 = vld [vmem:[#allocation9 + $0x2f0] sm:$0xff]
    %v441 = vld [vmem:[#allocation9 + $0x2f8] sm:$0xff]
    %v442 = vld [vmem:[#allocation9 + $0x300] sm:$0xff]
    %v443 = vld [vmem:[#allocation9 + $0x308] sm:$0xff]
    %v444 = vld [vmem:[#allocation9 + $0x310] sm:$0xff]
    %v445 = vld [vmem:[#allocation9 + $0x318] sm:$0xff]
    %v446 = vld [vmem:[#allocation9 + $0x320] sm:$0xff]
    %v447 = vld [vmem:[#allocation9 + $0x328] sm:$0xff]
    %v448 = vld [vmem:[#allocation9 + $0x330] sm:$0xff]
    %v449 = vld [vmem:[#allocation9 + $0x338] sm:$0xff]
    %v450 = vld [vmem:[#allocation9 + $0x340] sm:$0xff]
    %v451 = vld [vmem:[#allocation9 + $0x348] sm:$0xff]
    %v452 = vld [vmem:[#allocation9 + $0x350] sm:$0xff]
    %v453 = vld [vmem:[#allocation9 + $0x358] sm:$0xff]
    %v454 = vld [vmem:[#allocation9 + $0x360] sm:$0xff]
    %v455 = vld [vmem:[#allocation9 + $0x368] sm:$0xff]
    %v456 = vld [vmem:[#allocation9 + $0x370] sm:$0xff]
    %v457 = vld [vmem:[#allocation9 + $0x378] sm:$0xff]
    %v458 = vld [vmem:[#allocation9 + $0x380] sm:$0xff]
    %v459 = vld [vmem:[#allocation9 + $0x388] sm:$0xff]
    %v460 = vld [vmem:[#allocation9 + $0x390] sm:$0xff]
    %v461 = vld [vmem:[#allocation9 + $0x398] sm:$0xff]
    %v462 = vld [vmem:[#allocation9 + $0x3a0] sm:$0xff]
    %v463 = vld [vmem:[#allocation9 + $0x3a8] sm:$0xff]
    %v464 = vld [vmem:[#allocation9 + $0x3b0] sm:$0xff]
    %v465 = vld [vmem:[#allocation9 + $0x3b8] sm:$0xff]
    %v466 = vld [vmem:[#allocation9 + $0x3c0] sm:$0xff]
    %v467 = vld [vmem:[#allocation9 + $0x3c8] sm:$0xff]
    %v468 = vld [vmem:[#allocation9 + $0x3d0] sm:$0xff]
    %v469 = vld [vmem:[#allocation9 + $0x3d8] sm:$0xff]
    %v470 = vld [vmem:[#allocation9 + $0x3e0] sm:$0xff]
    %v471 = vld [vmem:[#allocation9 + $0x3e8] sm:$0xff]
    %v472 = vld [vmem:[#allocation9 + $0x3f0] sm:$0xff]
    %v473 = vld [vmem:[#allocation9 + $0x3f8] sm:$0xff]
    %v474 = vld [vmem:[#allocation9 + $0x400] sm:$0xff]
    %v475 = vld [vmem:[#allocation9 + $0x408] sm:$0xff]
    %v476 = vld [vmem:[#allocation9 + $0x410] sm:$0xff]
    %v477 = vld [vmem:[#allocation9 + $0x418] sm:$0xff]
    %v478 = vld [vmem:[#allocation9 + $0x420] sm:$0xff]
    %v479 = vld [vmem:[#allocation9 + $0x428] sm:$0xff]
    %v480 = vld [vmem:[#allocation9 + $0x430] sm:$0xff]
    %v481 = vld [vmem:[#allocation9 + $0x438] sm:$0xff]
    %v482 = vld [vmem:[#allocation9 + $0x440] sm:$0xff]
    %v483 = vld [vmem:[#allocation9 + $0x448] sm:$0xff]
    %v484 = vld [vmem:[#allocation9 + $0x450] sm:$0xff]
    %v485 = vld [vmem:[#allocation9 + $0x458] sm:$0xff]
    %v486 = vld [vmem:[#allocation9 + $0x460] sm:$0xff]
    %v487 = vld [vmem:[#allocation9 + $0x468] sm:$0xff]
    %v488 = vld [vmem:[#allocation9 + $0x470] sm:$0xff]
    %v489 = vld [vmem:[#allocation9 + $0x478] sm:$0xff]
    %v490 = vld [vmem:[#allocation9 + $0x480] sm:$0xff]
    %v491 = vld [vmem:[#allocation9 + $0x488] sm:$0xff]
    %v492 = vld [vmem:[#allocation9 + $0x490] sm:$0xff]
    %v493 = vld [vmem:[#allocation9 + $0x498] sm:$0xff]
    %v494 = vld [vmem:[#allocation9 + $0x4a0] sm:$0xff]
    %v495 = vld [vmem:[#allocation9 + $0x4a8] sm:$0xff]
    %v496 = vld [vmem:[#allocation9 + $0x4b0] sm:$0xff]
    %v497 = vld [vmem:[#allocation9 + $0x4b8] sm:$0xff]
    %v498 = vld [vmem:[#allocation9 + $0x4c0] sm:$0xff]
    %v499 = vld [vmem:[#allocation9 + $0x4c8] sm:$0xff]
    %v500 = vld [vmem:[#allocation9 + $0x4d0] sm:$0xff]
    %v501 = vld [vmem:[#allocation9 + $0x4d8] sm:$0xff]
    %v502 = vld [vmem:[#allocation9 + $0x4e0] sm:$0xff]
    %v503 = vld [vmem:[#allocation9 + $0x4e8] sm:$0xff]
    %v504 = vld [vmem:[#allocation9 + $0x4f0] sm:$0xff]
    %v505 = vld [vmem:[#allocation9 + $0x4f8] sm:$0xff]
    %v506 = vld [vmem:[#allocation9 + $0x500] sm:$0xff]
    %v507 = vld [vmem:[#allocation9 + $0x508] sm:$0xff]
    %v508 = vld [vmem:[#allocation9 + $0x510] sm:$0xff]
    %v509 = vld [vmem:[#allocation9 + $0x518] sm:$0xff]
    %v510 = vld [vmem:[#allocation9 + $0x520] sm:$0xff]
    %v511 = vld [vmem:[#allocation9 + $0x528] sm:$0xff]
    %v512 = vld [vmem:[#allocation9 + $0x530] sm:$0xff]
    %v513 = vld [vmem:[#allocation9 + $0x538] sm:$0xff]
    %v514 = vld [vmem:[#allocation9 + $0x540] sm:$0xff]
    %v515 = vld [vmem:[#allocation9 + $0x548] sm:$0xff]
    %v516 = vld [vmem:[#allocation9 + $0x550] sm:$0xff]
    %v517 = vld [vmem:[#allocation9 + $0x558] sm:$0xff]
    %v518 = vld [vmem:[#allocation9 + $0x560] sm:$0xff]
    %v519 = vld [vmem:[#allocation9 + $0x568] sm:$0xff]
    %v520 = vld [vmem:[#allocation9 + $0x570] sm:$0xff]
    %v521 = vld [vmem:[#allocation9 + $0x578] sm:$0xff]
    %v522 = vld [vmem:[#allocation9 + $0x580] sm:$0xff]
    %v523 = vld [vmem:[#allocation9 + $0x588] sm:$0xff]
    %v524 = vld [vmem:[#allocation9 + $0x590] sm:$0xff]
    %v525 = vld [vmem:[#allocation9 + $0x598] sm:$0xff]
    %v526 = vld [vmem:[#allocation9 + $0x5a0] sm:$0xff]
    %v527 = vld [vmem:[#allocation9 + $0x5a8] sm:$0xff]
    %v528 = vld [vmem:[#allocation9 + $0x5b0] sm:$0xff]
    %v529 = vld [vmem:[#allocation9 + $0x5b8] sm:$0xff]
    %v530 = vld [vmem:[#allocation9 + $0x5c0] sm:$0xff]
    %v531 = vld [vmem:[#allocation9 + $0x5c8] sm:$0xff]
    %v532 = vld [vmem:[#allocation9 + $0x5d0] sm:$0xff]
    %v533 = vld [vmem:[#allocation9 + $0x5d8] sm:$0xff]
    %v534 = vld [vmem:[#allocation9 + $0x5e0] sm:$0xff]
    %v535 = vld [vmem:[#allocation9 + $0x5e8] sm:$0xff]
    %v536 = vld [vmem:[#allocation9 + $0x5f0] sm:$0xff]
    %v537 = vld [vmem:[#allocation9 + $0x5f8] sm:$0xff]
    %v538 = vld [vmem:[#allocation9 + $0x600] sm:$0xff]
    %v539 = vld [vmem:[#allocation9 + $0x608] sm:$0xff]
    %v540 = vld [vmem:[#allocation9 + $0x610] sm:$0xff]
    %v541 = vld [vmem:[#allocation9 + $0x618] sm:$0xff]
    %v542 = vld [vmem:[#allocation9 + $0x620] sm:$0xff]
    %v543 = vld [vmem:[#allocation9 + $0x628] sm:$0xff]
    %v544 = vld [vmem:[#allocation9 + $0x630] sm:$0xff]
    %v545 = vld [vmem:[#allocation9 + $0x638] sm:$0xff]
    %v546 = vld [vmem:[#allocation9 + $0x640] sm:$0xff]
    %v547 = vld [vmem:[#allocation9 + $0x648] sm:$0xff]
    %v548 = vld [vmem:[#allocation9 + $0x650] sm:$0xff]
    %v549 = vld [vmem:[#allocation9 + $0x658] sm:$0xff]
    %v550 = vld [vmem:[#allocation9 + $0x660] sm:$0xff]
    %v551 = vld [vmem:[#allocation9 + $0x668] sm:$0xff]
    %v552 = vld [vmem:[#allocation9 + $0x670] sm:$0xff]
    %v553 = vld [vmem:[#allocation9 + $0x678] sm:$0xff]
    %v554 = vld [vmem:[#allocation9 + $0x680] sm:$0xff]
    %v555 = vld [vmem:[#allocation9 + $0x688] sm:$0xff]
    %v556 = vld [vmem:[#allocation9 + $0x690] sm:$0xff]
    %v557 = vld [vmem:[#allocation9 + $0x698] sm:$0xff]
    %v558 = vld [vmem:[#allocation9 + $0x6a0] sm:$0xff]
    %v559 = vld [vmem:[#allocation9 + $0x6a8] sm:$0xff]
    %v560 = vld [vmem:[#allocation9 + $0x6b0] sm:$0xff]
    %v561 = vld [vmem:[#allocation9 + $0x6b8] sm:$0xff]
    %v562 = vld [vmem:[#allocation9 + $0x6c0] sm:$0xff]
    %v563 = vld [vmem:[#allocation9 + $0x6c8] sm:$0xff]
    %v564 = vld [vmem:[#allocation9 + $0x6d0] sm:$0xff]
    %v565 = vld [vmem:[#allocation9 + $0x6d8] sm:$0xff]
    %v566 = vld [vmem:[#allocation9 + $0x6e0] sm:$0xff]
    %v567 = vld [vmem:[#allocation9 + $0x6e8] sm:$0xff]
    %v568 = vld [vmem:[#allocation9 + $0x6f0] sm:$0xff]
    %v569 = vld [vmem:[#allocation9 + $0x6f8] sm:$0xff]
    %v570 = vld [vmem:[#allocation9 + $0x700] sm:$0xff]
    %v571 = vld [vmem:[#allocation9 + $0x708] sm:$0xff]
    %v572 = vld [vmem:[#allocation9 + $0x710] sm:$0xff]
    %v573 = vld [vmem:[#allocation9 + $0x718] sm:$0xff]
    %v574 = vld [vmem:[#allocation9 + $0x720] sm:$0xff]
    %v575 = vld [vmem:[#allocation9 + $0x728] sm:$0xff]
    %v576 = vld [vmem:[#allocation9 + $0x730] sm:$0xff]
    %v577 = vld [vmem:[#allocation9 + $0x738] sm:$0xff]
    %v578 = vld [vmem:[#allocation9 + $0x740] sm:$0xff]
    %v579 = vld [vmem:[#allocation9 + $0x748] sm:$0xff]
    %v580 = vld [vmem:[#allocation9 + $0x750] sm:$0xff]
    %v581 = vld [vmem:[#allocation9 + $0x758] sm:$0xff]
    %v582 = vld [vmem:[#allocation9 + $0x760] sm:$0xff]
    %v583 = vld [vmem:[#allocation9 + $0x768] sm:$0xff]
    %v584 = vld [vmem:[#allocation9 + $0x770] sm:$0xff]
    %v585 = vld [vmem:[#allocation9 + $0x778] sm:$0xff]
    %v586 = vld [vmem:[#allocation9 + $0x780] sm:$0xff]
    %v587 = vld [vmem:[#allocation9 + $0x788] sm:$0xff]
    %v588 = vld [vmem:[#allocation9 + $0x790] sm:$0xff]
    %v589 = vld [vmem:[#allocation9 + $0x798] sm:$0xff]
    %v590 = vld [vmem:[#allocation9 + $0x7a0] sm:$0xff]
    %v591 = vld [vmem:[#allocation9 + $0x7a8] sm:$0xff]
    %v592 = vld [vmem:[#allocation9 + $0x7b0] sm:$0xff]
    %v593 = vld [vmem:[#allocation9 + $0x7b8] sm:$0xff]
    %v594 = vld [vmem:[#allocation9 + $0x7c0] sm:$0xff]
    %v595 = vld [vmem:[#allocation9 + $0x7c8] sm:$0xff]
    %v596 = vld [vmem:[#allocation9 + $0x7d0] sm:$0xff]
    %v597 = vld [vmem:[#allocation9 + $0x7d8] sm:$0xff]
    %v598 = vld [vmem:[#allocation9 + $0x7e0] sm:$0xff]
    %v599 = vld [vmem:[#allocation9 + $0x7e8] sm:$0xff]
    %v600 = vld [vmem:[#allocation9 + $0x7f0] sm:$0xff]
    %v601 = vld [vmem:[#allocation9 + $0x7f8] sm:$0xff]
    %v602 = vld [vmem:[#allocation9 + $0x800] sm:$0xff]
    %v603 = vld [vmem:[#allocation9 + $0x808] sm:$0xff]
    %v604 = vld [vmem:[#allocation9 + $0x810] sm:$0xff]
    %v605 = vld [vmem:[#allocation9 + $0x818] sm:$0xff]
    %v606 = vld [vmem:[#allocation9 + $0x820] sm:$0xff]
    %v607 = vld [vmem:[#allocation9 + $0x828] sm:$0xff]
    %v608 = vld [vmem:[#allocation9 + $0x830] sm:$0xff]
    %v609 = vld [vmem:[#allocation9 + $0x838] sm:$0xff]
    %v610 = vld [vmem:[#allocation9 + $0x840] sm:$0xff]
    %v611 = vld [vmem:[#allocation9 + $0x848] sm:$0xff]
    %v612 = vld [vmem:[#allocation9 + $0x850] sm:$0xff]
    %v613 = vld [vmem:[#allocation9 + $0x858] sm:$0xff]
    %v614 = vld [vmem:[#allocation9 + $0x860] sm:$0xff]
    %v615 = vld [vmem:[#allocation9 + $0x868] sm:$0xff]
    %v616 = vld [vmem:[#allocation9 + $0x870] sm:$0xff]
    %v617 = vld [vmem:[#allocation9 + $0x878] sm:$0xff]
    %v618 = vld [vmem:[#allocation9 + $0x880] sm:$0xff]
    %v619 = vld [vmem:[#allocation9 + $0x888] sm:$0xff]
    %v620 = vld [vmem:[#allocation9 + $0x890] sm:$0xff]
    %v621 = vld [vmem:[#allocation9 + $0x898] sm:$0xff]
    %v622 = vld [vmem:[#allocation9 + $0x8a0] sm:$0xff]
    %v623 = vld [vmem:[#allocation9 + $0x8a8] sm:$0xff]
    %v624 = vld [vmem:[#allocation9 + $0x8b0] sm:$0xff]
    %v625 = vld [vmem:[#allocation9 + $0x8b8] sm:$0xff]
    %v626 = vld [vmem:[#allocation9 + $0x8c0] sm:$0xff]
    %v627 = vld [vmem:[#allocation9 + $0x8c8] sm:$0xff]
    %v628 = vld [vmem:[#allocation9 + $0x8d0] sm:$0xff]
    %v629 = vld [vmem:[#allocation9 + $0x8d8] sm:$0xff]
    %v630 = vld [vmem:[#allocation9 + $0x8e0] sm:$0xff]
    %v631 = vld [vmem:[#allocation9 + $0x8e8] sm:$0xff]
    %v632 = vld [vmem:[#allocation9 + $0x8f0] sm:$0xff]
    %v633 = vld [vmem:[#allocation9 + $0x8f8] sm:$0xff]
    %v634 = vld [vmem:[#allocation9 + $0x900] sm:$0xff]
    %v635 = vld [vmem:[#allocation9 + $0x908] sm:$0xff]
    %v636 = vld [vmem:[#allocation9 + $0x910] sm:$0xff]
    %v637 = vld [vmem:[#allocation9 + $0x918] sm:$0xff]
    %v638 = vld [vmem:[#allocation9 + $0x920] sm:$0xff]
    %v639 = vld [vmem:[#allocation9 + $0x928] sm:$0xff]
    %v640 = vld [vmem:[#allocation9 + $0x930] sm:$0xff]
    %v641 = vld [vmem:[#allocation9 + $0x938] sm:$0xff]
    %v642 = vld [vmem:[#allocation9 + $0x940] sm:$0xff]
    %v643 = vld [vmem:[#allocation9 + $0x948] sm:$0xff]
    %v644 = vld [vmem:[#allocation9 + $0x950] sm:$0xff]
    %v645 = vld [vmem:[#allocation9 + $0x958] sm:$0xff]
    %v646 = vld [vmem:[#allocation9 + $0x960] sm:$0xff]
    %v647 = vld [vmem:[#allocation9 + $0x968] sm:$0xff]
    %v648 = vld [vmem:[#allocation9 + $0x970] sm:$0xff]
    %v649 = vld [vmem:[#allocation9 + $0x978] sm:$0xff]
    %v650 = vld [vmem:[#allocation9 + $0x980] sm:$0xff]
    %v651 = vld [vmem:[#allocation9 + $0x988] sm:$0xff]
    %v652 = vld [vmem:[#allocation9 + $0x990] sm:$0xff]
    %v653 = vld [vmem:[#allocation9 + $0x998] sm:$0xff]
    %v654 = vld [vmem:[#allocation9 + $0x9a0] sm:$0xff]
    %v655 = vld [vmem:[#allocation9 + $0x9a8] sm:$0xff]
    %v656 = vld [vmem:[#allocation9 + $0x9b0] sm:$0xff]
    %v657 = vld [vmem:[#allocation9 + $0x9b8] sm:$0xff]
    %v658 = vld [vmem:[#allocation9 + $0x9c0] sm:$0xff]
    %v659 = vld [vmem:[#allocation9 + $0x9c8] sm:$0xff]
    %v660 = vld [vmem:[#allocation9 + $0x9d0] sm:$0xff]
    %v661 = vld [vmem:[#allocation9 + $0x9d8] sm:$0xff]
    %v662 = vld [vmem:[#allocation9 + $0x9e0] sm:$0xff]
    %v663 = vld [vmem:[#allocation9 + $0x9e8] sm:$0xff]
    %v664 = vld [vmem:[#allocation9 + $0x9f0] sm:$0xff]
    %v665 = vld [vmem:[#allocation9 + $0x9f8] sm:$0xff]
    %v666 = vld [vmem:[#allocation9 + $0xa00] sm:$0xff]
    %v667 = vld [vmem:[#allocation9 + $0xa08] sm:$0xff]
    %v668 = vld [vmem:[#allocation9 + $0xa10] sm:$0xff]
    %v669 = vld [vmem:[#allocation9 + $0xa18] sm:$0xff]
    %v670 = vld [vmem:[#allocation9 + $0xa20] sm:$0xff]
    %v671 = vld [vmem:[#allocation9 + $0xa28] sm:$0xff]
    %v672 = vld [vmem:[#allocation9 + $0xa30] sm:$0xff]
    %v673 = vld [vmem:[#allocation9 + $0xa38] sm:$0xff]
    %v674 = vld [vmem:[#allocation9 + $0xa40] sm:$0xff]
    %v675 = vld [vmem:[#allocation9 + $0xa48] sm:$0xff]
    %v676 = vld [vmem:[#allocation9 + $0xa50] sm:$0xff]
    %v677 = vld [vmem:[#allocation9 + $0xa58] sm:$0xff]
    %v678 = vld [vmem:[#allocation9 + $0xa60] sm:$0xff]
    %v679 = vld [vmem:[#allocation9 + $0xa68] sm:$0xff]
    %v680 = vld [vmem:[#allocation9 + $0xa70] sm:$0xff]
    %v681 = vld [vmem:[#allocation9 + $0xa78] sm:$0xff]
    %v682 = vld [vmem:[#allocation9 + $0xa80] sm:$0xff]
    %v683 = vld [vmem:[#allocation9 + $0xa88] sm:$0xff]
    %v684 = vld [vmem:[#allocation9 + $0xa90] sm:$0xff]
    %v685 = vld [vmem:[#allocation9 + $0xa98] sm:$0xff]
    %v686 = vld [vmem:[#allocation9 + $0xaa0] sm:$0xff]
    %v687 = vld [vmem:[#allocation9 + $0xaa8] sm:$0xff]
    %v688 = vld [vmem:[#allocation9 + $0xab0] sm:$0xff]
    %v689 = vld [vmem:[#allocation9 + $0xab8] sm:$0xff]
    %v690 = vld [vmem:[#allocation9 + $0xac0] sm:$0xff]
    %v691 = vld [vmem:[#allocation9 + $0xac8] sm:$0xff]
    %v692 = vld [vmem:[#allocation9 + $0xad0] sm:$0xff]
    %v693 = vld [vmem:[#allocation9 + $0xad8] sm:$0xff]
    %v694 = vld [vmem:[#allocation9 + $0xae0] sm:$0xff]
    %v695 = vld [vmem:[#allocation9 + $0xae8] sm:$0xff]
    %v696 = vld [vmem:[#allocation9 + $0xaf0] sm:$0xff]
    %v697 = vld [vmem:[#allocation9 + $0xaf8] sm:$0xff]
    %v698 = vld [vmem:[#allocation9 + $0xb00] sm:$0xff]
    %v699 = vld [vmem:[#allocation9 + $0xb08] sm:$0xff]
    %v700 = vld [vmem:[#allocation9 + $0xb10] sm:$0xff]
    %v701 = vld [vmem:[#allocation9 + $0xb18] sm:$0xff]
    %v702 = vld [vmem:[#allocation9 + $0xb20] sm:$0xff]
    %v703 = vld [vmem:[#allocation9 + $0xb28] sm:$0xff]
    %v704 = vld [vmem:[#allocation9 + $0xb30] sm:$0xff]
    %v705 = vld [vmem:[#allocation9 + $0xb38] sm:$0xff]
    %v706 = vld [vmem:[#allocation9 + $0xb40] sm:$0xff]
    %v707 = vld [vmem:[#allocation9 + $0xb48] sm:$0xff]
    %v708 = vld [vmem:[#allocation9 + $0xb50] sm:$0xff]
    %v709 = vld [vmem:[#allocation9 + $0xb58] sm:$0xff]
    %v710 = vld [vmem:[#allocation9 + $0xb60] sm:$0xff]
    %v711 = vld [vmem:[#allocation9 + $0xb68] sm:$0xff]
    %v712 = vld [vmem:[#allocation9 + $0xb70] sm:$0xff]
    %v713 = vld [vmem:[#allocation9 + $0xb78] sm:$0xff]
    %v714 = vld [vmem:[#allocation9 + $0xb80] sm:$0xff]
    %v715 = vld [vmem:[#allocation9 + $0xb88] sm:$0xff]
    %v716 = vld [vmem:[#allocation9 + $0xb90] sm:$0xff]
    %v717 = vld [vmem:[#allocation9 + $0xb98] sm:$0xff]
    %v718 = vld [vmem:[#allocation9 + $0xba0] sm:$0xff]
    %v719 = vld [vmem:[#allocation9 + $0xba8] sm:$0xff]
    %v720 = vld [vmem:[#allocation9 + $0xbb0] sm:$0xff]
    %v721 = vld [vmem:[#allocation9 + $0xbb8] sm:$0xff]
    %v722 = vld [vmem:[#allocation9 + $0xbc0] sm:$0xff]
    %v723 = vld [vmem:[#allocation9 + $0xbc8] sm:$0xff]
    %v724 = vld [vmem:[#allocation9 + $0xbd0] sm:$0xff]
    %v725 = vld [vmem:[#allocation9 + $0xbd8] sm:$0xff]
    %v726 = vld [vmem:[#allocation9 + $0xbe0] sm:$0xff]
    %v727 = vld [vmem:[#allocation9 + $0xbe8] sm:$0xff]
    %v728 = vld [vmem:[#allocation9 + $0xbf0] sm:$0xff]
    %v729 = vld [vmem:[#allocation9 + $0xbf8] sm:$0xff]
    %v730 = vld [vmem:[#allocation9 + $0xc00] sm:$0xff]
    %v731 = vld [vmem:[#allocation9 + $0xc08] sm:$0xff]
    %v732 = vld [vmem:[#allocation9 + $0xc10] sm:$0xff]
    %v733 = vld [vmem:[#allocation9 + $0xc18] sm:$0xff]
    %v734 = vld [vmem:[#allocation9 + $0xc20] sm:$0xff]
    %v735 = vld [vmem:[#allocation9 + $0xc28] sm:$0xff]
    %v736 = vld [vmem:[#allocation9 + $0xc30] sm:$0xff]
    %v737 = vld [vmem:[#allocation9 + $0xc38] sm:$0xff]
    %v738 = vld [vmem:[#allocation9 + $0xc40] sm:$0xff]
    %v739 = vld [vmem:[#allocation9 + $0xc48] sm:$0xff]
    %v740 = vld [vmem:[#allocation9 + $0xc50] sm:$0xff]
    %v741 = vld [vmem:[#allocation9 + $0xc58] sm:$0xff]
    %v742 = vld [vmem:[#allocation9 + $0xc60] sm:$0xff]
    %v743 = vld [vmem:[#allocation9 + $0xc68] sm:$0xff]
    %v744 = vld [vmem:[#allocation9 + $0xc70] sm:$0xff]
    %v745 = vld [vmem:[#allocation9 + $0xc78] sm:$0xff]
    %v746 = vld [vmem:[#allocation9 + $0xc80] sm:$0xff]
    %v747 = vld [vmem:[#allocation9 + $0xc88] sm:$0xff]
    %v748 = vld [vmem:[#allocation9 + $0xc90] sm:$0xff]
    %v749 = vld [vmem:[#allocation9 + $0xc98] sm:$0xff]
    %v750 = vld [vmem:[#allocation9 + $0xca0] sm:$0xff]
    %v751 = vld [vmem:[#allocation9 + $0xca8] sm:$0xff]
    %v752 = vld [vmem:[#allocation9 + $0xcb0] sm:$0xff]
    %v753 = vld [vmem:[#allocation9 + $0xcb8] sm:$0xff]
    %v754 = vld [vmem:[#allocation9 + $0xcc0] sm:$0xff]
    %v755 = vld [vmem:[#allocation9 + $0xcc8] sm:$0xff]
    %v756 = vld [vmem:[#allocation9 + $0xcd0] sm:$0xff]
    %v757 = vld [vmem:[#allocation9 + $0xcd8] sm:$0xff]
    %v758 = vld [vmem:[#allocation9 + $0xce0] sm:$0xff]
    %v759 = vld [vmem:[#allocation9 + $0xce8] sm:$0xff]
    %v760 = vld [vmem:[#allocation9 + $0xcf0] sm:$0xff]
    %v761 = vld [vmem:[#allocation9 + $0xcf8] sm:$0xff]
    %v762 = vld [vmem:[#allocation9 + $0xd00] sm:$0xff]
    %v763 = vld [vmem:[#allocation9 + $0xd08] sm:$0xff]
    %v764 = vld [vmem:[#allocation9 + $0xd10] sm:$0xff]
    %v765 = vld [vmem:[#allocation9 + $0xd18] sm:$0xff]
    %v766 = vld [vmem:[#allocation9 + $0xd20] sm:$0xff]
    %v767 = vld [vmem:[#allocation9 + $0xd28] sm:$0xff]
    %v768 = vld [vmem:[#allocation9 + $0xd30] sm:$0xff]
    %v769 = vld [vmem:[#allocation9 + $0xd38] sm:$0xff]
    %v770 = vld [vmem:[#allocation9 + $0xd40] sm:$0xff]
    %v771 = vld [vmem:[#allocation9 + $0xd48] sm:$0xff]
    %v772 = vld [vmem:[#allocation9 + $0xd50] sm:$0xff]
    %v773 = vld [vmem:[#allocation9 + $0xd58] sm:$0xff]
    %v774 = vld [vmem:[#allocation9 + $0xd60] sm:$0xff]
    %v775 = vld [vmem:[#allocation9 + $0xd68] sm:$0xff]
    %v776 = vld [vmem:[#allocation9 + $0xd70] sm:$0xff]
    %v777 = vld [vmem:[#allocation9 + $0xd78] sm:$0xff]
    %v778 = vld [vmem:[#allocation9 + $0xd80] sm:$0xff]
    %v779 = vld [vmem:[#allocation9 + $0xd88] sm:$0xff]
    %v780 = vld [vmem:[#allocation9 + $0xd90] sm:$0xff]
    %v781 = vld [vmem:[#allocation9 + $0xd98] sm:$0xff]
    %v782 = vld [vmem:[#allocation9 + $0xda0] sm:$0xff]
    %v783 = vld [vmem:[#allocation9 + $0xda8] sm:$0xff]
    %v784 = vld [vmem:[#allocation9 + $0xdb0] sm:$0xff]
    %v785 = vld [vmem:[#allocation9 + $0xdb8] sm:$0xff]
    %v786 = vld [vmem:[#allocation9 + $0xdc0] sm:$0xff]
    %v787 = vld [vmem:[#allocation9 + $0xdc8] sm:$0xff]
    %v788 = vld [vmem:[#allocation9 + $0xdd0] sm:$0xff]
    %v789 = vld [vmem:[#allocation9 + $0xdd8] sm:$0xff]
    %v790 = vld [vmem:[#allocation9 + $0xde0] sm:$0xff]
    %v791 = vld [vmem:[#allocation9 + $0xde8] sm:$0xff]
    %v792 = vld [vmem:[#allocation9 + $0xdf0] sm:$0xff]
    %v793 = vld [vmem:[#allocation9 + $0xdf8] sm:$0xff]
    %v794 = vld [vmem:[#allocation9 + $0xe00] sm:$0xff]
    %v795 = vld [vmem:[#allocation9 + $0xe08] sm:$0xff]
    %v796 = vld [vmem:[#allocation9 + $0xe10] sm:$0xff]
    %v797 = vld [vmem:[#allocation9 + $0xe18] sm:$0xff]
    %v798 = vld [vmem:[#allocation9 + $0xe20] sm:$0xff]
    %v799 = vld [vmem:[#allocation9 + $0xe28] sm:$0xff]
    %v800 = vld [vmem:[#allocation9 + $0xe30] sm:$0xff]
    %v801 = vld [vmem:[#allocation9 + $0xe38] sm:$0xff]
    %v802 = vld [vmem:[#allocation9 + $0xe40] sm:$0xff]
    %v803 = vld [vmem:[#allocation9 + $0xe48] sm:$0xff]
    %v804 = vld [vmem:[#allocation9 + $0xe50] sm:$0xff]
    %v805 = vld [vmem:[#allocation9 + $0xe58] sm:$0xff]
    %v806 = vld [vmem:[#allocation9 + $0xe60] sm:$0xff]
    %v807 = vld [vmem:[#allocation9 + $0xe68] sm:$0xff]
    %v808 = vld [vmem:[#allocation9 + $0xe70] sm:$0xff]
    %v809 = vld [vmem:[#allocation9 + $0xe78] sm:$0xff]
    %v810 = vld [vmem:[#allocation9 + $0xe80] sm:$0xff]
    %v811 = vld [vmem:[#allocation9 + $0xe88] sm:$0xff]
    %v812 = vld [vmem:[#allocation9 + $0xe90] sm:$0xff]
    %v813 = vld [vmem:[#allocation9 + $0xe98] sm:$0xff]
    %v814 = vld [vmem:[#allocation9 + $0xea0] sm:$0xff]
    %v815 = vld [vmem:[#allocation9 + $0xea8] sm:$0xff]
    %v816 = vld [vmem:[#allocation9 + $0xeb0] sm:$0xff]
    %v817 = vld [vmem:[#allocation9 + $0xeb8] sm:$0xff]
    %v818 = vld [vmem:[#allocation9 + $0xec0] sm:$0xff]
    %v819 = vld [vmem:[#allocation9 + $0xec8] sm:$0xff]
    %v820 = vld [vmem:[#allocation9 + $0xed0] sm:$0xff]
    %v821 = vld [vmem:[#allocation9 + $0xed8] sm:$0xff]
    %v822 = vld [vmem:[#allocation9 + $0xee0] sm:$0xff]
    %v823 = vld [vmem:[#allocation9 + $0xee8] sm:$0xff]
    %v824 = vld [vmem:[#allocation9 + $0xef0] sm:$0xff]
    %v825 = vld [vmem:[#allocation9 + $0xef8] sm:$0xff]
    %v826 = vld [vmem:[#allocation9 + $0xf00] sm:$0xff]
    %v827 = vld [vmem:[#allocation9 + $0xf08] sm:$0xff]
    %v828 = vld [vmem:[#allocation9 + $0xf10] sm:$0xff]
    %v829 = vld [vmem:[#allocation9 + $0xf18] sm:$0xff]
    %v830 = vld [vmem:[#allocation9 + $0xf20] sm:$0xff]
    %v831 = vld [vmem:[#allocation9 + $0xf28] sm:$0xff]
    %v832 = vld [vmem:[#allocation9 + $0xf30] sm:$0xff]
    %v833 = vld [vmem:[#allocation9 + $0xf38] sm:$0xff]
    %v834 = vld [vmem:[#allocation9 + $0xf40] sm:$0xff]
    %v835 = vld [vmem:[#allocation9 + $0xf48] sm:$0xff]
    %v836 = vld [vmem:[#allocation9 + $0xf50] sm:$0xff]
    %v837 = vld [vmem:[#allocation9 + $0xf58] sm:$0xff]
    %v838 = vld [vmem:[#allocation9 + $0xf60] sm:$0xff]
    %v839 = vld [vmem:[#allocation9 + $0xf68] sm:$0xff]
    %v840 = vld [vmem:[#allocation9 + $0xf70] sm:$0xff]
    %v841 = vld [vmem:[#allocation9 + $0xf78] sm:$0xff]
    %v842 = vld [vmem:[#allocation9 + $0xf80] sm:$0xff]
    %v843 = vld [vmem:[#allocation9 + $0xf88] sm:$0xff]
    %v844 = vld [vmem:[#allocation9 + $0xf90] sm:$0xff]
    %v845 = vld [vmem:[#allocation9 + $0xf98] sm:$0xff]
    %v846 = vld [vmem:[#allocation9 + $0xfa0] sm:$0xff]
    %v847 = vld [vmem:[#allocation9 + $0xfa8] sm:$0xff]
    %v848 = vld [vmem:[#allocation9 + $0xfb0] sm:$0xff]
    %v849 = vld [vmem:[#allocation9 + $0xfb8] sm:$0xff]
    %v850 = vld [vmem:[#allocation9 + $0xfc0] sm:$0xff]
    %v851 = vld [vmem:[#allocation9 + $0xfc8] sm:$0xff]
    %v852 = vld [vmem:[#allocation9 + $0xfd0] sm:$0xff]
    %v853 = vld [vmem:[#allocation9 + $0xfd8] sm:$0xff]
    %v854 = vld [vmem:[#allocation9 + $0xfe0] sm:$0xff]
    %v855 = vld [vmem:[#allocation9 + $0xfe8] sm:$0xff]
    %v856 = vld [vmem:[#allocation9 + $0xff0] sm:$0xff]
    %v857 = vld [vmem:[#allocation9 + $0xff8] sm:$0xff]
    %v858 = vld [vmem:[#allocation9 + $0x1000] sm:$0xff]
    %v859 = vld [vmem:[#allocation9 + $0x1008] sm:$0xff]
    %v860 = vld [vmem:[#allocation9 + $0x1010] sm:$0xff]
    %v861 = vld [vmem:[#allocation9 + $0x1018] sm:$0xff]
    %v862 = vld [vmem:[#allocation9 + $0x1020] sm:$0xff]
    %v863 = vld [vmem:[#allocation9 + $0x1028] sm:$0xff]
    %v864 = vld [vmem:[#allocation9 + $0x1030] sm:$0xff]
    %v865 = vld [vmem:[#allocation9 + $0x1038] sm:$0xff]
    %v866 = vld [vmem:[#allocation9 + $0x1040] sm:$0xff]
    %v867 = vld [vmem:[#allocation9 + $0x1048] sm:$0xff]
    %v868 = vld [vmem:[#allocation9 + $0x1050] sm:$0xff]
    %v869 = vld [vmem:[#allocation9 + $0x1058] sm:$0xff]
    %v870 = vld [vmem:[#allocation9 + $0x1060] sm:$0xff]
    %v871 = vld [vmem:[#allocation9 + $0x1068] sm:$0xff]
    %v872 = vld [vmem:[#allocation9 + $0x1070] sm:$0xff]
    %v873 = vld [vmem:[#allocation9 + $0x1078] sm:$0xff]
    %v874 = vld [vmem:[#allocation9 + $0x1080] sm:$0xff]
    %v875 = vld [vmem:[#allocation9 + $0x1088] sm:$0xff]
    %v876 = vld [vmem:[#allocation9 + $0x1090] sm:$0xff]
    %v877 = vld [vmem:[#allocation9 + $0x1098] sm:$0xff]
    %v878 = vld [vmem:[#allocation9 + $0x10a0] sm:$0xff]
    %v879 = vld [vmem:[#allocation9 + $0x10a8] sm:$0xff]
    %v880 = vld [vmem:[#allocation9 + $0x10b0] sm:$0xff]
    %v881 = vld [vmem:[#allocation9 + $0x10b8] sm:$0xff]
    %v882 = vld [vmem:[#allocation9 + $0x10c0] sm:$0xff]
    %v883 = vld [vmem:[#allocation9 + $0x10c8] sm:$0xff]
    %v884 = vld [vmem:[#allocation9 + $0x10d0] sm:$0xff]
    %v885 = vld [vmem:[#allocation9 + $0x10d8] sm:$0xff]
    %v886 = vld [vmem:[#allocation9 + $0x10e0] sm:$0xff]
    %v887 = vld [vmem:[#allocation9 + $0x10e8] sm:$0xff]
    %v888 = vld [vmem:[#allocation9 + $0x10f0] sm:$0xff]
    %v889 = vld [vmem:[#allocation9 + $0x10f8] sm:$0xff]
    %v890 = vld [vmem:[#allocation9 + $0x1100] sm:$0xff]
    %v891 = vld [vmem:[#allocation9 + $0x1108] sm:$0xff]
    %v892 = vld [vmem:[#allocation9 + $0x1110] sm:$0xff]
    %v893 = vld [vmem:[#allocation9 + $0x1118] sm:$0xff]
    %v894 = vld [vmem:[#allocation9 + $0x1120] sm:$0xff]
    %v895 = vld [vmem:[#allocation9 + $0x1128] sm:$0xff]
    %v896 = vld [vmem:[#allocation9 + $0x1130] sm:$0xff]
    %v897 = vld [vmem:[#allocation9 + $0x1138] sm:$0xff]
    %v898 = vld [vmem:[#allocation9 + $0x1140] sm:$0xff]
    %v899 = vld [vmem:[#allocation9 + $0x1148] sm:$0xff]
    %v900 = vld [vmem:[#allocation9 + $0x1150] sm:$0xff]
    %v901 = vld [vmem:[#allocation9 + $0x1158] sm:$0xff]
    %v902 = vld [vmem:[#allocation9 + $0x1160] sm:$0xff]
    %v903 = vld [vmem:[#allocation9 + $0x1168] sm:$0xff]
    %v904 = vld [vmem:[#allocation9 + $0x1170] sm:$0xff]
    %v905 = vld [vmem:[#allocation9 + $0x1178] sm:$0xff]
    %v906 = vld [vmem:[#allocation9 + $0x1180] sm:$0xff]
    %v907 = vld [vmem:[#allocation9 + $0x1188] sm:$0xff]
    %v908 = vld [vmem:[#allocation9 + $0x1190] sm:$0xff]
    %v909 = vld [vmem:[#allocation9 + $0x1198] sm:$0xff]
    %v910 = vld [vmem:[#allocation9 + $0x11a0] sm:$0xff]
    %v911 = vld [vmem:[#allocation9 + $0x11a8] sm:$0xff]
    %v912 = vld [vmem:[#allocation9 + $0x11b0] sm:$0xff]
    %v913 = vld [vmem:[#allocation9 + $0x11b8] sm:$0xff]
    %v914 = vld [vmem:[#allocation9 + $0x11c0] sm:$0xff]
    %v915 = vld [vmem:[#allocation9 + $0x11c8] sm:$0xff]
    %v916 = vld [vmem:[#allocation9 + $0x11d0] sm:$0xff]
    %v917 = vld [vmem:[#allocation9 + $0x11d8] sm:$0xff]
    %v918 = vld [vmem:[#allocation9 + $0x11e0] sm:$0xff]
    %v919 = vld [vmem:[#allocation9 + $0x11e8] sm:$0xff]
    %v920 = vld [vmem:[#allocation9 + $0x11f0] sm:$0xff]
    %v921 = vld [vmem:[#allocation9 + $0x11f8] sm:$0xff]
    %v922 = vmul.f32 %v250, %v346
    %v923 = vmul.f32 %v251, %v347
    %v924 = vmul.f32 %v252, %v348
    %v925 = vmul.f32 %v253, %v349
    %v926 = vmul.f32 %v254, %v350
    %v927 = vmul.f32 %v255, %v351
    %v928 = vmul.f32 %v256, %v352
    %v929 = vmul.f32 %v257, %v353
    %v930 = vmul.f32 %v258, %v354
    %v931 = vmul.f32 %v259, %v355
    %v932 = vmul.f32 %v260, %v356
    %v933 = vmul.f32 %v261, %v357
    %v934 = vmul.f32 %v262, %v358
    %v935 = vmul.f32 %v263, %v359
    %v936 = vmul.f32 %v264, %v360
    %v937 = vmul.f32 %v265, %v361
    %v938 = vmul.f32 %v266, %v362
    %v939 = vmul.f32 %v267, %v363
    %v940 = vmul.f32 %v268, %v364
    %v941 = vmul.f32 %v269, %v365
    %v942 = vmul.f32 %v270, %v366
    %v943 = vmul.f32 %v271, %v367
    %v944 = vmul.f32 %v272, %v368
    %v945 = vmul.f32 %v273, %v369
    %v946 = vmul.f32 %v274, %v370
    %v947 = vmul.f32 %v275, %v371
    %v948 = vmul.f32 %v276, %v372
    %v949 = vmul.f32 %v277, %v373
    %v950 = vmul.f32 %v278, %v374
    %v951 = vmul.f32 %v279, %v375
    %v952 = vmul.f32 %v280, %v376
    %v953 = vmul.f32 %v281, %v377
    %v954 = vmul.f32 %v282, %v378
    %v955 = vmul.f32 %v283, %v379
    %v956 = vmul.f32 %v284, %v380
    %v957 = vmul.f32 %v285, %v381
    %v958 = vmul.f32 %v286, %v382
    %v959 = vmul.f32 %v287, %v383
    %v960 = vmul.f32 %v288, %v384
    %v961 = vmul.f32 %v289, %v385
    %v962 = vmul.f32 %v290, %v386
    %v963 = vmul.f32 %v291, %v387
    %v964 = vmul.f32 %v292, %v388
    %v965 = vmul.f32 %v293, %v389
    %v966 = vmul.f32 %v294, %v390
    %v967 = vmul.f32 %v295, %v391
    %v968 = vmul.f32 %v296, %v392
    %v969 = vmul.f32 %v297, %v393
    %v970 = vmul.f32 %v298, %v394
    %v971 = vmul.f32 %v299, %v395
    %v972 = vmul.f32 %v300, %v396
    %v973 = vmul.f32 %v301, %v397
    %v974 = vmul.f32 %v302, %v398
    %v975 = vmul.f32 %v303, %v399
    %v976 = vmul.f32 %v304, %v400
    %v977 = vmul.f32 %v305, %v401
    %v978 = vmul.f32 %v306, %v402
    %v979 = vmul.f32 %v307, %v403
    %v980 = vmul.f32 %v308, %v404
    %v981 = vmul.f32 %v309, %v405
    %v982 = vmul.f32 %v310, %v406
    %v983 = vmul.f32 %v311, %v407
    %v984 = vmul.f32 %v312, %v408
    %v985 = vmul.f32 %v313, %v409
    %v986 = vmul.f32 %v314, %v410
    %v987 = vmul.f32 %v315, %v411
    %v988 = vmul.f32 %v316, %v412
    %v989 = vmul.f32 %v317, %v413
    %v990 = vmul.f32 %v318, %v414
    %v991 = vmul.f32 %v319, %v415
    %v992 = vmul.f32 %v320, %v416
    %v993 = vmul.f32 %v321, %v417
    %v994 = vmul.f32 %v322, %v418
    %v995 = vmul.f32 %v323, %v419
    %v996 = vmul.f32 %v324, %v420
    %v997 = vmul.f32 %v325, %v421
    %v998 = vmul.f32 %v326, %v422
    %v999 = vmul.f32 %v327, %v423
    %v1000 = vmul.f32 %v328, %v424
    %v1001 = vmul.f32 %v329, %v425
    %v1002 = vmul.f32 %v330, %v426
    %v1003 = vmul.f32 %v331, %v427
    %v1004 = vmul.f32 %v332, %v428
    %v1005 = vmul.f32 %v333, %v429
    %v1006 = vmul.f32 %v334, %v430
    %v1007 = vmul.f32 %v335, %v431
    %v1008 = vmul.f32 %v336, %v432
    %v1009 = vmul.f32 %v337, %v433
    %v1010 = vmul.f32 %v338, %v434
    %v1011 = vmul.f32 %v339, %v435
    %v1012 = vmul.f32 %v340, %v436
    %v1013 = vmul.f32 %v341, %v437
    %v1014 = vmul.f32 %v342, %v438
    %v1015 = vmul.f32 %v343, %v439
    %v1016 = vmul.f32 %v344, %v440
    %v1017 = vmul.f32 %v345, %v441
    %v1018 = vmul.f32 %v250, %v442
    %v1019 = vmul.f32 %v251, %v443
    %v1020 = vmul.f32 %v252, %v444
    %v1021 = vmul.f32 %v253, %v445
    %v1022 = vmul.f32 %v254, %v446
    %v1023 = vmul.f32 %v255, %v447
    %v1024 = vmul.f32 %v256, %v448
    %v1025 = vmul.f32 %v257, %v449
    %v1026 = vmul.f32 %v258, %v450
    %v1027 = vmul.f32 %v259, %v451
    %v1028 = vmul.f32 %v260, %v452
    %v1029 = vmul.f32 %v261, %v453
    %v1030 = vmul.f32 %v262, %v454
    %v1031 = vmul.f32 %v263, %v455
    %v1032 = vmul.f32 %v264, %v456
    %v1033 = vmul.f32 %v265, %v457
    %v1034 = vmul.f32 %v266, %v458
    %v1035 = vmul.f32 %v267, %v459
    %v1036 = vmul.f32 %v268, %v460
    %v1037 = vmul.f32 %v269, %v461
    %v1038 = vmul.f32 %v270, %v462
    %v1039 = vmul.f32 %v271, %v463
    %v1040 = vmul.f32 %v272, %v464
    %v1041 = vmul.f32 %v273, %v465
    %v1042 = vmul.f32 %v274, %v466
    %v1043 = vmul.f32 %v275, %v467
    %v1044 = vmul.f32 %v276, %v468
    %v1045 = vmul.f32 %v277, %v469
    %v1046 = vmul.f32 %v278, %v470
    %v1047 = vmul.f32 %v279, %v471
    %v1048 = vmul.f32 %v280, %v472
    %v1049 = vmul.f32 %v281, %v473
    %v1050 = vmul.f32 %v282, %v474
    %v1051 = vmul.f32 %v283, %v475
    %v1052 = vmul.f32 %v284, %v476
    %v1053 = vmul.f32 %v285, %v477
    %v1054 = vmul.f32 %v286, %v478
    %v1055 = vmul.f32 %v287, %v479
    %v1056 = vmul.f32 %v288, %v480
    %v1057 = vmul.f32 %v289, %v481
    %v1058 = vmul.f32 %v290, %v482
    %v1059 = vmul.f32 %v291, %v483
    %v1060 = vmul.f32 %v292, %v484
    %v1061 = vmul.f32 %v293, %v485
    %v1062 = vmul.f32 %v294, %v486
    %v1063 = vmul.f32 %v295, %v487
    %v1064 = vmul.f32 %v296, %v488
    %v1065 = vmul.f32 %v297, %v489
    %v1066 = vmul.f32 %v298, %v490
    %v1067 = vmul.f32 %v299, %v491
    %v1068 = vmul.f32 %v300, %v492
    %v1069 = vmul.f32 %v301, %v493
    %v1070 = vmul.f32 %v302, %v494
    %v1071 = vmul.f32 %v303, %v495
    %v1072 = vmul.f32 %v304, %v496
    %v1073 = vmul.f32 %v305, %v497
    %v1074 = vmul.f32 %v306, %v498
    %v1075 = vmul.f32 %v307, %v499
    %v1076 = vmul.f32 %v308, %v500
    %v1077 = vmul.f32 %v309, %v501
    %v1078 = vmul.f32 %v310, %v502
    %v1079 = vmul.f32 %v311, %v503
    %v1080 = vmul.f32 %v312, %v504
    %v1081 = vmul.f32 %v313, %v505
    %v1082 = vmul.f32 %v314, %v506
    %v1083 = vmul.f32 %v315, %v507
    %v1084 = vmul.f32 %v316, %v508
    %v1085 = vmul.f32 %v317, %v509
    %v1086 = vmul.f32 %v318, %v510
    %v1087 = vmul.f32 %v319, %v511
    %v1088 = vmul.f32 %v320, %v512
    %v1089 = vmul.f32 %v321, %v513
    %v1090 = vmul.f32 %v322, %v514
    %v1091 = vmul.f32 %v323, %v515
    %v1092 = vmul.f32 %v324, %v516
    %v1093 = vmul.f32 %v325, %v517
    %v1094 = vmul.f32 %v326, %v518
    %v1095 = vmul.f32 %v327, %v519
    %v1096 = vmul.f32 %v328, %v520
    %v1097 = vmul.f32 %v329, %v521
    %v1098 = vmul.f32 %v330, %v522
    %v1099 = vmul.f32 %v331, %v523
    %v1100 = vmul.f32 %v332, %v524
    %v1101 = vmul.f32 %v333, %v525
    %v1102 = vmul.f32 %v334, %v526
    %v1103 = vmul.f32 %v335, %v527
    %v1104 = vmul.f32 %v336, %v528
    %v1105 = vmul.f32 %v337, %v529
    %v1106 = vmul.f32 %v338, %v530
    %v1107 = vmul.f32 %v339, %v531
    %v1108 = vmul.f32 %v340, %v532
    %v1109 = vmul.f32 %v341, %v533
    %v1110 = vmul.f32 %v342, %v534
    %v1111 = vmul.f32 %v343, %v535
    %v1112 = vmul.f32 %v344, %v536
    %v1113 = vmul.f32 %v345, %v537
    %v1114 = vmul.f32 %v250, %v538
    %v1115 = vmul.f32 %v251, %v539
    %v1116 = vmul.f32 %v252, %v540
    %v1117 = vmul.f32 %v253, %v541
    %v1118 = vmul.f32 %v254, %v542
    %v1119 = vmul.f32 %v255, %v543
    %v1120 = vmul.f32 %v256, %v544
    %v1121 = vmul.f32 %v257, %v545
    %v1122 = vmul.f32 %v258, %v546
    %v1123 = vmul.f32 %v259, %v547
    %v1124 = vmul.f32 %v260, %v548
    %v1125 = vmul.f32 %v261, %v549
    %v1126 = vmul.f32 %v262, %v550
    %v1127 = vmul.f32 %v263, %v551
    %v1128 = vmul.f32 %v264, %v552
    %v1129 = vmul.f32 %v265, %v553
    %v1130 = vmul.f32 %v266, %v554
    %v1131 = vmul.f32 %v267, %v555
    %v1132 = vmul.f32 %v268, %v556
    %v1133 = vmul.f32 %v269, %v557
    %v1134 = vmul.f32 %v270, %v558
    %v1135 = vmul.f32 %v271, %v559
    %v1136 = vmul.f32 %v272, %v560
    %v1137 = vmul.f32 %v273, %v561
    %v1138 = vmul.f32 %v274, %v562
    %v1139 = vmul.f32 %v275, %v563
    %v1140 = vmul.f32 %v276, %v564
    %v1141 = vmul.f32 %v277, %v565
    %v1142 = vmul.f32 %v278, %v566
    %v1143 = vmul.f32 %v279, %v567
    %v1144 = vmul.f32 %v280, %v568
    %v1145 = vmul.f32 %v281, %v569
    %v1146 = vmul.f32 %v282, %v570
    %v1147 = vmul.f32 %v283, %v571
    %v1148 = vmul.f32 %v284, %v572
    %v1149 = vmul.f32 %v285, %v573
    %v1150 = vmul.f32 %v286, %v574
    %v1151 = vmul.f32 %v287, %v575
    %v1152 = vmul.f32 %v288, %v576
    %v1153 = vmul.f32 %v289, %v577
    %v1154 = vmul.f32 %v290, %v578
    %v1155 = vmul.f32 %v291, %v579
    %v1156 = vmul.f32 %v292, %v580
    %v1157 = vmul.f32 %v293, %v581
    %v1158 = vmul.f32 %v294, %v582
    %v1159 = vmul.f32 %v295, %v583
    %v1160 = vmul.f32 %v296, %v584
    %v1161 = vmul.f32 %v297, %v585
    %v1162 = vmul.f32 %v298, %v586
    %v1163 = vmul.f32 %v299, %v587
    %v1164 = vmul.f32 %v300, %v588
    %v1165 = vmul.f32 %v301, %v589
    %v1166 = vmul.f32 %v302, %v590
    %v1167 = vmul.f32 %v303, %v591
    %v1168 = vmul.f32 %v304, %v592
    %v1169 = vmul.f32 %v305, %v593
    %v1170 = vmul.f32 %v306, %v594
    %v1171 = vmul.f32 %v307, %v595
    %v1172 = vmul.f32 %v308, %v596
    %v1173 = vmul.f32 %v309, %v597
    %v1174 = vmul.f32 %v310, %v598
    %v1175 = vmul.f32 %v311, %v599
    %v1176 = vmul.f32 %v312, %v600
    %v1177 = vmul.f32 %v313, %v601
    %v1178 = vmul.f32 %v314, %v602
    %v1179 = vmul.f32 %v315, %v603
    %v1180 = vmul.f32 %v316, %v604
    %v1181 = vmul.f32 %v317, %v605
    %v1182 = vmul.f32 %v318, %v606
    %v1183 = vmul.f32 %v319, %v607
    %v1184 = vmul.f32 %v320, %v608
    %v1185 = vmul.f32 %v321, %v609
    %v1186 = vmul.f32 %v322, %v610
    %v1187 = vmul.f32 %v323, %v611
    %v1188 = vmul.f32 %v324, %v612
    %v1189 = vmul.f32 %v325, %v613
    %v1190 = vmul.f32 %v326, %v614
    %v1191 = vmul.f32 %v327, %v615
    %v1192 = vmul.f32 %v328, %v616
    %v1193 = vmul.f32 %v329, %v617
    %v1194 = vmul.f32 %v330, %v618
    %v1195 = vmul.f32 %v331, %v619
    %v1196 = vmul.f32 %v332, %v620
    %v1197 = vmul.f32 %v333, %v621
    %v1198 = vmul.f32 %v334, %v622
    %v1199 = vmul.f32 %v335, %v623
    %v1200 = vmul.f32 %v336, %v624
    %v1201 = vmul.f32 %v337, %v625
    %v1202 = vmul.f32 %v338, %v626
    %v1203 = vmul.f32 %v339, %v627
    %v1204 = vmul.f32 %v340, %v628
    %v1205 = vmul.f32 %v341, %v629
    %v1206 = vmul.f32 %v342, %v630
    %v1207 = vmul.f32 %v343, %v631
    %v1208 = vmul.f32 %v344, %v632
    %v1209 = vmul.f32 %v345, %v633
    %v1210 = vmul.f32 %v250, %v634
    %v1211 = vmul.f32 %v251, %v635
    %v1212 = vmul.f32 %v252, %v636
    %v1213 = vmul.f32 %v253, %v637
    %v1214 = vmul.f32 %v254, %v638
    %v1215 = vmul.f32 %v255, %v639
    %v1216 = vmul.f32 %v256, %v640
    %v1217 = vmul.f32 %v257, %v641
    %v1218 = vmul.f32 %v258, %v642
    %v1219 = vmul.f32 %v259, %v643
    %v1220 = vmul.f32 %v260, %v644
    %v1221 = vmul.f32 %v261, %v645
    %v1222 = vmul.f32 %v262, %v646
    %v1223 = vmul.f32 %v263, %v647
    %v1224 = vmul.f32 %v264, %v648
    %v1225 = vmul.f32 %v265, %v649
    %v1226 = vmul.f32 %v266, %v650
    %v1227 = vmul.f32 %v267, %v651
    %v1228 = vmul.f32 %v268, %v652
    %v1229 = vmul.f32 %v269, %v653
    %v1230 = vmul.f32 %v270, %v654
    %v1231 = vmul.f32 %v271, %v655
    %v1232 = vmul.f32 %v272, %v656
    %v1233 = vmul.f32 %v273, %v657
    %v1234 = vmul.f32 %v274, %v658
    %v1235 = vmul.f32 %v275, %v659
    %v1236 = vmul.f32 %v276, %v660
    %v1237 = vmul.f32 %v277, %v661
    %v1238 = vmul.f32 %v278, %v662
    %v1239 = vmul.f32 %v279, %v663
    %v1240 = vmul.f32 %v280, %v664
    %v1241 = vmul.f32 %v281, %v665
    %v1242 = vmul.f32 %v282, %v666
    %v1243 = vmul.f32 %v283, %v667
    %v1244 = vmul.f32 %v284, %v668
    %v1245 = vmul.f32 %v285, %v669
    %v1246 = vmul.f32 %v286, %v670
    %v1247 = vmul.f32 %v287, %v671
    %v1248 = vmul.f32 %v288, %v672
    %v1249 = vmul.f32 %v289, %v673
    %v1250 = vmul.f32 %v290, %v674
    %v1251 = vmul.f32 %v291, %v675
    %v1252 = vmul.f32 %v292, %v676
    %v1253 = vmul.f32 %v293, %v677
    %v1254 = vmul.f32 %v294, %v678
    %v1255 = vmul.f32 %v295, %v679
    %v1256 = vmul.f32 %v296, %v680
    %v1257 = vmul.f32 %v297, %v681
    %v1258 = vmul.f32 %v298, %v682
    %v1259 = vmul.f32 %v299, %v683
    %v1260 = vmul.f32 %v300, %v684
    %v1261 = vmul.f32 %v301, %v685
    %v1262 = vmul.f32 %v302, %v686
    %v1263 = vmul.f32 %v303, %v687
    %v1264 = vmul.f32 %v304, %v688
    %v1265 = vmul.f32 %v305, %v689
    %v1266 = vmul.f32 %v306, %v690
    %v1267 = vmul.f32 %v307, %v691
    %v1268 = vmul.f32 %v308, %v692
    %v1269 = vmul.f32 %v309, %v693
    %v1270 = vmul.f32 %v310, %v694
    %v1271 = vmul.f32 %v311, %v695
    %v1272 = vmul.f32 %v312, %v696
    %v1273 = vmul.f32 %v313, %v697
    %v1274 = vmul.f32 %v314, %v698
    %v1275 = vmul.f32 %v315, %v699
    %v1276 = vmul.f32 %v316, %v700
    %v1277 = vmul.f32 %v317, %v701
    %v1278 = vmul.f32 %v318, %v702
    %v1279 = vmul.f32 %v319, %v703
    %v1280 = vmul.f32 %v320, %v704
    %v1281 = vmul.f32 %v321, %v705
    %v1282 = vmul.f32 %v322, %v706
    %v1283 = vmul.f32 %v323, %v707
    %v1284 = vmul.f32 %v324, %v708
    %v1285 = vmul.f32 %v325, %v709
    %v1286 = vmul.f32 %v326, %v710
    %v1287 = vmul.f32 %v327, %v711
    %v1288 = vmul.f32 %v328, %v712
    %v1289 = vmul.f32 %v329, %v713
    %v1290 = vmul.f32 %v330, %v714
    %v1291 = vmul.f32 %v331, %v715
    %v1292 = vmul.f32 %v332, %v716
    %v1293 = vmul.f32 %v333, %v717
    %v1294 = vmul.f32 %v334, %v718
    %v1295 = vmul.f32 %v335, %v719
    %v1296 = vmul.f32 %v336, %v720
    %v1297 = vmul.f32 %v337, %v721
    %v1298 = vmul.f32 %v338, %v722
    %v1299 = vmul.f32 %v339, %v723
    %v1300 = vmul.f32 %v340, %v724
    %v1301 = vmul.f32 %v341, %v725
    %v1302 = vmul.f32 %v342, %v726
    %v1303 = vmul.f32 %v343, %v727
    %v1304 = vmul.f32 %v344, %v728
    %v1305 = vmul.f32 %v345, %v729
    %v1306 = vmul.f32 %v250, %v730
    %v1307 = vmul.f32 %v251, %v731
    %v1308 = vmul.f32 %v252, %v732
    %v1309 = vmul.f32 %v253, %v733
    %v1310 = vmul.f32 %v254, %v734
    %v1311 = vmul.f32 %v255, %v735
    %v1312 = vmul.f32 %v256, %v736
    %v1313 = vmul.f32 %v257, %v737
    %v1314 = vmul.f32 %v258, %v738
    %v1315 = vmul.f32 %v259, %v739
    %v1316 = vmul.f32 %v260, %v740
    %v1317 = vmul.f32 %v261, %v741
    %v1318 = vmul.f32 %v262, %v742
    %v1319 = vmul.f32 %v263, %v743
    %v1320 = vmul.f32 %v264, %v744
    %v1321 = vmul.f32 %v265, %v745
    %v1322 = vmul.f32 %v266, %v746
    %v1323 = vmul.f32 %v267, %v747
    %v1324 = vmul.f32 %v268, %v748
    %v1325 = vmul.f32 %v269, %v749
    %v1326 = vmul.f32 %v270, %v750
    %v1327 = vmul.f32 %v271, %v751
    %v1328 = vmul.f32 %v272, %v752
    %v1329 = vmul.f32 %v273, %v753
    %v1330 = vmul.f32 %v274, %v754
    %v1331 = vmul.f32 %v275, %v755
    %v1332 = vmul.f32 %v276, %v756
    %v1333 = vmul.f32 %v277, %v757
    %v1334 = vmul.f32 %v278, %v758
    %v1335 = vmul.f32 %v279, %v759
    %v1336 = vmul.f32 %v280, %v760
    %v1337 = vmul.f32 %v281, %v761
    %v1338 = vmul.f32 %v282, %v762
    %v1339 = vmul.f32 %v283, %v763
    %v1340 = vmul.f32 %v284, %v764
    %v1341 = vmul.f32 %v285, %v765
    %v1342 = vmul.f32 %v286, %v766
    %v1343 = vmul.f32 %v287, %v767
    %v1344 = vmul.f32 %v288, %v768
    %v1345 = vmul.f32 %v289, %v769
    %v1346 = vmul.f32 %v290, %v770
    %v1347 = vmul.f32 %v291, %v771
    %v1348 = vmul.f32 %v292, %v772
    %v1349 = vmul.f32 %v293, %v773
    %v1350 = vmul.f32 %v294, %v774
    %v1351 = vmul.f32 %v295, %v775
    %v1352 = vmul.f32 %v296, %v776
    %v1353 = vmul.f32 %v297, %v777
    %v1354 = vmul.f32 %v298, %v778
    %v1355 = vmul.f32 %v299, %v779
    %v1356 = vmul.f32 %v300, %v780
    %v1357 = vmul.f32 %v301, %v781
    %v1358 = vmul.f32 %v302, %v782
    %v1359 = vmul.f32 %v303, %v783
    %v1360 = vmul.f32 %v304, %v784
    %v1361 = vmul.f32 %v305, %v785
    %v1362 = vmul.f32 %v306, %v786
    %v1363 = vmul.f32 %v307, %v787
    %v1364 = vmul.f32 %v308, %v788
    %v1365 = vmul.f32 %v309, %v789
    %v1366 = vmul.f32 %v310, %v790
    %v1367 = vmul.f32 %v311, %v791
    %v1368 = vmul.f32 %v312, %v792
    %v1369 = vmul.f32 %v313, %v793
    %v1370 = vmul.f32 %v314, %v794
    %v1371 = vmul.f32 %v315, %v795
    %v1372 = vmul.f32 %v316, %v796
    %v1373 = vmul.f32 %v317, %v797
    %v1374 = vmul.f32 %v318, %v798
    %v1375 = vmul.f32 %v319, %v799
    %v1376 = vmul.f32 %v320, %v800
    %v1377 = vmul.f32 %v321, %v801
    %v1378 = vmul.f32 %v322, %v802
    %v1379 = vmul.f32 %v323, %v803
    %v1380 = vmul.f32 %v324, %v804
    %v1381 = vmul.f32 %v325, %v805
    %v1382 = vmul.f32 %v326, %v806
    %v1383 = vmul.f32 %v327, %v807
    %v1384 = vmul.f32 %v328, %v808
    %v1385 = vmul.f32 %v329, %v809
    %v1386 = vmul.f32 %v330, %v810
    %v1387 = vmul.f32 %v331, %v811
    %v1388 = vmul.f32 %v332, %v812
    %v1389 = vmul.f32 %v333, %v813
    %v1390 = vmul.f32 %v334, %v814
    %v1391 = vmul.f32 %v335, %v815
    %v1392 = vmul.f32 %v336, %v816
    %v1393 = vmul.f32 %v337, %v817
    %v1394 = vmul.f32 %v338, %v818
    %v1395 = vmul.f32 %v339, %v819
    %v1396 = vmul.f32 %v340, %v820
    %v1397 = vmul.f32 %v341, %v821
    %v1398 = vmul.f32 %v342, %v822
    %v1399 = vmul.f32 %v343, %v823
    %v1400 = vmul.f32 %v344, %v824
    %v1401 = vmul.f32 %v345, %v825
    %v1402 = vmul.f32 %v250, %v826
    %v1403 = vmul.f32 %v251, %v827
    %v1404 = vmul.f32 %v252, %v828
    %v1405 = vmul.f32 %v253, %v829
    %v1406 = vmul.f32 %v254, %v830
    %v1407 = vmul.f32 %v255, %v831
    %v1408 = vmul.f32 %v256, %v832
    %v1409 = vmul.f32 %v257, %v833
    %v1410 = vmul.f32 %v258, %v834
    %v1411 = vmul.f32 %v259, %v835
    %v1412 = vmul.f32 %v260, %v836
    %v1413 = vmul.f32 %v261, %v837
    %v1414 = vmul.f32 %v262, %v838
    %v1415 = vmul.f32 %v263, %v839
    %v1416 = vmul.f32 %v264, %v840
    %v1417 = vmul.f32 %v265, %v841
    %v1418 = vmul.f32 %v266, %v842
    %v1419 = vmul.f32 %v267, %v843
    %v1420 = vmul.f32 %v268, %v844
    %v1421 = vmul.f32 %v269, %v845
    %v1422 = vmul.f32 %v270, %v846
    %v1423 = vmul.f32 %v271, %v847
    %v1424 = vmul.f32 %v272, %v848
    %v1425 = vmul.f32 %v273, %v849
    %v1426 = vmul.f32 %v274, %v850
    %v1427 = vmul.f32 %v275, %v851
    %v1428 = vmul.f32 %v276, %v852
    %v1429 = vmul.f32 %v277, %v853
    %v1430 = vmul.f32 %v278, %v854
    %v1431 = vmul.f32 %v279, %v855
    %v1432 = vmul.f32 %v280, %v856
    %v1433 = vmul.f32 %v281, %v857
    %v1434 = vmul.f32 %v282, %v858
    %v1435 = vmul.f32 %v283, %v859
    %v1436 = vmul.f32 %v284, %v860
    %v1437 = vmul.f32 %v285, %v861
    %v1438 = vmul.f32 %v286, %v862
    %v1439 = vmul.f32 %v287, %v863
    %v1440 = vmul.f32 %v288, %v864
    %v1441 = vmul.f32 %v289, %v865
    %v1442 = vmul.f32 %v290, %v866
    %v1443 = vmul.f32 %v291, %v867
    %v1444 = vmul.f32 %v292, %v868
    %v1445 = vmul.f32 %v293, %v869
    %v1446 = vmul.f32 %v294, %v870
    %v1447 = vmul.f32 %v295, %v871
    %v1448 = vmul.f32 %v296, %v872
    %v1449 = vmul.f32 %v297, %v873
    %v1450 = vmul.f32 %v298, %v874
    %v1451 = vmul.f32 %v299, %v875
    %v1452 = vmul.f32 %v300, %v876
    %v1453 = vmul.f32 %v301, %v877
    %v1454 = vmul.f32 %v302, %v878
    %v1455 = vmul.f32 %v303, %v879
    %v1456 = vmul.f32 %v304, %v880
    %v1457 = vmul.f32 %v305, %v881
    %v1458 = vmul.f32 %v306, %v882
    %v1459 = vmul.f32 %v307, %v883
    %v1460 = vmul.f32 %v308, %v884
    %v1461 = vmul.f32 %v309, %v885
    %v1462 = vmul.f32 %v310, %v886
    %v1463 = vmul.f32 %v311, %v887
    %v1464 = vmul.f32 %v312, %v888
    %v1465 = vmul.f32 %v313, %v889
    %v1466 = vmul.f32 %v314, %v890
    %v1467 = vmul.f32 %v315, %v891
    %v1468 = vmul.f32 %v316, %v892
    %v1469 = vmul.f32 %v317, %v893
    %v1470 = vmul.f32 %v318, %v894
    %v1471 = vmul.f32 %v319, %v895
    %v1472 = vmul.f32 %v320, %v896
    %v1473 = vmul.f32 %v321, %v897
    %v1474 = vmul.f32 %v322, %v898
    %v1475 = vmul.f32 %v323, %v899
    %v1476 = vmul.f32 %v324, %v900
    %v1477 = vmul.f32 %v325, %v901
    %v1478 = vmul.f32 %v326, %v902
    %v1479 = vmul.f32 %v327, %v903
    %v1480 = vmul.f32 %v328, %v904
    %v1481 = vmul.f32 %v329, %v905
    %v1482 = vmul.f32 %v330, %v906
    %v1483 = vmul.f32 %v331, %v907
    %v1484 = vmul.f32 %v332, %v908
    %v1485 = vmul.f32 %v333, %v909
    %v1486 = vmul.f32 %v334, %v910
    %v1487 = vmul.f32 %v335, %v911
    %v1488 = vmul.f32 %v336, %v912
    %v1489 = vmul.f32 %v337, %v913
    %v1490 = vmul.f32 %v338, %v914
    %v1491 = vmul.f32 %v339, %v915
    %v1492 = vmul.f32 %v340, %v916
    %v1493 = vmul.f32 %v341, %v917
    %v1494 = vmul.f32 %v342, %v918
    %v1495 = vmul.f32 %v343, %v919
    %v1496 = vmul.f32 %v344, %v920
    %v1497 = vmul.f32 %v345, %v921
    %v1498 = vadd.f32 %v154, %v922
    %v1499 = vadd.f32 %v155, %v923
    %v1500 = vadd.f32 %v156, %v924
    %v1501 = vadd.f32 %v157, %v925
    %v1502 = vadd.f32 %v158, %v926
    %v1503 = vadd.f32 %v159, %v927
    %v1504 = vadd.f32 %v160, %v928
    %v1505 = vadd.f32 %v161, %v929
    %v1506 = vadd.f32 %v162, %v930
    %v1507 = vadd.f32 %v163, %v931
    %v1508 = vadd.f32 %v164, %v932
    %v1509 = vadd.f32 %v165, %v933
    %v1510 = vadd.f32 %v166, %v934
    %v1511 = vadd.f32 %v167, %v935
    %v1512 = vadd.f32 %v168, %v936
    %v1513 = vadd.f32 %v169, %v937
    %v1514 = vadd.f32 %v170, %v938
    %v1515 = vadd.f32 %v171, %v939
    %v1516 = vadd.f32 %v172, %v940
    %v1517 = vadd.f32 %v173, %v941
    %v1518 = vadd.f32 %v174, %v942
    %v1519 = vadd.f32 %v175, %v943
    %v1520 = vadd.f32 %v176, %v944
    %v1521 = vadd.f32 %v177, %v945
    %v1522 = vadd.f32 %v178, %v946
    %v1523 = vadd.f32 %v179, %v947
    %v1524 = vadd.f32 %v180, %v948
    %v1525 = vadd.f32 %v181, %v949
    %v1526 = vadd.f32 %v182, %v950
    %v1527 = vadd.f32 %v183, %v951
    %v1528 = vadd.f32 %v184, %v952
    %v1529 = vadd.f32 %v185, %v953
    %v1530 = vadd.f32 %v186, %v954
    %v1531 = vadd.f32 %v187, %v955
    %v1532 = vadd.f32 %v188, %v956
    %v1533 = vadd.f32 %v189, %v957
    %v1534 = vadd.f32 %v190, %v958
    %v1535 = vadd.f32 %v191, %v959
    %v1536 = vadd.f32 %v192, %v960
    %v1537 = vadd.f32 %v193, %v961
    %v1538 = vadd.f32 %v194, %v962
    %v1539 = vadd.f32 %v195, %v963
    %v1540 = vadd.f32 %v196, %v964
    %v1541 = vadd.f32 %v197, %v965
    %v1542 = vadd.f32 %v198, %v966
    %v1543 = vadd.f32 %v199, %v967
    %v1544 = vadd.f32 %v200, %v968
    %v1545 = vadd.f32 %v201, %v969
    %v1546 = vadd.f32 %v202, %v970
    %v1547 = vadd.f32 %v203, %v971
    %v1548 = vadd.f32 %v204, %v972
    %v1549 = vadd.f32 %v205, %v973
    %v1550 = vadd.f32 %v206, %v974
    %v1551 = vadd.f32 %v207, %v975
    %v1552 = vadd.f32 %v208, %v976
    %v1553 = vadd.f32 %v209, %v977
    %v1554 = vadd.f32 %v210, %v978
    %v1555 = vadd.f32 %v211, %v979
    %v1556 = vadd.f32 %v212, %v980
    %v1557 = vadd.f32 %v213, %v981
    %v1558 = vadd.f32 %v214, %v982
    %v1559 = vadd.f32 %v215, %v983
    %v1560 = vadd.f32 %v216, %v984
    %v1561 = vadd.f32 %v217, %v985
    %v1562 = vadd.f32 %v218, %v986
    %v1563 = vadd.f32 %v219, %v987
    %v1564 = vadd.f32 %v220, %v988
    %v1565 = vadd.f32 %v221, %v989
    %v1566 = vadd.f32 %v222, %v990
    %v1567 = vadd.f32 %v223, %v991
    %v1568 = vadd.f32 %v224, %v992
    %v1569 = vadd.f32 %v225, %v993
    %v1570 = vadd.f32 %v226, %v994
    %v1571 = vadd.f32 %v227, %v995
    %v1572 = vadd.f32 %v228, %v996
    %v1573 = vadd.f32 %v229, %v997
    %v1574 = vadd.f32 %v230, %v998
    %v1575 = vadd.f32 %v231, %v999
    %v1576 = vadd.f32 %v232, %v1000
    %v1577 = vadd.f32 %v233, %v1001
    %v1578 = vadd.f32 %v234, %v1002
    %v1579 = vadd.f32 %v235, %v1003
    %v1580 = vadd.f32 %v236, %v1004
    %v1581 = vadd.f32 %v237, %v1005
    %v1582 = vadd.f32 %v238, %v1006
    %v1583 = vadd.f32 %v239, %v1007
    %v1584 = vadd.f32 %v240, %v1008
    %v1585 = vadd.f32 %v241, %v1009
    %v1586 = vadd.f32 %v242, %v1010
    %v1587 = vadd.f32 %v243, %v1011
    %v1588 = vadd.f32 %v244, %v1012
    %v1589 = vadd.f32 %v245, %v1013
    %v1590 = vadd.f32 %v246, %v1014
    %v1591 = vadd.f32 %v247, %v1015
    %v1592 = vadd.f32 %v248, %v1016
    %v1593 = vadd.f32 %v249, %v1017
    %v1594 = vadd.f32 %v154, %v1018
    %v1595 = vadd.f32 %v155, %v1019
    %v1596 = vadd.f32 %v156, %v1020
    %v1597 = vadd.f32 %v157, %v1021
    %v1598 = vadd.f32 %v158, %v1022
    %v1599 = vadd.f32 %v159, %v1023
    %v1600 = vadd.f32 %v160, %v1024
    %v1601 = vadd.f32 %v161, %v1025
    %v1602 = vadd.f32 %v162, %v1026
    %v1603 = vadd.f32 %v163, %v1027
    %v1604 = vadd.f32 %v164, %v1028
    %v1605 = vadd.f32 %v165, %v1029
    %v1606 = vadd.f32 %v166, %v1030
    %v1607 = vadd.f32 %v167, %v1031
    %v1608 = vadd.f32 %v168, %v1032
    %v1609 = vadd.f32 %v169, %v1033
    %v1610 = vadd.f32 %v170, %v1034
    %v1611 = vadd.f32 %v171, %v1035
    %v1612 = vadd.f32 %v172, %v1036
    %v1613 = vadd.f32 %v173, %v1037
    %v1614 = vadd.f32 %v174, %v1038
    %v1615 = vadd.f32 %v175, %v1039
    %v1616 = vadd.f32 %v176, %v1040
    %v1617 = vadd.f32 %v177, %v1041
    %v1618 = vadd.f32 %v178, %v1042
    %v1619 = vadd.f32 %v179, %v1043
    %v1620 = vadd.f32 %v180, %v1044
    %v1621 = vadd.f32 %v181, %v1045
    %v1622 = vadd.f32 %v182, %v1046
    %v1623 = vadd.f32 %v183, %v1047
    %v1624 = vadd.f32 %v184, %v1048
    %v1625 = vadd.f32 %v185, %v1049
    %v1626 = vadd.f32 %v186, %v1050
    %v1627 = vadd.f32 %v187, %v1051
    %v1628 = vadd.f32 %v188, %v1052
    %v1629 = vadd.f32 %v189, %v1053
    %v1630 = vadd.f32 %v190, %v1054
    %v1631 = vadd.f32 %v191, %v1055
    %v1632 = vadd.f32 %v192, %v1056
    %v1633 = vadd.f32 %v193, %v1057
    %v1634 = vadd.f32 %v194, %v1058
    %v1635 = vadd.f32 %v195, %v1059
    %v1636 = vadd.f32 %v196, %v1060
    %v1637 = vadd.f32 %v197, %v1061
    %v1638 = vadd.f32 %v198, %v1062
    %v1639 = vadd.f32 %v199, %v1063
    %v1640 = vadd.f32 %v200, %v1064
    %v1641 = vadd.f32 %v201, %v1065
    %v1642 = vadd.f32 %v202, %v1066
    %v1643 = vadd.f32 %v203, %v1067
    %v1644 = vadd.f32 %v204, %v1068
    %v1645 = vadd.f32 %v205, %v1069
    %v1646 = vadd.f32 %v206, %v1070
    %v1647 = vadd.f32 %v207, %v1071
    %v1648 = vadd.f32 %v208, %v1072
    %v1649 = vadd.f32 %v209, %v1073
    %v1650 = vadd.f32 %v210, %v1074
    %v1651 = vadd.f32 %v211, %v1075
    %v1652 = vadd.f32 %v212, %v1076
    %v1653 = vadd.f32 %v213, %v1077
    %v1654 = vadd.f32 %v214, %v1078
    %v1655 = vadd.f32 %v215, %v1079
    %v1656 = vadd.f32 %v216, %v1080
    %v1657 = vadd.f32 %v217, %v1081
    %v1658 = vadd.f32 %v218, %v1082
    %v1659 = vadd.f32 %v219, %v1083
    %v1660 = vadd.f32 %v220, %v1084
    %v1661 = vadd.f32 %v221, %v1085
    %v1662 = vadd.f32 %v222, %v1086
    %v1663 = vadd.f32 %v223, %v1087
    %v1664 = vadd.f32 %v224, %v1088
    %v1665 = vadd.f32 %v225, %v1089
    %v1666 = vadd.f32 %v226, %v1090
    %v1667 = vadd.f32 %v227, %v1091
    %v1668 = vadd.f32 %v228, %v1092
    %v1669 = vadd.f32 %v229, %v1093
    %v1670 = vadd.f32 %v230, %v1094
    %v1671 = vadd.f32 %v231, %v1095
    %v1672 = vadd.f32 %v232, %v1096
    %v1673 = vadd.f32 %v233, %v1097
    %v1674 = vadd.f32 %v234, %v1098
    %v1675 = vadd.f32 %v235, %v1099
    %v1676 = vadd.f32 %v236, %v1100
    %v1677 = vadd.f32 %v237, %v1101
    %v1678 = vadd.f32 %v238, %v1102
    %v1679 = vadd.f32 %v239, %v1103
    %v1680 = vadd.f32 %v240, %v1104
    %v1681 = vadd.f32 %v241, %v1105
    %v1682 = vadd.f32 %v242, %v1106
    %v1683 = vadd.f32 %v243, %v1107
    %v1684 = vadd.f32 %v244, %v1108
    %v1685 = vadd.f32 %v245, %v1109
    %v1686 = vadd.f32 %v246, %v1110
    %v1687 = vadd.f32 %v247, %v1111
    %v1688 = vadd.f32 %v248, %v1112
    %v1689 = vadd.f32 %v249, %v1113
    %v1690 = vadd.f32 %v154, %v1114
    %v1691 = vadd.f32 %v155, %v1115
    %v1692 = vadd.f32 %v156, %v1116
    %v1693 = vadd.f32 %v157, %v1117
    %v1694 = vadd.f32 %v158, %v1118
    %v1695 = vadd.f32 %v159, %v1119
    %v1696 = vadd.f32 %v160, %v1120
    %v1697 = vadd.f32 %v161, %v1121
    %v1698 = vadd.f32 %v162, %v1122
    %v1699 = vadd.f32 %v163, %v1123
    %v1700 = vadd.f32 %v164, %v1124
    %v1701 = vadd.f32 %v165, %v1125
    %v1702 = vadd.f32 %v166, %v1126
    %v1703 = vadd.f32 %v167, %v1127
    %v1704 = vadd.f32 %v168, %v1128
    %v1705 = vadd.f32 %v169, %v1129
    %v1706 = vadd.f32 %v170, %v1130
    %v1707 = vadd.f32 %v171, %v1131
    %v1708 = vadd.f32 %v172, %v1132
    %v1709 = vadd.f32 %v173, %v1133
    %v1710 = vadd.f32 %v174, %v1134
    %v1711 = vadd.f32 %v175, %v1135
    %v1712 = vadd.f32 %v176, %v1136
    %v1713 = vadd.f32 %v177, %v1137
    %v1714 = vadd.f32 %v178, %v1138
    %v1715 = vadd.f32 %v179, %v1139
    %v1716 = vadd.f32 %v180, %v1140
    %v1717 = vadd.f32 %v181, %v1141
    %v1718 = vadd.f32 %v182, %v1142
    %v1719 = vadd.f32 %v183, %v1143
    %v1720 = vadd.f32 %v184, %v1144
    %v1721 = vadd.f32 %v185, %v1145
    %v1722 = vadd.f32 %v186, %v1146
    %v1723 = vadd.f32 %v187, %v1147
    %v1724 = vadd.f32 %v188, %v1148
    %v1725 = vadd.f32 %v189, %v1149
    %v1726 = vadd.f32 %v190, %v1150
    %v1727 = vadd.f32 %v191, %v1151
    %v1728 = vadd.f32 %v192, %v1152
    %v1729 = vadd.f32 %v193, %v1153
    %v1730 = vadd.f32 %v194, %v1154
    %v1731 = vadd.f32 %v195, %v1155
    %v1732 = vadd.f32 %v196, %v1156
    %v1733 = vadd.f32 %v197, %v1157
    %v1734 = vadd.f32 %v198, %v1158
    %v1735 = vadd.f32 %v199, %v1159
    %v1736 = vadd.f32 %v200, %v1160
    %v1737 = vadd.f32 %v201, %v1161
    %v1738 = vadd.f32 %v202, %v1162
    %v1739 = vadd.f32 %v203, %v1163
    %v1740 = vadd.f32 %v204, %v1164
    %v1741 = vadd.f32 %v205, %v1165
    %v1742 = vadd.f32 %v206, %v1166
    %v1743 = vadd.f32 %v207, %v1167
    %v1744 = vadd.f32 %v208, %v1168
    %v1745 = vadd.f32 %v209, %v1169
    %v1746 = vadd.f32 %v210, %v1170
    %v1747 = vadd.f32 %v211, %v1171
    %v1748 = vadd.f32 %v212, %v1172
    %v1749 = vadd.f32 %v213, %v1173
    %v1750 = vadd.f32 %v214, %v1174
    %v1751 = vadd.f32 %v215, %v1175
    %v1752 = vadd.f32 %v216, %v1176
    %v1753 = vadd.f32 %v217, %v1177
    %v1754 = vadd.f32 %v218, %v1178
    %v1755 = vadd.f32 %v219, %v1179
    %v1756 = vadd.f32 %v220, %v1180
    %v1757 = vadd.f32 %v221, %v1181
    %v1758 = vadd.f32 %v222, %v1182
    %v1759 = vadd.f32 %v223, %v1183
    %v1760 = vadd.f32 %v224, %v1184
    %v1761 = vadd.f32 %v225, %v1185
    %v1762 = vadd.f32 %v226, %v1186
    %v1763 = vadd.f32 %v227, %v1187
    %v1764 = vadd.f32 %v228, %v1188
    %v1765 = vadd.f32 %v229, %v1189
    %v1766 = vadd.f32 %v230, %v1190
    %v1767 = vadd.f32 %v231, %v1191
    %v1768 = vadd.f32 %v232, %v1192
    %v1769 = vadd.f32 %v233, %v1193
    %v1770 = vadd.f32 %v234, %v1194
    %v1771 = vadd.f32 %v235, %v1195
    %v1772 = vadd.f32 %v236, %v1196
    %v1773 = vadd.f32 %v237, %v1197
    %v1774 = vadd.f32 %v238, %v1198
    %v1775 = vadd.f32 %v239, %v1199
    %v1776 = vadd.f32 %v240, %v1200
    %v1777 = vadd.f32 %v241, %v1201
    %v1778 = vadd.f32 %v242, %v1202
    %v1779 = vadd.f32 %v243, %v1203
    %v1780 = vadd.f32 %v244, %v1204
    %v1781 = vadd.f32 %v245, %v1205
    %v1782 = vadd.f32 %v246, %v1206
    %v1783 = vadd.f32 %v247, %v1207
    %v1784 = vadd.f32 %v248, %v1208
    %v1785 = vadd.f32 %v249, %v1209
    %v1786 = vadd.f32 %v154, %v1210
    %v1787 = vadd.f32 %v155, %v1211
    %v1788 = vadd.f32 %v156, %v1212
    %v1789 = vadd.f32 %v157, %v1213
    %v1790 = vadd.f32 %v158, %v1214
    %v1791 = vadd.f32 %v159, %v1215
    %v1792 = vadd.f32 %v160, %v1216
    %v1793 = vadd.f32 %v161, %v1217
    %v1794 = vadd.f32 %v162, %v1218
    %v1795 = vadd.f32 %v163, %v1219
    %v1796 = vadd.f32 %v164, %v1220
    %v1797 = vadd.f32 %v165, %v1221
    %v1798 = vadd.f32 %v166, %v1222
    %v1799 = vadd.f32 %v167, %v1223
    %v1800 = vadd.f32 %v168, %v1224
    %v1801 = vadd.f32 %v169, %v1225
    %v1802 = vadd.f32 %v170, %v1226
    %v1803 = vadd.f32 %v171, %v1227
    %v1804 = vadd.f32 %v172, %v1228
    %v1805 = vadd.f32 %v173, %v1229
    %v1806 = vadd.f32 %v174, %v1230
    %v1807 = vadd.f32 %v175, %v1231
    %v1808 = vadd.f32 %v176, %v1232
    %v1809 = vadd.f32 %v177, %v1233
    %v1810 = vadd.f32 %v178, %v1234
    %v1811 = vadd.f32 %v179, %v1235
    %v1812 = vadd.f32 %v180, %v1236
    %v1813 = vadd.f32 %v181, %v1237
    %v1814 = vadd.f32 %v182, %v1238
    %v1815 = vadd.f32 %v183, %v1239
    %v1816 = vadd.f32 %v184, %v1240
    %v1817 = vadd.f32 %v185, %v1241
    %v1818 = vadd.f32 %v186, %v1242
    %v1819 = vadd.f32 %v187, %v1243
    %v1820 = vadd.f32 %v188, %v1244
    %v1821 = vadd.f32 %v189, %v1245
    %v1822 = vadd.f32 %v190, %v1246
    %v1823 = vadd.f32 %v191, %v1247
    %v1824 = vadd.f32 %v192, %v1248
    %v1825 = vadd.f32 %v193, %v1249
    %v1826 = vadd.f32 %v194, %v1250
    %v1827 = vadd.f32 %v195, %v1251
    %v1828 = vadd.f32 %v196, %v1252
    %v1829 = vadd.f32 %v197, %v1253
    %v1830 = vadd.f32 %v198, %v1254
    %v1831 = vadd.f32 %v199, %v1255
    %v1832 = vadd.f32 %v200, %v1256
    %v1833 = vadd.f32 %v201, %v1257
    %v1834 = vadd.f32 %v202, %v1258
    %v1835 = vadd.f32 %v203, %v1259
    %v1836 = vadd.f32 %v204, %v1260
    %v1837 = vadd.f32 %v205, %v1261
    %v1838 = vadd.f32 %v206, %v1262
    %v1839 = vadd.f32 %v207, %v1263
    %v1840 = vadd.f32 %v208, %v1264
    %v1841 = vadd.f32 %v209, %v1265
    %v1842 = vadd.f32 %v210, %v1266
    %v1843 = vadd.f32 %v211, %v1267
    %v1844 = vadd.f32 %v212, %v1268
    %v1845 = vadd.f32 %v213, %v1269
    %v1846 = vadd.f32 %v214, %v1270
    %v1847 = vadd.f32 %v215, %v1271
    %v1848 = vadd.f32 %v216, %v1272
    %v1849 = vadd.f32 %v217, %v1273
    %v1850 = vadd.f32 %v218, %v1274
    %v1851 = vadd.f32 %v219, %v1275
    %v1852 = vadd.f32 %v220, %v1276
    %v1853 = vadd.f32 %v221, %v1277
    %v1854 = vadd.f32 %v222, %v1278
    %v1855 = vadd.f32 %v223, %v1279
    %v1856 = vadd.f32 %v224, %v1280
    %v1857 = vadd.f32 %v225, %v1281
    %v1858 = vadd.f32 %v226, %v1282
    %v1859 = vadd.f32 %v227, %v1283
    %v1860 = vadd.f32 %v228, %v1284
    %v1861 = vadd.f32 %v229, %v1285
    %v1862 = vadd.f32 %v230, %v1286
    %v1863 = vadd.f32 %v231, %v1287
    %v1864 = vadd.f32 %v232, %v1288
    %v1865 = vadd.f32 %v233, %v1289
    %v1866 = vadd.f32 %v234, %v1290
    %v1867 = vadd.f32 %v235, %v1291
    %v1868 = vadd.f32 %v236, %v1292
    %v1869 = vadd.f32 %v237, %v1293
    %v1870 = vadd.f32 %v238, %v1294
    %v1871 = vadd.f32 %v239, %v1295
    %v1872 = vadd.f32 %v240, %v1296
    %v1873 = vadd.f32 %v241, %v1297
    %v1874 = vadd.f32 %v242, %v1298
    %v1875 = vadd.f32 %v243, %v1299
    %v1876 = vadd.f32 %v244, %v1300
    %v1877 = vadd.f32 %v245, %v1301
    %v1878 = vadd.f32 %v246, %v1302
    %v1879 = vadd.f32 %v247, %v1303
    %v1880 = vadd.f32 %v248, %v1304
    %v1881 = vadd.f32 %v249, %v1305
    %v1882 = vadd.f32 %v154, %v1306
    %v1883 = vadd.f32 %v155, %v1307
    %v1884 = vadd.f32 %v156, %v1308
    %v1885 = vadd.f32 %v157, %v1309
    %v1886 = vadd.f32 %v158, %v1310
    %v1887 = vadd.f32 %v159, %v1311
    %v1888 = vadd.f32 %v160, %v1312
    %v1889 = vadd.f32 %v161, %v1313
    %v1890 = vadd.f32 %v162, %v1314
    %v1891 = vadd.f32 %v163, %v1315
    %v1892 = vadd.f32 %v164, %v1316
    %v1893 = vadd.f32 %v165, %v1317
    %v1894 = vadd.f32 %v166, %v1318
    %v1895 = vadd.f32 %v167, %v1319
    %v1896 = vadd.f32 %v168, %v1320
    %v1897 = vadd.f32 %v169, %v1321
    %v1898 = vadd.f32 %v170, %v1322
    %v1899 = vadd.f32 %v171, %v1323
    %v1900 = vadd.f32 %v172, %v1324
    %v1901 = vadd.f32 %v173, %v1325
    %v1902 = vadd.f32 %v174, %v1326
    %v1903 = vadd.f32 %v175, %v1327
    %v1904 = vadd.f32 %v176, %v1328
    %v1905 = vadd.f32 %v177, %v1329
    %v1906 = vadd.f32 %v178, %v1330
    %v1907 = vadd.f32 %v179, %v1331
    %v1908 = vadd.f32 %v180, %v1332
    %v1909 = vadd.f32 %v181, %v1333
    %v1910 = vadd.f32 %v182, %v1334
    %v1911 = vadd.f32 %v183, %v1335
    %v1912 = vadd.f32 %v184, %v1336
    %v1913 = vadd.f32 %v185, %v1337
    %v1914 = vadd.f32 %v186, %v1338
    %v1915 = vadd.f32 %v187, %v1339
    %v1916 = vadd.f32 %v188, %v1340
    %v1917 = vadd.f32 %v189, %v1341
    %v1918 = vadd.f32 %v190, %v1342
    %v1919 = vadd.f32 %v191, %v1343
    %v1920 = vadd.f32 %v192, %v1344
    %v1921 = vadd.f32 %v193, %v1345
    %v1922 = vadd.f32 %v194, %v1346
    %v1923 = vadd.f32 %v195, %v1347
    %v1924 = vadd.f32 %v196, %v1348
    %v1925 = vadd.f32 %v197, %v1349
    %v1926 = vadd.f32 %v198, %v1350
    %v1927 = vadd.f32 %v199, %v1351
    %v1928 = vadd.f32 %v200, %v1352
    %v1929 = vadd.f32 %v201, %v1353
    %v1930 = vadd.f32 %v202, %v1354
    %v1931 = vadd.f32 %v203, %v1355
    %v1932 = vadd.f32 %v204, %v1356
    %v1933 = vadd.f32 %v205, %v1357
    %v1934 = vadd.f32 %v206, %v1358
    %v1935 = vadd.f32 %v207, %v1359
    %v1936 = vadd.f32 %v208, %v1360
    %v1937 = vadd.f32 %v209, %v1361
    %v1938 = vadd.f32 %v210, %v1362
    %v1939 = vadd.f32 %v211, %v1363
    %v1940 = vadd.f32 %v212, %v1364
    %v1941 = vadd.f32 %v213, %v1365
    %v1942 = vadd.f32 %v214, %v1366
    %v1943 = vadd.f32 %v215, %v1367
    %v1944 = vadd.f32 %v216, %v1368
    %v1945 = vadd.f32 %v217, %v1369
    %v1946 = vadd.f32 %v218, %v1370
    %v1947 = vadd.f32 %v219, %v1371
    %v1948 = vadd.f32 %v220, %v1372
    %v1949 = vadd.f32 %v221, %v1373
    %v1950 = vadd.f32 %v222, %v1374
    %v1951 = vadd.f32 %v223, %v1375
    %v1952 = vadd.f32 %v224, %v1376
    %v1953 = vadd.f32 %v225, %v1377
    %v1954 = vadd.f32 %v226, %v1378
    %v1955 = vadd.f32 %v227, %v1379
    %v1956 = vadd.f32 %v228, %v1380
    %v1957 = vadd.f32 %v229, %v1381
    %v1958 = vadd.f32 %v230, %v1382
    %v1959 = vadd.f32 %v231, %v1383
    %v1960 = vadd.f32 %v232, %v1384
    %v1961 = vadd.f32 %v233, %v1385
    %v1962 = vadd.f32 %v234, %v1386
    %v1963 = vadd.f32 %v235, %v1387
    %v1964 = vadd.f32 %v236, %v1388
    %v1965 = vadd.f32 %v237, %v1389
    %v1966 = vadd.f32 %v238, %v1390
    %v1967 = vadd.f32 %v239, %v1391
    %v1968 = vadd.f32 %v240, %v1392
    %v1969 = vadd.f32 %v241, %v1393
    %v1970 = vadd.f32 %v242, %v1394
    %v1971 = vadd.f32 %v243, %v1395
    %v1972 = vadd.f32 %v244, %v1396
    %v1973 = vadd.f32 %v245, %v1397
    %v1974 = vadd.f32 %v246, %v1398
    %v1975 = vadd.f32 %v247, %v1399
    %v1976 = vadd.f32 %v248, %v1400
    %v1977 = vadd.f32 %v249, %v1401
    %v1978 = vadd.f32 %v154, %v1402
    %v1979 = vadd.f32 %v155, %v1403
    %v1980 = vadd.f32 %v156, %v1404
    %v1981 = vadd.f32 %v157, %v1405
    %v1982 = vadd.f32 %v158, %v1406
    %v1983 = vadd.f32 %v159, %v1407
    %v1984 = vadd.f32 %v160, %v1408
    %v1985 = vadd.f32 %v161, %v1409
    %v1986 = vadd.f32 %v162, %v1410
    %v1987 = vadd.f32 %v163, %v1411
    %v1988 = vadd.f32 %v164, %v1412
    %v1989 = vadd.f32 %v165, %v1413
    %v1990 = vadd.f32 %v166, %v1414
    %v1991 = vadd.f32 %v167, %v1415
    %v1992 = vadd.f32 %v168, %v1416
    %v1993 = vadd.f32 %v169, %v1417
    %v1994 = vadd.f32 %v170, %v1418
    %v1995 = vadd.f32 %v171, %v1419
    %v1996 = vadd.f32 %v172, %v1420
    %v1997 = vadd.f32 %v173, %v1421
    %v1998 = vadd.f32 %v174, %v1422
    %v1999 = vadd.f32 %v175, %v1423
    %v2000 = vadd.f32 %v176, %v1424
    %v2001 = vadd.f32 %v177, %v1425
    %v2002 = vadd.f32 %v178, %v1426
    %v2003 = vadd.f32 %v179, %v1427
    %v2004 = vadd.f32 %v180, %v1428
    %v2005 = vadd.f32 %v181, %v1429
    %v2006 = vadd.f32 %v182, %v1430
    %v2007 = vadd.f32 %v183, %v1431
    %v2008 = vadd.f32 %v184, %v1432
    %v2009 = vadd.f32 %v185, %v1433
    %v2010 = vadd.f32 %v186, %v1434
    %v2011 = vadd.f32 %v187, %v1435
    %v2012 = vadd.f32 %v188, %v1436
    %v2013 = vadd.f32 %v189, %v1437
    %v2014 = vadd.f32 %v190, %v1438
    %v2015 = vadd.f32 %v191, %v1439
    %v2016 = vadd.f32 %v192, %v1440
    %v2017 = vadd.f32 %v193, %v1441
    %v2018 = vadd.f32 %v194, %v1442
    %v2019 = vadd.f32 %v195, %v1443
    %v2020 = vadd.f32 %v196, %v1444
    %v2021 = vadd.f32 %v197, %v1445
    %v2022 = vadd.f32 %v198, %v1446
    %v2023 = vadd.f32 %v199, %v1447
    %v2024 = vadd.f32 %v200, %v1448
    %v2025 = vadd.f32 %v201, %v1449
    %v2026 = vadd.f32 %v202, %v1450
    %v2027 = vadd.f32 %v203, %v1451
    %v2028 = vadd.f32 %v204, %v1452
    %v2029 = vadd.f32 %v205, %v1453
    %v2030 = vadd.f32 %v206, %v1454
    %v2031 = vadd.f32 %v207, %v1455
    %v2032 = vadd.f32 %v208, %v1456
    %v2033 = vadd.f32 %v209, %v1457
    %v2034 = vadd.f32 %v210, %v1458
    %v2035 = vadd.f32 %v211, %v1459
    %v2036 = vadd.f32 %v212, %v1460
    %v2037 = vadd.f32 %v213, %v1461
    %v2038 = vadd.f32 %v214, %v1462
    %v2039 = vadd.f32 %v215, %v1463
    %v2040 = vadd.f32 %v216, %v1464
    %v2041 = vadd.f32 %v217, %v1465
    %v2042 = vadd.f32 %v218, %v1466
    %v2043 = vadd.f32 %v219, %v1467
    %v2044 = vadd.f32 %v220, %v1468
    %v2045 = vadd.f32 %v221, %v1469
    %v2046 = vadd.f32 %v222, %v1470
    %v2047 = vadd.f32 %v223, %v1471
    %v2048 = vadd.f32 %v224, %v1472
    %v2049 = vadd.f32 %v225, %v1473
    %v2050 = vadd.f32 %v226, %v1474
    %v2051 = vadd.f32 %v227, %v1475
    %v2052 = vadd.f32 %v228, %v1476
    %v2053 = vadd.f32 %v229, %v1477
    %v2054 = vadd.f32 %v230, %v1478
    %v2055 = vadd.f32 %v231, %v1479
    %v2056 = vadd.f32 %v232, %v1480
    %v2057 = vadd.f32 %v233, %v1481
    %v2058 = vadd.f32 %v234, %v1482
    %v2059 = vadd.f32 %v235, %v1483
    %v2060 = vadd.f32 %v236, %v1484
    %v2061 = vadd.f32 %v237, %v1485
    %v2062 = vadd.f32 %v238, %v1486
    %v2063 = vadd.f32 %v239, %v1487
    %v2064 = vadd.f32 %v240, %v1488
    %v2065 = vadd.f32 %v241, %v1489
    %v2066 = vadd.f32 %v242, %v1490
    %v2067 = vadd.f32 %v243, %v1491
    %v2068 = vadd.f32 %v244, %v1492
    %v2069 = vadd.f32 %v245, %v1493
    %v2070 = vadd.f32 %v246, %v1494
    %v2071 = vadd.f32 %v247, %v1495
    %v2072 = vadd.f32 %v248, %v1496
    %v2073 = vadd.f32 %v249, %v1497
    %v2074 = vld [vmem:[#allocation3] sm:$0xff]
    %v2075 = vld [vmem:[#allocation3 + $0x8] sm:$0xff]
    %v2076 = vld [vmem:[#allocation3 + $0x10] sm:$0xff]
    %v2077 = vld [vmem:[#allocation3 + $0x18] sm:$0xff]
    %v2078 = vld [vmem:[#allocation3 + $0x20] sm:$0xff]
    %v2079 = vld [vmem:[#allocation3 + $0x28] sm:$0xff]
    %v2080 = vld [vmem:[#allocation3 + $0x30] sm:$0xff]
    %v2081 = vld [vmem:[#allocation3 + $0x38] sm:$0xff]
    %v2082 = vld [vmem:[#allocation3 + $0x40] sm:$0xff]
    %v2083 = vld [vmem:[#allocation3 + $0x48] sm:$0xff]
    %v2084 = vld [vmem:[#allocation3 + $0x50] sm:$0xff]
    %v2085 = vld [vmem:[#allocation3 + $0x58] sm:$0xff]
    %v2086 = vld [vmem:[#allocation2] sm:$0xff]
    %v2087 = vld [vmem:[#allocation2 + $0x8] sm:$0xff]
    %v2088 = vld [vmem:[#allocation2 + $0x10] sm:$0xff]
    %v2089 = vld [vmem:[#allocation2 + $0x18] sm:$0xff]
    %v2090 = vld [vmem:[#allocation2 + $0x20] sm:$0xff]
    %v2091 = vld [vmem:[#allocation2 + $0x28] sm:$0xff]
    %v2092 = vld [vmem:[#allocation2 + $0x30] sm:$0xff]
    %v2093 = vld [vmem:[#allocation2 + $0x38] sm:$0xff]
    %v2094 = vld [vmem:[#allocation2 + $0x40] sm:$0xff]
    %v2095 = vld [vmem:[#allocation2 + $0x48] sm:$0xff]
    %v2096 = vld [vmem:[#allocation2 + $0x50] sm:$0xff]
    %v2097 = vld [vmem:[#allocation2 + $0x58] sm:$0xff]
    %v2098 = vld [vmem:[#allocation2 + $0x60] sm:$0xff]
    %v2099 = vld [vmem:[#allocation2 + $0x68] sm:$0xff]
    %v2100 = vld [vmem:[#allocation2 + $0x70] sm:$0xff]
    %v2101 = vld [vmem:[#allocation2 + $0x78] sm:$0xff]
    %v2102 = vld [vmem:[#allocation2 + $0x80] sm:$0xff]
    %v2103 = vld [vmem:[#allocation2 + $0x88] sm:$0xff]
    %2104 = vmatpush.msra.mxu0 %v1543
    %2105 = vmatpush.msra.mxu0 %v1540
    %2106 = vmatpush.msra.mxu0 %v1537
    %2107 = vmatpush.msra.mxu0 %v1534
    %2108 = vmatpush.msra.mxu0 %v1531
    %2109 = vmatpush.msra.mxu0 %v1528
    %2110 = vmatpush.msra.mxu0 %v1525
    %2111 = vmatpush.msra.mxu0 %v1522
    %2112 = vmatpush.msra.mxu0 %v1519
    %2113 = vmatpush.msra.mxu0 %v1516
    %2114 = vmatpush.msra.mxu0 %v1513
    %2115 = vmatpush.msra.mxu0 %v1510
    %2116 = vmatpush.msra.mxu0 %v1507
    %2117 = vmatpush.msra.mxu0 %v1504
    %2118 = vmatpush.msra.mxu0 %v1501
    %2119 = vmatpush.msra.mxu0 %v1498
    %2120 = vmatmul.f32.gmra.mxu0 %v2074
    %v2121 = vpop.f32.mrf.mxu0
    %v2122 = vadd.f32 0.0, %v2121
    %2123 = vdwg.mxu0
    %2124 = vmatpush.msra.mxu0 %v1591
    %2125 = vmatpush.msra.mxu0 %v1588
    %2126 = vmatpush.msra.mxu0 %v1585
    %2127 = vmatpush.msra.mxu0 %v1582
    %2128 = vmatpush.msra.mxu0 %v1579
    %2129 = vmatpush.msra.mxu0 %v1576
    %2130 = vmatpush.msra.mxu0 %v1573
    %2131 = vmatpush.msra.mxu0 %v1570
    %2132 = vmatpush.msra.mxu0 %v1567
    %2133 = vmatpush.msra.mxu0 %v1564
    %2134 = vmatpush.msra.mxu0 %v1561
    %2135 = vmatpush.msra.mxu0 %v1558
    %2136 = vmatpush.msra.mxu0 %v1555
    %2137 = vmatpush.msra.mxu0 %v1552
    %2138 = vmatpush.msra.mxu0 %v1549
    %2139 = vmatpush.msra.mxu0 %v1546
    %2140 = vmatmul.f32.gmra.mxu0 %v2075
    %v2141 = vpop.f32.mrf.mxu0
    %v2142 = vadd.f32 %v2122, %v2141
    %2143 = vdwg.mxu0
    %2144 = vmatpush.msra.mxu0 %v1544
    %2145 = vmatpush.msra.mxu0 %v1541
    %2146 = vmatpush.msra.mxu0 %v1538
    %2147 = vmatpush.msra.mxu0 %v1535
    %2148 = vmatpush.msra.mxu0 %v1532
    %2149 = vmatpush.msra.mxu0 %v1529
    %2150 = vmatpush.msra.mxu0 %v1526
    %2151 = vmatpush.msra.mxu0 %v1523
    %2152 = vmatpush.msra.mxu0 %v1520
    %2153 = vmatpush.msra.mxu0 %v1517
    %2154 = vmatpush.msra.mxu0 %v1514
    %2155 = vmatpush.msra.mxu0 %v1511
    %2156 = vmatpush.msra.mxu0 %v1508
    %2157 = vmatpush.msra.mxu0 %v1505
    %2158 = vmatpush.msra.mxu0 %v1502
    %2159 = vmatpush.msra.mxu0 %v1499
    %2160 = vmatmul.f32.gmra.mxu0 %v2074
    %v2161 = vpop.f32.mrf.mxu0
    %v2162 = vadd.f32 0.0, %v2161
    %2163 = vdwg.mxu0
    %2164 = vmatpush.msra.mxu0 %v1592
    %2165 = vmatpush.msra.mxu0 %v1589
    %2166 = vmatpush.msra.mxu0 %v1586
    %2167 = vmatpush.msra.mxu0 %v1583
    %2168 = vmatpush.msra.mxu0 %v1580
    %2169 = vmatpush.msra.mxu0 %v1577
    %2170 = vmatpush.msra.mxu0 %v1574
    %2171 = vmatpush.msra.mxu0 %v1571
    %2172 = vmatpush.msra.mxu0 %v1568
    %2173 = vmatpush.msra.mxu0 %v1565
    %2174 = vmatpush.msra.mxu0 %v1562
    %2175 = vmatpush.msra.mxu0 %v1559
    %2176 = vmatpush.msra.mxu0 %v1556
    %2177 = vmatpush.msra.mxu0 %v1553
    %2178 = vmatpush.msra.mxu0 %v1550
    %2179 = vmatpush.msra.mxu0 %v1547
    %2180 = vmatmul.f32.gmra.mxu0 %v2075
    %v2181 = vpop.f32.mrf.mxu0
    %v2182 = vadd.f32 %v2162, %v2181
    %2183 = vdwg.mxu0
    %2184 = vmatpush.msra.mxu0 %v1545
    %2185 = vmatpush.msra.mxu0 %v1542
    %2186 = vmatpush.msra.mxu0 %v1539
    %2187 = vmatpush.msra.mxu0 %v1536
    %2188 = vmatpush.msra.mxu0 %v1533
    %2189 = vmatpush.msra.mxu0 %v1530
    %2190 = vmatpush.msra.mxu0 %v1527
    %2191 = vmatpush.msra.mxu0 %v1524
    %2192 = vmatpush.msra.mxu0 %v1521
    %2193 = vmatpush.msra.mxu0 %v1518
    %2194 = vmatpush.msra.mxu0 %v1515
    %2195 = vmatpush.msra.mxu0 %v1512
    %2196 = vmatpush.msra.mxu0 %v1509
    %2197 = vmatpush.msra.mxu0 %v1506
    %2198 = vmatpush.msra.mxu0 %v1503
    %2199 = vmatpush.msra.mxu0 %v1500
    %2200 = vmatmul.f32.gmra.mxu0 %v2074
    %v2201 = vpop.f32.mrf.mxu0
    %v2202 = vadd.f32 0.0, %v2201
    %2203 = vdwg.mxu0
    %2204 = vmatpush.msra.mxu0 %v1593
    %2205 = vmatpush.msra.mxu0 %v1590
    %2206 = vmatpush.msra.mxu0 %v1587
    %2207 = vmatpush.msra.mxu0 %v1584
    %2208 = vmatpush.msra.mxu0 %v1581
    %2209 = vmatpush.msra.mxu0 %v1578
    %2210 = vmatpush.msra.mxu0 %v1575
    %2211 = vmatpush.msra.mxu0 %v1572
    %2212 = vmatpush.msra.mxu0 %v1569
    %2213 = vmatpush.msra.mxu0 %v1566
    %2214 = vmatpush.msra.mxu0 %v1563
    %2215 = vmatpush.msra.mxu0 %v1560
    %2216 = vmatpush.msra.mxu0 %v1557
    %2217 = vmatpush.msra.mxu0 %v1554
    %2218 = vmatpush.msra.mxu0 %v1551
    %2219 = vmatpush.msra.mxu0 %v1548
    %2220 = vmatmul.f32.gmra.mxu0 %v2075
    %v2221 = vpop.f32.mrf.mxu0
    %v2222 = vadd.f32 %v2202, %v2221
    %2223 = vdwg.mxu0
    %2224 = vmatpush.msra.mxu0 %v1639
    %2225 = vmatpush.msra.mxu0 %v1636
    %2226 = vmatpush.msra.mxu0 %v1633
    %2227 = vmatpush.msra.mxu0 %v1630
    %2228 = vmatpush.msra.mxu0 %v1627
    %2229 = vmatpush.msra.mxu0 %v1624
    %2230 = vmatpush.msra.mxu0 %v1621
    %2231 = vmatpush.msra.mxu0 %v1618
    %2232 = vmatpush.msra.mxu0 %v1615
    %2233 = vmatpush.msra.mxu0 %v1612
    %2234 = vmatpush.msra.mxu0 %v1609
    %2235 = vmatpush.msra.mxu0 %v1606
    %2236 = vmatpush.msra.mxu0 %v1603
    %2237 = vmatpush.msra.mxu0 %v1600
    %2238 = vmatpush.msra.mxu0 %v1597
    %2239 = vmatpush.msra.mxu0 %v1594
    %2240 = vmatmul.f32.gmra.mxu0 %v2076
    %v2241 = vpop.f32.mrf.mxu0
    %v2242 = vadd.f32 0.0, %v2241
    %2243 = vdwg.mxu0
    %2244 = vmatpush.msra.mxu0 %v1687
    %2245 = vmatpush.msra.mxu0 %v1684
    %2246 = vmatpush.msra.mxu0 %v1681
    %2247 = vmatpush.msra.mxu0 %v1678
    %2248 = vmatpush.msra.mxu0 %v1675
    %2249 = vmatpush.msra.mxu0 %v1672
    %2250 = vmatpush.msra.mxu0 %v1669
    %2251 = vmatpush.msra.mxu0 %v1666
    %2252 = vmatpush.msra.mxu0 %v1663
    %2253 = vmatpush.msra.mxu0 %v1660
    %2254 = vmatpush.msra.mxu0 %v1657
    %2255 = vmatpush.msra.mxu0 %v1654
    %2256 = vmatpush.msra.mxu0 %v1651
    %2257 = vmatpush.msra.mxu0 %v1648
    %2258 = vmatpush.msra.mxu0 %v1645
    %2259 = vmatpush.msra.mxu0 %v1642
    %2260 = vmatmul.f32.gmra.mxu0 %v2077
    %v2261 = vpop.f32.mrf.mxu0
    %v2262 = vadd.f32 %v2242, %v2261
    %2263 = vdwg.mxu0
    %2264 = vmatpush.msra.mxu0 %v1640
    %2265 = vmatpush.msra.mxu0 %v1637
    %2266 = vmatpush.msra.mxu0 %v1634
    %2267 = vmatpush.msra.mxu0 %v1631
    %2268 = vmatpush.msra.mxu0 %v1628
    %2269 = vmatpush.msra.mxu0 %v1625
    %2270 = vmatpush.msra.mxu0 %v1622
    %2271 = vmatpush.msra.mxu0 %v1619
    %2272 = vmatpush.msra.mxu0 %v1616
    %2273 = vmatpush.msra.mxu0 %v1613
    %2274 = vmatpush.msra.mxu0 %v1610
    %2275 = vmatpush.msra.mxu0 %v1607
    %2276 = vmatpush.msra.mxu0 %v1604
    %2277 = vmatpush.msra.mxu0 %v1601
    %2278 = vmatpush.msra.mxu0 %v1598
    %2279 = vmatpush.msra.mxu0 %v1595
    %2280 = vmatmul.f32.gmra.mxu0 %v2076
    %v2281 = vpop.f32.mrf.mxu0
    %v2282 = vadd.f32 0.0, %v2281
    %2283 = vdwg.mxu0
    %2284 = vmatpush.msra.mxu0 %v1688
    %2285 = vmatpush.msra.mxu0 %v1685
    %2286 = vmatpush.msra.mxu0 %v1682
    %2287 = vmatpush.msra.mxu0 %v1679
    %2288 = vmatpush.msra.mxu0 %v1676
    %2289 = vmatpush.msra.mxu0 %v1673
    %2290 = vmatpush.msra.mxu0 %v1670
    %2291 = vmatpush.msra.mxu0 %v1667
    %2292 = vmatpush.msra.mxu0 %v1664
    %2293 = vmatpush.msra.mxu0 %v1661
    %2294 = vmatpush.msra.mxu0 %v1658
    %2295 = vmatpush.msra.mxu0 %v1655
    %2296 = vmatpush.msra.mxu0 %v1652
    %2297 = vmatpush.msra.mxu0 %v1649
    %2298 = vmatpush.msra.mxu0 %v1646
    %2299 = vmatpush.msra.mxu0 %v1643
    %2300 = vmatmul.f32.gmra.mxu0 %v2077
    %v2301 = vpop.f32.mrf.mxu0
    %v2302 = vadd.f32 %v2282, %v2301
    %2303 = vdwg.mxu0
    %2304 = vmatpush.msra.mxu0 %v1641
    %2305 = vmatpush.msra.mxu0 %v1638
    %2306 = vmatpush.msra.mxu0 %v1635
    %2307 = vmatpush.msra.mxu0 %v1632
    %2308 = vmatpush.msra.mxu0 %v1629
    %2309 = vmatpush.msra.mxu0 %v1626
    %2310 = vmatpush.msra.mxu0 %v1623
    %2311 = vmatpush.msra.mxu0 %v1620
    %2312 = vmatpush.msra.mxu0 %v1617
    %2313 = vmatpush.msra.mxu0 %v1614
    %2314 = vmatpush.msra.mxu0 %v1611
    %2315 = vmatpush.msra.mxu0 %v1608
    %2316 = vmatpush.msra.mxu0 %v1605
    %2317 = vmatpush.msra.mxu0 %v1602
    %2318 = vmatpush.msra.mxu0 %v1599
    %2319 = vmatpush.msra.mxu0 %v1596
    %2320 = vmatmul.f32.gmra.mxu0 %v2076
    %v2321 = vpop.f32.mrf.mxu0
    %v2322 = vadd.f32 0.0, %v2321
    %2323 = vdwg.mxu0
    %2324 = vmatpush.msra.mxu0 %v1689
    %2325 = vmatpush.msra.mxu0 %v1686
    %2326 = vmatpush.msra.mxu0 %v1683
    %2327 = vmatpush.msra.mxu0 %v1680
    %2328 = vmatpush.msra.mxu0 %v1677
    %2329 = vmatpush.msra.mxu0 %v1674
    %2330 = vmatpush.msra.mxu0 %v1671
    %2331 = vmatpush.msra.mxu0 %v1668
    %2332 = vmatpush.msra.mxu0 %v1665
    %2333 = vmatpush.msra.mxu0 %v1662
    %2334 = vmatpush.msra.mxu0 %v1659
    %2335 = vmatpush.msra.mxu0 %v1656
    %2336 = vmatpush.msra.mxu0 %v1653
    %2337 = vmatpush.msra.mxu0 %v1650
    %2338 = vmatpush.msra.mxu0 %v1647
    %2339 = vmatpush.msra.mxu0 %v1644
    %2340 = vmatmul.f32.gmra.mxu0 %v2077
    %v2341 = vpop.f32.mrf.mxu0
    %v2342 = vadd.f32 %v2322, %v2341
    %2343 = vdwg.mxu0
    %2344 = vmatpush.msra.mxu0 %v1735
    %2345 = vmatpush.msra.mxu0 %v1732
    %2346 = vmatpush.msra.mxu0 %v1729
    %2347 = vmatpush.msra.mxu0 %v1726
    %2348 = vmatpush.msra.mxu0 %v1723
    %2349 = vmatpush.msra.mxu0 %v1720
    %2350 = vmatpush.msra.mxu0 %v1717
    %2351 = vmatpush.msra.mxu0 %v1714
    %2352 = vmatpush.msra.mxu0 %v1711
    %2353 = vmatpush.msra.mxu0 %v1708
    %2354 = vmatpush.msra.mxu0 %v1705
    %2355 = vmatpush.msra.mxu0 %v1702
    %2356 = vmatpush.msra.mxu0 %v1699
    %2357 = vmatpush.msra.mxu0 %v1696
    %2358 = vmatpush.msra.mxu0 %v1693
    %2359 = vmatpush.msra.mxu0 %v1690
    %2360 = vmatmul.f32.gmra.mxu0 %v2078
    %v2361 = vpop.f32.mrf.mxu0
    %v2362 = vadd.f32 0.0, %v2361
    %2363 = vdwg.mxu0
    %2364 = vmatpush.msra.mxu0 %v1783
    %2365 = vmatpush.msra.mxu0 %v1780
    %2366 = vmatpush.msra.mxu0 %v1777
    %2367 = vmatpush.msra.mxu0 %v1774
    %2368 = vmatpush.msra.mxu0 %v1771
    %2369 = vmatpush.msra.mxu0 %v1768
    %2370 = vmatpush.msra.mxu0 %v1765
    %2371 = vmatpush.msra.mxu0 %v1762
    %2372 = vmatpush.msra.mxu0 %v1759
    %2373 = vmatpush.msra.mxu0 %v1756
    %2374 = vmatpush.msra.mxu0 %v1753
    %2375 = vmatpush.msra.mxu0 %v1750
    %2376 = vmatpush.msra.mxu0 %v1747
    %2377 = vmatpush.msra.mxu0 %v1744
    %2378 = vmatpush.msra.mxu0 %v1741
    %2379 = vmatpush.msra.mxu0 %v1738
    %2380 = vmatmul.f32.gmra.mxu0 %v2079
    %v2381 = vpop.f32.mrf.mxu0
    %v2382 = vadd.f32 %v2362, %v2381
    %2383 = vdwg.mxu0
    %2384 = vmatpush.msra.mxu0 %v1736
    %2385 = vmatpush.msra.mxu0 %v1733
    %2386 = vmatpush.msra.mxu0 %v1730
    %2387 = vmatpush.msra.mxu0 %v1727
    %2388 = vmatpush.msra.mxu0 %v1724
    %2389 = vmatpush.msra.mxu0 %v1721
    %2390 = vmatpush.msra.mxu0 %v1718
    %2391 = vmatpush.msra.mxu0 %v1715
    %2392 = vmatpush.msra.mxu0 %v1712
    %2393 = vmatpush.msra.mxu0 %v1709
    %2394 = vmatpush.msra.mxu0 %v1706
    %2395 = vmatpush.msra.mxu0 %v1703
    %2396 = vmatpush.msra.mxu0 %v1700
    %2397 = vmatpush.msra.mxu0 %v1697
    %2398 = vmatpush.msra.mxu0 %v1694
    %2399 = vmatpush.msra.mxu0 %v1691
    %2400 = vmatmul.f32.gmra.mxu0 %v2078
    %v2401 = vpop.f32.mrf.mxu0
    %v2402 = vadd.f32 0.0, %v2401
    %2403 = vdwg.mxu0
    %2404 = vmatpush.msra.mxu0 %v1784
    %2405 = vmatpush.msra.mxu0 %v1781
    %2406 = vmatpush.msra.mxu0 %v1778
    %2407 = vmatpush.msra.mxu0 %v1775
    %2408 = vmatpush.msra.mxu0 %v1772
    %2409 = vmatpush.msra.mxu0 %v1769
    %2410 = vmatpush.msra.mxu0 %v1766
    %2411 = vmatpush.msra.mxu0 %v1763
    %2412 = vmatpush.msra.mxu0 %v1760
    %2413 = vmatpush.msra.mxu0 %v1757
    %2414 = vmatpush.msra.mxu0 %v1754
    %2415 = vmatpush.msra.mxu0 %v1751
    %2416 = vmatpush.msra.mxu0 %v1748
    %2417 = vmatpush.msra.mxu0 %v1745
    %2418 = vmatpush.msra.mxu0 %v1742
    %2419 = vmatpush.msra.mxu0 %v1739
    %2420 = vmatmul.f32.gmra.mxu0 %v2079
    %v2421 = vpop.f32.mrf.mxu0
    %v2422 = vadd.f32 %v2402, %v2421
    %2423 = vdwg.mxu0
    %2424 = vmatpush.msra.mxu0 %v1737
    %2425 = vmatpush.msra.mxu0 %v1734
    %2426 = vmatpush.msra.mxu0 %v1731
    %2427 = vmatpush.msra.mxu0 %v1728
    %2428 = vmatpush.msra.mxu0 %v1725
    %2429 = vmatpush.msra.mxu0 %v1722
    %2430 = vmatpush.msra.mxu0 %v1719
    %2431 = vmatpush.msra.mxu0 %v1716
    %2432 = vmatpush.msra.mxu0 %v1713
    %2433 = vmatpush.msra.mxu0 %v1710
    %2434 = vmatpush.msra.mxu0 %v1707
    %2435 = vmatpush.msra.mxu0 %v1704
    %2436 = vmatpush.msra.mxu0 %v1701
    %2437 = vmatpush.msra.mxu0 %v1698
    %2438 = vmatpush.msra.mxu0 %v1695
    %2439 = vmatpush.msra.mxu0 %v1692
    %2440 = vmatmul.f32.gmra.mxu0 %v2078
    %v2441 = vpop.f32.mrf.mxu0
    %v2442 = vadd.f32 0.0, %v2441
    %2443 = vdwg.mxu0
    %2444 = vmatpush.msra.mxu0 %v1785
    %2445 = vmatpush.msra.mxu0 %v1782
    %2446 = vmatpush.msra.mxu0 %v1779
    %2447 = vmatpush.msra.mxu0 %v1776
    %2448 = vmatpush.msra.mxu0 %v1773
    %2449 = vmatpush.msra.mxu0 %v1770
    %2450 = vmatpush.msra.mxu0 %v1767
    %2451 = vmatpush.msra.mxu0 %v1764
    %2452 = vmatpush.msra.mxu0 %v1761
    %2453 = vmatpush.msra.mxu0 %v1758
    %2454 = vmatpush.msra.mxu0 %v1755
    %2455 = vmatpush.msra.mxu0 %v1752
    %2456 = vmatpush.msra.mxu0 %v1749
    %2457 = vmatpush.msra.mxu0 %v1746
    %2458 = vmatpush.msra.mxu0 %v1743
    %2459 = vmatpush.msra.mxu0 %v1740
    %2460 = vmatmul.f32.gmra.mxu0 %v2079
    %v2461 = vpop.f32.mrf.mxu0
    %v2462 = vadd.f32 %v2442, %v2461
    %2463 = vdwg.mxu0
    %2464 = vmatpush.msra.mxu0 %v1831
    %2465 = vmatpush.msra.mxu0 %v1828
    %2466 = vmatpush.msra.mxu0 %v1825
    %2467 = vmatpush.msra.mxu0 %v1822
    %2468 = vmatpush.msra.mxu0 %v1819
    %2469 = vmatpush.msra.mxu0 %v1816
    %2470 = vmatpush.msra.mxu0 %v1813
    %2471 = vmatpush.msra.mxu0 %v1810
    %2472 = vmatpush.msra.mxu0 %v1807
    %2473 = vmatpush.msra.mxu0 %v1804
    %2474 = vmatpush.msra.mxu0 %v1801
    %2475 = vmatpush.msra.mxu0 %v1798
    %2476 = vmatpush.msra.mxu0 %v1795
    %2477 = vmatpush.msra.mxu0 %v1792
    %2478 = vmatpush.msra.mxu0 %v1789
    %2479 = vmatpush.msra.mxu0 %v1786
    %2480 = vmatmul.f32.gmra.mxu0 %v2080
    %v2481 = vpop.f32.mrf.mxu0
    %v2482 = vadd.f32 0.0, %v2481
    %2483 = vdwg.mxu0
    %2484 = vmatpush.msra.mxu0 %v1879
    %2485 = vmatpush.msra.mxu0 %v1876
    %2486 = vmatpush.msra.mxu0 %v1873
    %2487 = vmatpush.msra.mxu0 %v1870
    %2488 = vmatpush.msra.mxu0 %v1867
    %2489 = vmatpush.msra.mxu0 %v1864
    %2490 = vmatpush.msra.mxu0 %v1861
    %2491 = vmatpush.msra.mxu0 %v1858
    %2492 = vmatpush.msra.mxu0 %v1855
    %2493 = vmatpush.msra.mxu0 %v1852
    %2494 = vmatpush.msra.mxu0 %v1849
    %2495 = vmatpush.msra.mxu0 %v1846
    %2496 = vmatpush.msra.mxu0 %v1843
    %2497 = vmatpush.msra.mxu0 %v1840
    %2498 = vmatpush.msra.mxu0 %v1837
    %2499 = vmatpush.msra.mxu0 %v1834
    %2500 = vmatmul.f32.gmra.mxu0 %v2081
    %v2501 = vpop.f32.mrf.mxu0
    %v2502 = vadd.f32 %v2482, %v2501
    %2503 = vdwg.mxu0
    %2504 = vmatpush.msra.mxu0 %v1832
    %2505 = vmatpush.msra.mxu0 %v1829
    %2506 = vmatpush.msra.mxu0 %v1826
    %2507 = vmatpush.msra.mxu0 %v1823
    %2508 = vmatpush.msra.mxu0 %v1820
    %2509 = vmatpush.msra.mxu0 %v1817
    %2510 = vmatpush.msra.mxu0 %v1814
    %2511 = vmatpush.msra.mxu0 %v1811
    %2512 = vmatpush.msra.mxu0 %v1808
    %2513 = vmatpush.msra.mxu0 %v1805
    %2514 = vmatpush.msra.mxu0 %v1802
    %2515 = vmatpush.msra.mxu0 %v1799
    %2516 = vmatpush.msra.mxu0 %v1796
    %2517 = vmatpush.msra.mxu0 %v1793
    %2518 = vmatpush.msra.mxu0 %v1790
    %2519 = vmatpush.msra.mxu0 %v1787
    %2520 = vmatmul.f32.gmra.mxu0 %v2080
    %v2521 = vpop.f32.mrf.mxu0
    %v2522 = vadd.f32 0.0, %v2521
    %2523 = vdwg.mxu0
    %2524 = vmatpush.msra.mxu0 %v1880
    %2525 = vmatpush.msra.mxu0 %v1877
    %2526 = vmatpush.msra.mxu0 %v1874
    %2527 = vmatpush.msra.mxu0 %v1871
    %2528 = vmatpush.msra.mxu0 %v1868
    %2529 = vmatpush.msra.mxu0 %v1865
    %2530 = vmatpush.msra.mxu0 %v1862
    %2531 = vmatpush.msra.mxu0 %v1859
    %2532 = vmatpush.msra.mxu0 %v1856
    %2533 = vmatpush.msra.mxu0 %v1853
    %2534 = vmatpush.msra.mxu0 %v1850
    %2535 = vmatpush.msra.mxu0 %v1847
    %2536 = vmatpush.msra.mxu0 %v1844
    %2537 = vmatpush.msra.mxu0 %v1841
    %2538 = vmatpush.msra.mxu0 %v1838
    %2539 = vmatpush.msra.mxu0 %v1835
    %2540 = vmatmul.f32.gmra.mxu0 %v2081
    %v2541 = vpop.f32.mrf.mxu0
    %v2542 = vadd.f32 %v2522, %v2541
    %2543 = vdwg.mxu0
    %2544 = vmatpush.msra.mxu0 %v1833
    %2545 = vmatpush.msra.mxu0 %v1830
    %2546 = vmatpush.msra.mxu0 %v1827
    %2547 = vmatpush.msra.mxu0 %v1824
    %2548 = vmatpush.msra.mxu0 %v1821
    %2549 = vmatpush.msra.mxu0 %v1818
    %2550 = vmatpush.msra.mxu0 %v1815
    %2551 = vmatpush.msra.mxu0 %v1812
    %2552 = vmatpush.msra.mxu0 %v1809
    %2553 = vmatpush.msra.mxu0 %v1806
    %2554 = vmatpush.msra.mxu0 %v1803
    %2555 = vmatpush.msra.mxu0 %v1800
    %2556 = vmatpush.msra.mxu0 %v1797
    %2557 = vmatpush.msra.mxu0 %v1794
    %2558 = vmatpush.msra.mxu0 %v1791
    %2559 = vmatpush.msra.mxu0 %v1788
    %2560 = vmatmul.f32.gmra.mxu0 %v2080
    %v2561 = vpop.f32.mrf.mxu0
    %v2562 = vadd.f32 0.0, %v2561
    %2563 = vdwg.mxu0
    %2564 = vmatpush.msra.mxu0 %v1881
    %2565 = vmatpush.msra.mxu0 %v1878
    %2566 = vmatpush.msra.mxu0 %v1875
    %2567 = vmatpush.msra.mxu0 %v1872
    %2568 = vmatpush.msra.mxu0 %v1869
    %2569 = vmatpush.msra.mxu0 %v1866
    %2570 = vmatpush.msra.mxu0 %v1863
    %2571 = vmatpush.msra.mxu0 %v1860
    %2572 = vmatpush.msra.mxu0 %v1857
    %2573 = vmatpush.msra.mxu0 %v1854
    %2574 = vmatpush.msra.mxu0 %v1851
    %2575 = vmatpush.msra.mxu0 %v1848
    %2576 = vmatpush.msra.mxu0 %v1845
    %2577 = vmatpush.msra.mxu0 %v1842
    %2578 = vmatpush.msra.mxu0 %v1839
    %2579 = vmatpush.msra.mxu0 %v1836
    %2580 = vmatmul.f32.gmra.mxu0 %v2081
    %v2581 = vpop.f32.mrf.mxu0
    %v2582 = vadd.f32 %v2562, %v2581
    %2583 = vdwg.mxu0
    %2584 = vmatpush.msra.mxu0 %v1927
    %2585 = vmatpush.msra.mxu0 %v1924
    %2586 = vmatpush.msra.mxu0 %v1921
    %2587 = vmatpush.msra.mxu0 %v1918
    %2588 = vmatpush.msra.mxu0 %v1915
    %2589 = vmatpush.msra.mxu0 %v1912
    %2590 = vmatpush.msra.mxu0 %v1909
    %2591 = vmatpush.msra.mxu0 %v1906
    %2592 = vmatpush.msra.mxu0 %v1903
    %2593 = vmatpush.msra.mxu0 %v1900
    %2594 = vmatpush.msra.mxu0 %v1897
    %2595 = vmatpush.msra.mxu0 %v1894
    %2596 = vmatpush.msra.mxu0 %v1891
    %2597 = vmatpush.msra.mxu0 %v1888
    %2598 = vmatpush.msra.mxu0 %v1885
    %2599 = vmatpush.msra.mxu0 %v1882
    %2600 = vmatmul.f32.gmra.mxu0 %v2082
    %v2601 = vpop.f32.mrf.mxu0
    %v2602 = vadd.f32 0.0, %v2601
    %2603 = vdwg.mxu0
    %2604 = vmatpush.msra.mxu0 %v1975
    %2605 = vmatpush.msra.mxu0 %v1972
    %2606 = vmatpush.msra.mxu0 %v1969
    %2607 = vmatpush.msra.mxu0 %v1966
    %2608 = vmatpush.msra.mxu0 %v1963
    %2609 = vmatpush.msra.mxu0 %v1960
    %2610 = vmatpush.msra.mxu0 %v1957
    %2611 = vmatpush.msra.mxu0 %v1954
    %2612 = vmatpush.msra.mxu0 %v1951
    %2613 = vmatpush.msra.mxu0 %v1948
    %2614 = vmatpush.msra.mxu0 %v1945
    %2615 = vmatpush.msra.mxu0 %v1942
    %2616 = vmatpush.msra.mxu0 %v1939
    %2617 = vmatpush.msra.mxu0 %v1936
    %2618 = vmatpush.msra.mxu0 %v1933
    %2619 = vmatpush.msra.mxu0 %v1930
    %2620 = vmatmul.f32.gmra.mxu0 %v2083
    %v2621 = vpop.f32.mrf.mxu0
    %v2622 = vadd.f32 %v2602, %v2621
    %2623 = vdwg.mxu0
    %2624 = vmatpush.msra.mxu0 %v1928
    %2625 = vmatpush.msra.mxu0 %v1925
    %2626 = vmatpush.msra.mxu0 %v1922
    %2627 = vmatpush.msra.mxu0 %v1919
    %2628 = vmatpush.msra.mxu0 %v1916
    %2629 = vmatpush.msra.mxu0 %v1913
    %2630 = vmatpush.msra.mxu0 %v1910
    %2631 = vmatpush.msra.mxu0 %v1907
    %2632 = vmatpush.msra.mxu0 %v1904
    %2633 = vmatpush.msra.mxu0 %v1901
    %2634 = vmatpush.msra.mxu0 %v1898
    %2635 = vmatpush.msra.mxu0 %v1895
    %2636 = vmatpush.msra.mxu0 %v1892
    %2637 = vmatpush.msra.mxu0 %v1889
    %2638 = vmatpush.msra.mxu0 %v1886
    %2639 = vmatpush.msra.mxu0 %v1883
    %2640 = vmatmul.f32.gmra.mxu0 %v2082
    %v2641 = vpop.f32.mrf.mxu0
    %v2642 = vadd.f32 0.0, %v2641
    %2643 = vdwg.mxu0
    %2644 = vmatpush.msra.mxu0 %v1976
    %2645 = vmatpush.msra.mxu0 %v1973
    %2646 = vmatpush.msra.mxu0 %v1970
    %2647 = vmatpush.msra.mxu0 %v1967
    %2648 = vmatpush.msra.mxu0 %v1964
    %2649 = vmatpush.msra.mxu0 %v1961
    %2650 = vmatpush.msra.mxu0 %v1958
    %2651 = vmatpush.msra.mxu0 %v1955
    %2652 = vmatpush.msra.mxu0 %v1952
    %2653 = vmatpush.msra.mxu0 %v1949
    %2654 = vmatpush.msra.mxu0 %v1946
    %2655 = vmatpush.msra.mxu0 %v1943
    %2656 = vmatpush.msra.mxu0 %v1940
    %2657 = vmatpush.msra.mxu0 %v1937
    %2658 = vmatpush.msra.mxu0 %v1934
    %2659 = vmatpush.msra.mxu0 %v1931
    %2660 = vmatmul.f32.gmra.mxu0 %v2083
    %v2661 = vpop.f32.mrf.mxu0
    %v2662 = vadd.f32 %v2642, %v2661
    %2663 = vdwg.mxu0
    %2664 = vmatpush.msra.mxu0 %v1929
    %2665 = vmatpush.msra.mxu0 %v1926
    %2666 = vmatpush.msra.mxu0 %v1923
    %2667 = vmatpush.msra.mxu0 %v1920
    %2668 = vmatpush.msra.mxu0 %v1917
    %2669 = vmatpush.msra.mxu0 %v1914
    %2670 = vmatpush.msra.mxu0 %v1911
    %2671 = vmatpush.msra.mxu0 %v1908
    %2672 = vmatpush.msra.mxu0 %v1905
    %2673 = vmatpush.msra.mxu0 %v1902
    %2674 = vmatpush.msra.mxu0 %v1899
    %2675 = vmatpush.msra.mxu0 %v1896
    %2676 = vmatpush.msra.mxu0 %v1893
    %2677 = vmatpush.msra.mxu0 %v1890
    %2678 = vmatpush.msra.mxu0 %v1887
    %2679 = vmatpush.msra.mxu0 %v1884
    %2680 = vmatmul.f32.gmra.mxu0 %v2082
    %v2681 = vpop.f32.mrf.mxu0
    %v2682 = vadd.f32 0.0, %v2681
    %2683 = vdwg.mxu0
    %2684 = vmatpush.msra.mxu0 %v1977
    %2685 = vmatpush.msra.mxu0 %v1974
    %2686 = vmatpush.msra.mxu0 %v1971
    %2687 = vmatpush.msra.mxu0 %v1968
    %2688 = vmatpush.msra.mxu0 %v1965
    %2689 = vmatpush.msra.mxu0 %v1962
    %2690 = vmatpush.msra.mxu0 %v1959
    %2691 = vmatpush.msra.mxu0 %v1956
    %2692 = vmatpush.msra.mxu0 %v1953
    %2693 = vmatpush.msra.mxu0 %v1950
    %2694 = vmatpush.msra.mxu0 %v1947
    %2695 = vmatpush.msra.mxu0 %v1944
    %2696 = vmatpush.msra.mxu0 %v1941
    %2697 = vmatpush.msra.mxu0 %v1938
    %2698 = vmatpush.msra.mxu0 %v1935
    %2699 = vmatpush.msra.mxu0 %v1932
    %2700 = vmatmul.f32.gmra.mxu0 %v2083
    %v2701 = vpop.f32.mrf.mxu0
    %v2702 = vadd.f32 %v2682, %v2701
    %2703 = vdwg.mxu0
    %2704 = vmatpush.msra.mxu0 %v2023
    %2705 = vmatpush.msra.mxu0 %v2020
    %2706 = vmatpush.msra.mxu0 %v2017
    %2707 = vmatpush.msra.mxu0 %v2014
    %2708 = vmatpush.msra.mxu0 %v2011
    %2709 = vmatpush.msra.mxu0 %v2008
    %2710 = vmatpush.msra.mxu0 %v2005
    %2711 = vmatpush.msra.mxu0 %v2002
    %2712 = vmatpush.msra.mxu0 %v1999
    %2713 = vmatpush.msra.mxu0 %v1996
    %2714 = vmatpush.msra.mxu0 %v1993
    %2715 = vmatpush.msra.mxu0 %v1990
    %2716 = vmatpush.msra.mxu0 %v1987
    %2717 = vmatpush.msra.mxu0 %v1984
    %2718 = vmatpush.msra.mxu0 %v1981
    %2719 = vmatpush.msra.mxu0 %v1978
    %2720 = vmatmul.f32.gmra.mxu0 %v2084
    %v2721 = vpop.f32.mrf.mxu0
    %v2722 = vadd.f32 0.0, %v2721
    %2723 = vdwg.mxu0
    %2724 = vmatpush.msra.mxu0 %v2071
    %2725 = vmatpush.msra.mxu0 %v2068
    %2726 = vmatpush.msra.mxu0 %v2065
    %2727 = vmatpush.msra.mxu0 %v2062
    %2728 = vmatpush.msra.mxu0 %v2059
    %2729 = vmatpush.msra.mxu0 %v2056
    %2730 = vmatpush.msra.mxu0 %v2053
    %2731 = vmatpush.msra.mxu0 %v2050
    %2732 = vmatpush.msra.mxu0 %v2047
    %2733 = vmatpush.msra.mxu0 %v2044
    %2734 = vmatpush.msra.mxu0 %v2041
    %2735 = vmatpush.msra.mxu0 %v2038
    %2736 = vmatpush.msra.mxu0 %v2035
    %2737 = vmatpush.msra.mxu0 %v2032
    %2738 = vmatpush.msra.mxu0 %v2029
    %2739 = vmatpush.msra.mxu0 %v2026
    %2740 = vmatmul.f32.gmra.mxu0 %v2085
    %v2741 = vpop.f32.mrf.mxu0
    %v2742 = vadd.f32 %v2722, %v2741
    %2743 = vdwg.mxu0
    %2744 = vmatpush.msra.mxu0 %v2024
    %2745 = vmatpush.msra.mxu0 %v2021
    %2746 = vmatpush.msra.mxu0 %v2018
    %2747 = vmatpush.msra.mxu0 %v2015
    %2748 = vmatpush.msra.mxu0 %v2012
    %2749 = vmatpush.msra.mxu0 %v2009
    %2750 = vmatpush.msra.mxu0 %v2006
    %2751 = vmatpush.msra.mxu0 %v2003
    %2752 = vmatpush.msra.mxu0 %v2000
    %2753 = vmatpush.msra.mxu0 %v1997
    %2754 = vmatpush.msra.mxu0 %v1994
    %2755 = vmatpush.msra.mxu0 %v1991
    %2756 = vmatpush.msra.mxu0 %v1988
    %2757 = vmatpush.msra.mxu0 %v1985
    %2758 = vmatpush.msra.mxu0 %v1982
    %2759 = vmatpush.msra.mxu0 %v1979
    %2760 = vmatmul.f32.gmra.mxu0 %v2084
    %v2761 = vpop.f32.mrf.mxu0
    %v2762 = vadd.f32 0.0, %v2761
    %2763 = vdwg.mxu0
    %2764 = vmatpush.msra.mxu0 %v2072
    %2765 = vmatpush.msra.mxu0 %v2069
    %2766 = vmatpush.msra.mxu0 %v2066
    %2767 = vmatpush.msra.mxu0 %v2063
    %2768 = vmatpush.msra.mxu0 %v2060
    %2769 = vmatpush.msra.mxu0 %v2057
    %2770 = vmatpush.msra.mxu0 %v2054
    %2771 = vmatpush.msra.mxu0 %v2051
    %2772 = vmatpush.msra.mxu0 %v2048
    %2773 = vmatpush.msra.mxu0 %v2045
    %2774 = vmatpush.msra.mxu0 %v2042
    %2775 = vmatpush.msra.mxu0 %v2039
    %2776 = vmatpush.msra.mxu0 %v2036
    %2777 = vmatpush.msra.mxu0 %v2033
    %2778 = vmatpush.msra.mxu0 %v2030
    %2779 = vmatpush.msra.mxu0 %v2027
    %2780 = vmatmul.f32.gmra.mxu0 %v2085
    %v2781 = vpop.f32.mrf.mxu0
    %v2782 = vadd.f32 %v2762, %v2781
    %2783 = vdwg.mxu0
    %2784 = vmatpush.msra.mxu0 %v2025
    %2785 = vmatpush.msra.mxu0 %v2022
    %2786 = vmatpush.msra.mxu0 %v2019
    %2787 = vmatpush.msra.mxu0 %v2016
    %2788 = vmatpush.msra.mxu0 %v2013
    %2789 = vmatpush.msra.mxu0 %v2010
    %2790 = vmatpush.msra.mxu0 %v2007
    %2791 = vmatpush.msra.mxu0 %v2004
    %2792 = vmatpush.msra.mxu0 %v2001
    %2793 = vmatpush.msra.mxu0 %v1998
    %2794 = vmatpush.msra.mxu0 %v1995
    %2795 = vmatpush.msra.mxu0 %v1992
    %2796 = vmatpush.msra.mxu0 %v1989
    %2797 = vmatpush.msra.mxu0 %v1986
    %2798 = vmatpush.msra.mxu0 %v1983
    %2799 = vmatpush.msra.mxu0 %v1980
    %2800 = vmatmul.f32.gmra.mxu0 %v2084
    %v2801 = vpop.f32.mrf.mxu0
    %v2802 = vadd.f32 0.0, %v2801
    %2803 = vdwg.mxu0
    %2804 = vmatpush.msra.mxu0 %v2073
    %2805 = vmatpush.msra.mxu0 %v2070
    %2806 = vmatpush.msra.mxu0 %v2067
    %2807 = vmatpush.msra.mxu0 %v2064
    %2808 = vmatpush.msra.mxu0 %v2061
    %2809 = vmatpush.msra.mxu0 %v2058
    %2810 = vmatpush.msra.mxu0 %v2055
    %2811 = vmatpush.msra.mxu0 %v2052
    %2812 = vmatpush.msra.mxu0 %v2049
    %2813 = vmatpush.msra.mxu0 %v2046
    %2814 = vmatpush.msra.mxu0 %v2043
    %2815 = vmatpush.msra.mxu0 %v2040
    %2816 = vmatpush.msra.mxu0 %v2037
    %2817 = vmatpush.msra.mxu0 %v2034
    %2818 = vmatpush.msra.mxu0 %v2031
    %2819 = vmatpush.msra.mxu0 %v2028
    %2820 = vmatmul.f32.gmra.mxu0 %v2085
    %v2821 = vpop.f32.mrf.mxu0
    %v2822 = vadd.f32 %v2802, %v2821
    %2823 = vdwg.mxu0
    %v2824 = vadd.f32 %v2086, %v2142
    %v2825 = vadd.f32 %v2087, %v2182
    %v2826 = vadd.f32 %v2088, %v2222
    %v2827 = vadd.f32 %v2089, %v2262
    %v2828 = vadd.f32 %v2090, %v2302
    %v2829 = vadd.f32 %v2091, %v2342
    %v2830 = vadd.f32 %v2092, %v2382
    %v2831 = vadd.f32 %v2093, %v2422
    %v2832 = vadd.f32 %v2094, %v2462
    %v2833 = vadd.f32 %v2095, %v2502
    %v2834 = vadd.f32 %v2096, %v2542
    %v2835 = vadd.f32 %v2097, %v2582
    %v2836 = vadd.f32 %v2098, %v2622
    %v2837 = vadd.f32 %v2099, %v2662
    %v2838 = vadd.f32 %v2100, %v2702
    %v2839 = vadd.f32 %v2101, %v2742
    %v2840 = vadd.f32 %v2102, %v2782
    %v2841 = vadd.f32 %v2103, %v2822
    %2842 = vst [vmem:[#allocation2] sm:$0xff] %v2824
    %2843 = vst [vmem:[#allocation2 + $0x8] sm:$0xff] %v2825
    %2844 = vst [vmem:[#allocation2 + $0x10] sm:$0xff] %v2826
    %2845 = vst [vmem:[#allocation2 + $0x18] sm:$0xff] %v2827
    %2846 = vst [vmem:[#allocation2 + $0x20] sm:$0xff] %v2828
    %2847 = vst [vmem:[#allocation2 + $0x28] sm:$0xff] %v2829
    %2848 = vst [vmem:[#allocation2 + $0x30] sm:$0xff] %v2830
    %2849 = vst [vmem:[#allocation2 + $0x38] sm:$0xff] %v2831
    %2850 = vst [vmem:[#allocation2 + $0x40] sm:$0xff] %v2832
    %2851 = vst [vmem:[#allocation2 + $0x48] sm:$0xff] %v2833
    %2852 = vst [vmem:[#allocation2 + $0x50] sm:$0xff] %v2834
    %2853 = vst [vmem:[#allocation2 + $0x58] sm:$0xff] %v2835
    %2854 = vst [vmem:[#allocation2 + $0x60] sm:$0xff] %v2836
    %2855 = vst [vmem:[#allocation2 + $0x68] sm:$0xff] %v2837
    %2856 = vst [vmem:[#allocation2 + $0x70] sm:$0xff] %v2838
    %2857 = vst [vmem:[#allocation2 + $0x78] sm:$0xff] %v2839
    %2858 = vst [vmem:[#allocation2 + $0x80] sm:$0xff] %v2840
    %2859 = vst [vmem:[#allocation2 + $0x88] sm:$0xff] %v2841
    // Predicated region
    $region62: #{tpu_custom_call.1} parent=1 // pred_check
      %p2860 = pneg %p132
    $region63: #{tpu_custom_call.1} parent=1 // pred_check_branch
      %2862 = sbr.rel (%p2860) target = $region65
    $region64: #{tpu_custom_call.1} parent=1 // pred_region
      %v2863 = vld [vmem:[#allocation11] sm:$0x7]
      %v2864 = vld [vmem:[#allocation12] sm:$0x7]
      %v2865 = vld [vmem:[#allocation14] sm:$0x7]
      %v2866 = vld [vmem:[#allocation14 + $0x3] sm:$0x7]
      %v2867 = vld [vmem:[#allocation14 + $0x6] sm:$0x7]
      %v2868 = vld [vmem:[#allocation14 + $0x9] sm:$0x7]
      %v2869 = vld [vmem:[#allocation14 + $0xc] sm:$0x7]
      %v2870 = vld [vmem:[#allocation14 + $0xf] sm:$0x7]
      %v2871 = vmul.f32 %v2864, %v2865
      %v2872 = vmul.f32 %v2864, %v2866
      %v2873 = vmul.f32 %v2864, %v2867
      %v2874 = vmul.f32 %v2864, %v2868
      %v2875 = vmul.f32 %v2864, %v2869
      %v2876 = vmul.f32 %v2864, %v2870
      %v2877 = vadd.f32 %v2863, %v2871
      %v2878 = vadd.f32 %v2863, %v2872
      %v2879 = vadd.f32 %v2863, %v2873
      %v2880 = vadd.f32 %v2863, %v2874
      %v2881 = vadd.f32 %v2863, %v2875
      %v2882 = vadd.f32 %v2863, %v2876
      %v2883 = vld [vmem:[#allocation2] sm:$0xff]
      %v2884 = vld [vmem:[#allocation2 + $0x8] sm:$0xff]
      %v2885 = vld [vmem:[#allocation2 + $0x10] sm:$0xff]
      %v2886 = vld [vmem:[#allocation2 + $0x18] sm:$0xff]
      %v2887 = vld [vmem:[#allocation2 + $0x20] sm:$0xff]
      %v2888 = vld [vmem:[#allocation2 + $0x28] sm:$0xff]
      %v2889 = vld [vmem:[#allocation2 + $0x30] sm:$0xff]
      %v2890 = vld [vmem:[#allocation2 + $0x38] sm:$0xff]
      %v2891 = vld [vmem:[#allocation2 + $0x40] sm:$0xff]
      %v2892 = vld [vmem:[#allocation2 + $0x48] sm:$0xff]
      %v2893 = vld [vmem:[#allocation2 + $0x50] sm:$0xff]
      %v2894 = vld [vmem:[#allocation2 + $0x58] sm:$0xff]
      %v2895 = vld [vmem:[#allocation2 + $0x60] sm:$0xff]
      %v2896 = vld [vmem:[#allocation2 + $0x68] sm:$0xff]
      %v2897 = vld [vmem:[#allocation2 + $0x70] sm:$0xff]
      %v2898 = vld [vmem:[#allocation2 + $0x78] sm:$0xff]
      %v2899 = vld [vmem:[#allocation2 + $0x80] sm:$0xff]
      %v2900 = vld [vmem:[#allocation2 + $0x88] sm:$0xff]
      %v2907 = vperm.slane %v2877, 0
      %v2908 = vperm.slane %v2877, 1
      %v2909 = vperm.slane %v2877, 2
      %v2910 = vperm.slane %v2878, 0
      %v2911 = vperm.slane %v2878, 1
      %v2912 = vperm.slane %v2878, 2
      %v2913 = vperm.slane %v2879, 0
      %v2914 = vperm.slane %v2879, 1
      %v2915 = vperm.slane %v2879, 2
      %v2916 = vperm.slane %v2880, 0
      %v2917 = vperm.slane %v2880, 1
      %v2918 = vperm.slane %v2880, 2
      %v2919 = vperm.slane %v2881, 0
      %v2920 = vperm.slane %v2881, 1
      %v2921 = vperm.slane %v2881, 2
      %v2922 = vperm.slane %v2882, 0
      %v2923 = vperm.slane %v2882, 1
      %v2924 = vperm.slane %v2882, 2
      %v2943 = vadd.f32 %v2883, %v2907
      %v2944 = vadd.f32 %v2884, %v2908
      %v2945 = vadd.f32 %v2885, %v2909
      %v2946 = vadd.f32 %v2886, %v2910
      %v2947 = vadd.f32 %v2887, %v2911
      %v2948 = vadd.f32 %v2888, %v2912
      %v2949 = vadd.f32 %v2889, %v2913
      %v2950 = vadd.f32 %v2890, %v2914
      %v2951 = vadd.f32 %v2891, %v2915
      %v2952 = vadd.f32 %v2892, %v2916
      %v2953 = vadd.f32 %v2893, %v2917
      %v2954 = vadd.f32 %v2894, %v2918
      %v2955 = vadd.f32 %v2895, %v2919
      %v2956 = vadd.f32 %v2896, %v2920
      %v2957 = vadd.f32 %v2897, %v2921
      %v2958 = vadd.f32 %v2898, %v2922
      %v2959 = vadd.f32 %v2899, %v2923
      %v2960 = vadd.f32 %v2900, %v2924
      %2961 = vst [vmem:[#allocation15] sm:$0xff] %v2943
      %2962 = vst [vmem:[#allocation15 + $0x8] sm:$0xff] %v2944
      %2963 = vst [vmem:[#allocation15 + $0x10] sm:$0xff] %v2945
      %2964 = vst [vmem:[#allocation15 + $0x18] sm:$0xff] %v2946
      %2965 = vst [vmem:[#allocation15 + $0x20] sm:$0xff] %v2947
      %2966 = vst [vmem:[#allocation15 + $0x28] sm:$0xff] %v2948
      %2967 = vst [vmem:[#allocation15 + $0x30] sm:$0xff] %v2949
      %2968 = vst [vmem:[#allocation15 + $0x38] sm:$0xff] %v2950
      %2969 = vst [vmem:[#allocation15 + $0x40] sm:$0xff] %v2951
      %2970 = vst [vmem:[#allocation15 + $0x48] sm:$0xff] %v2952
      %2971 = vst [vmem:[#allocation15 + $0x50] sm:$0xff] %v2953
      %2972 = vst [vmem:[#allocation15 + $0x58] sm:$0xff] %v2954
      %2973 = vst [vmem:[#allocation15 + $0x60] sm:$0xff] %v2955
      %2974 = vst [vmem:[#allocation15 + $0x68] sm:$0xff] %v2956
      %2975 = vst [vmem:[#allocation15 + $0x70] sm:$0xff] %v2957
      %2976 = vst [vmem:[#allocation15 + $0x78] sm:$0xff] %v2958
      %2977 = vst [vmem:[#allocation15 + $0x80] sm:$0xff] %v2959
      %2978 = vst [vmem:[#allocation15 + $0x88] sm:$0xff] %v2960
    $region65: #{tpu_custom_call.1} parent=1 // pred_fallthru
      _
    // Predicated region
    $region66: #{tpu_custom_call.1} parent=1 // pred_check
      _
    $region67: #{tpu_custom_call.1} parent=1 // pred_check_branch
      %2980 = sbr.rel (0) target = $region69
    $region68: #{tpu_custom_call.1} parent=1 // pred_region
      %2982 = vsyncadd [#allocation5], 0
      %s2983 = sshll.u32 [#allocation15], 4
      %s2984 = int_to_ptr.vmem [resolvable:$true] %s2983
      %s2985 = sshll.u32 %s7, 4
      %s2986 = int_to_ptr.hbm [resolvable:$true] %s2985
      %2991 = dma.vmem_to_hbm [thread:$0]  %s2984, 2304, %s2986, [#allocation5], 384, 384, 24
    $region69: #{tpu_custom_call.1} parent=1 // pred_fallthru
      _
    // Predicated region
    $region70: #{tpu_custom_call.1} parent=1 // pred_check
      _
    $region71: #{tpu_custom_call.1} parent=1 // pred_check_branch
      %2993 = sbr.rel (0) target = $region73
    $region72: #{tpu_custom_call.1} parent=1 // pred_region
      %2995 = dma.done [#allocation5], 2304
    $region73: #{tpu_custom_call.1} parent=1 // pred_fallthru
      _
    %2996 = vsyncpa [#allocation4], 1
    %2997 = vsyncpa [#allocation7], 1
    %2998 = vsyncpa [#allocation10], 1
    %2999 = vsyncpa [#allocation13], 1
    %3000 = vsyncpa [#allocation5], 1

</llo_original>
